<compile_context>
chip_gen: v7x
topology: tpu7x:2x2x1
jax: 0.10.0
libtpu: 0.0.40
codegen_flags: <defaults>
</compile_context>

<pallas_src>
import jax
import jax.numpy as jnp
from jax.experimental import pallas as pl
from jax.experimental.pallas import tpu as pltpu

LANES = 128

_COMPILER_PARAMS = pltpu.CompilerParams(
    dimension_semantics=("parallel",),
    vmem_limit_bytes=32 * 1024 * 1024,
)


# ----------------------------------------------------------------------------
# small helpers
# ----------------------------------------------------------------------------
def _pad_to(a, rows, cols):
    """Zero-pad a 2-D array up to (rows, cols)."""
    return jnp.pad(a, ((0, rows - a.shape[0]), (0, cols - a.shape[1])))


def _pad_row(v, n):
    """(len,) vector -> zero-padded (1, n) broadcast row."""
    return jnp.pad(v, (0, n - v.shape[0])).reshape(1, n)


def _batch_tile(batch, rows_per_image, cap=8):
    """Largest batch tile <= cap dividing `batch` with an 8-aligned row count."""
    for t in range(min(batch, cap), 0, -1):
        if batch % t == 0 and (t * rows_per_image) % 8 == 0:
            return t
    return batch  # single block == full array (always a legal block shape)


def _row_tile(batch, cap=256):
    for t in range(min(batch, cap), 0, -1):
        if batch % t == 0 and t % 8 == 0:
            return t
    return batch


# ----------------------------------------------------------------------------
# Pallas kernels
# ----------------------------------------------------------------------------
def _conv_pool_prune_kernel(p_ref, w_ref, b_ref, m_ref, o_ref):
    """Fused conv (as matmul) + bias + ReLU + 2x2 maxpool + channel prune.

    p_ref : (4, R, K)  im2col patches; leading axis = 2x2 pooling phase
    w_ref : (K, 128)   conv weights, output channels zero-padded to 128 lanes
    b_ref : (1, 128)   bias row (zero-padded)
    m_ref : (1, 128)   prune mask row (applied after the pool, as in torch)
    o_ref : (R, 128)   pooled activations (lane-dense, unmasked stores)
    """
    w = w_ref[...]
    bias = b_ref[...]

    def phase(q):
        y = jnp.dot(p_ref[q], w, preferred_element_type=jnp.float32)
        return jnp.maximum(y + bias, 0.0)

    pooled = jnp.maximum(jnp.maximum(phase(0), phase(1)),
                         jnp.maximum(phase(2), phase(3)))
    o_ref[...] = pooled * m_ref[...]


def _mlp_kernel(x_ref, w1, b1, m1, w2, b2, m2, w3, b3, o_ref):
    """fc1+ReLU+prune -> fc2+ReLU+prune -> fc3, chained entirely in VMEM."""
    h = jnp.dot(x_ref[...], w1[...], preferred_element_type=jnp.float32)
    h = jnp.maximum(h + b1[...], 0.0) * m1[...]
    h = jnp.dot(h, w2[...], preferred_element_type=jnp.float32)
    h = jnp.maximum(h + b2[...], 0.0) * m2[...]
    h = jnp.dot(h, w3[...], preferred_element_type=jnp.float32)
    o_ref[...] = h + b3[...]


# ----------------------------------------------------------------------------
# wrappers
# ----------------------------------------------------------------------------
def _im2col_pool_phases(x, k):
    """NHWC x -> im2col patches grouped by 2x2 pooling phase.

    Returns (patches, Hp, Wp); patches has shape (4, B*Hp*Wp, k*k*C) where phase
    q = 2*ph + pw holds conv output positions (2i+ph, 2j+pw), rows ordered
    (b, i, j) and columns ordered (kh, kw, c).
    """
    B, H, W, C = x.shape
    Ho, Wo = H - k + 1, W - k + 1
    assert Ho % 2 == 0 and Wo % 2 == 0, "2x2 max-pool needs even conv output"
    Hp, Wp = Ho // 2, Wo // 2
    cols = jnp.concatenate(
        [x[:, kh:kh + Ho, kw:kw + Wo, :] for kh in range(k) for kw in range(k)],
        axis=-1)                                       # (B, Ho, Wo, k*k*C)
    cols = cols.reshape(B, Hp, 2, Wp, 2, k * k * C)
    cols = jnp.transpose(cols, (2, 4, 0, 1, 3, 5))     # (ph, pw, b, i, j, K)
    return cols.reshape(4, B * Hp * Wp, k * k * C), Hp, Wp


def conv_relu_pool_prune(x, w, b, mask, k):
    """x NHWC (B,H,W,Cin), torch conv weight (Cout,Cin,k,k): valid conv,
    stride 1, fused bias+ReLU, 2x2/2 maxpool, per-channel prune mask."""
    B = x.shape[0]
    cin, cout = w.shape[1], w.shape[0]
    patches, Hp, Wp = _im2col_pool_phases(x, k)        # (4, B*S, K)
    S, K = Hp * Wp, k * k * cin

    # (Cout,Cin,kh,kw) -> (kh,kw,Cin,Cout) flattened -> (K, 128) lane-padded
    w_mat = _pad_to(w.transpose(2, 3, 1, 0).reshape(K, cout), K, LANES)
    b_row = _pad_row(b, LANES)
    m_row = _pad_row(mask, LANES)

    tb = _batch_tile(B, S)
    blk = tb * S
    const = lambda i: (0, 0)
    out = pl.pallas_call(
        _conv_pool_prune_kernel,
        out_shape=jax.ShapeDtypeStruct((B * S, LANES), jnp.float32),
        grid=(B // tb,),
        in_specs=[
            pl.BlockSpec((4, blk, K), lambda i: (0, i, 0)),
            pl.BlockSpec((K, LANES), const),
            pl.BlockSpec((1, LANES), const),
            pl.BlockSpec((1, LANES), const),
        ],
        out_specs=pl.BlockSpec((blk, LANES), lambda i: (i, 0)),
        compiler_params=_COMPILER_PARAMS,
    )(patches, w_mat, b_row, m_row)
    return out[:, :cout].reshape(B, Hp, Wp, cout)      # pooled NHWC


def fused_mlp(x, w1, b1, m1, w2, b2, m2, w3, b3, n_out):
    """x (B,K) -> relu(x@w1+b1)*m1 -> relu(.@w2+b2)*m2 -> .@w3+b3 -> [:, :n_out]."""
    B, K = x.shape
    tb = _row_tile(B)
    const = lambda i: (0, 0)
    out = pl.pallas_call(
        _mlp_kernel,
        out_shape=jax.ShapeDtypeStruct((B, LANES), jnp.float32),
        grid=(B // tb,),
        in_specs=[pl.BlockSpec((tb, K), lambda i: (i, 0))]
                 + [pl.BlockSpec(a.shape, const)
                    for a in (w1, b1, m1, w2, b2, m2, w3, b3)],
        out_specs=pl.BlockSpec((tb, LANES), lambda i: (i, 0)),
        compiler_params=_COMPILER_PARAMS,
    )(x, w1, b1, m1, w2, b2, m2, w3, b3)
    return out[:, :n_out]


# ----------------------------------------------------------------------------
# parameters & forward pass
# ----------------------------------------------------------------------------
def init_params(key):
    ks = jax.random.split(key, 10)

    def u(k, shape, fan_in):
        bound = 1.0 / jnp.sqrt(jnp.float32(fan_in))
        return jax.random.uniform(k, shape, jnp.float32, -bound, bound)

    return {
        "conv1_w": u(ks[0], (16, 3, 5, 5), 3 * 25),
        "conv1_b": u(ks[1], (16,), 3 * 25),
        "conv2_w": u(ks[2], (32, 16, 5, 5), 16 * 25),
        "conv2_b": u(ks[3], (32,), 16 * 25),
        "fc1_w": u(ks[4], (120, 32 * 5 * 5), 32 * 5 * 5),
        "fc1_b": u(ks[5], (120,), 32 * 5 * 5),
        "fc2_w": u(ks[6], (84, 120), 120),
        "fc2_b": u(ks[7], (84,), 120),
        "fc3_w": u(ks[8], (10, 84), 84),
        "fc3_b": u(ks[9], (10,), 84),
        # PruningLayer masks (identity pruning)
        "c1_mask": jnp.ones((16,), jnp.float32),
        "c2_mask": jnp.ones((32,), jnp.float32),
        "f1_mask": jnp.ones((120,), jnp.float32),
        "f2_mask": jnp.ones((84,), jnp.float32),
    }


def lenet_forward(p, x):
    """x: (B, 3, 32, 32) NCHW float32 (torch layout) -> (B, 10) logits."""
    x = jnp.transpose(x, (0, 2, 3, 1))                 # NCHW -> NHWC, once

    # conv1 -> relu -> maxpool2 -> c1_prune  (one fused kernel)
    h = conv_relu_pool_prune(x, p["conv1_w"], p["conv1_b"], p["c1_mask"], 5)
    # conv2 -> relu -> maxpool2 -> c2_prune  (one fused kernel)
    h = conv_relu_pool_prune(h, p["conv2_w"], p["conv2_b"], p["c2_mask"], 5)

    B, Hp, Wp, C = h.shape
    flat = h.reshape(B, Hp * Wp * C)                   # NHWC flatten: (h, w, c)

    # Permute fc1 columns once: torch flattens NCHW as (c, h, w).
    nfc = p["fc1_w"].shape[0]
    f1w = (p["fc1_w"].reshape(nfc, C, Hp, Wp).transpose(0, 2, 3, 1)
           .reshape(nfc, Hp * Wp * C).T)               # (Hp*Wp*C, 120)

    # fc1+relu+prune -> fc2+relu+prune -> fc3, all in one kernel
    return fused_mlp(
        flat,
        _pad_to(f1w, f1w.shape[0], LANES),
        _pad_row(p["fc1_b"], LANES), _pad_row(p["f1_mask"], LANES),
        _pad_to(p["fc2_w"].T, LANES, LANES),
        _pad_row(p["fc2_b"], LANES), _pad_row(p["f2_mask"], LANES),
        _pad_to(p["fc3_w"].T, LANES, LANES),
        _pad_row(p["fc3_b"], LANES),
        n_out=p["fc3_w"].shape[0])


if __name__ == "__main__":
    key = jax.random.PRNGKey(0)
    pkey, xkey = jax.random.split(key)
    params = init_params(pkey)
    # CIFAR10 geometry (3x32x32) is required for the 32*5*5 fc1 input to line up.
    x = jax.random.normal(xkey, (2, 3, 32, 32), dtype=jnp.float32)
    logits = jax.jit(lenet_forward)(params, x)
    jax.block_until_ready(logits)
    assert logits.shape == (2, 10) and logits.dtype == jnp.float32
    print("KERNEL_OK")
</pallas_src>

<mosaic_0001>
module attributes {stable_mosaic.version = 11 : i64} {
  func.func @_conv_pool_prune_kernel(%arg0: i32, %arg1: memref<4x392x75xf32, #tpu.memory_space<vmem>>, %arg2: memref<75x128xf32, #tpu.memory_space<vmem>>, %arg3: memref<1x128xf32, #tpu.memory_space<vmem>>, %arg4: memref<1x128xf32, #tpu.memory_space<vmem>>, %arg5: memref<392x128xf32, #tpu.memory_space<vmem>>) attributes {dimension_semantics = [#tpu.dimension_semantics<parallel>], iteration_bounds = array<i64: 1>, scalar_prefetch = 0 : i64, scratch_operands = 0 : i64, tpu.core_type = #tpu.core_type<tc>, window_params = [{transform_indices = @transform_0, window_bounds = array<i64: 4, 392, 75>}, {pipeline_mode = #tpu.pipeline_mode<synchronous>, transform_indices = @transform_1, window_bounds = array<i64: 75, 128>}, {pipeline_mode = #tpu.pipeline_mode<synchronous>, transform_indices = @transform_2, window_bounds = array<i64: 1, 128>}, {pipeline_mode = #tpu.pipeline_mode<synchronous>, transform_indices = @transform_3, window_bounds = array<i64: 1, 128>}, {transform_indices = @transform_4, window_bounds = array<i64: 392, 128>}]} {
    %c0 = arith.constant 0 : index
    %c0_0 = arith.constant 0 : index
    %0 = vector.load %arg2[%c0, %c0_0] : memref<75x128xf32, #tpu.memory_space<vmem>>, vector<75x128xf32>
    %c0_1 = arith.constant 0 : index
    %c0_2 = arith.constant 0 : index
    %1 = vector.load %arg3[%c0_1, %c0_2] : memref<1x128xf32, #tpu.memory_space<vmem>>, vector<1x128xf32>
    %c0_3 = arith.constant 0 : index
    %c0_4 = arith.constant 0 : index
    %c0_5 = arith.constant 0 : index
    %2 = vector.load %arg1[%c0_3, %c0_4, %c0_5] : memref<4x392x75xf32, #tpu.memory_space<vmem>>, vector<1x392x75xf32>
    %3 = vector.shape_cast %2 : vector<1x392x75xf32> to vector<392x75xf32>
    %cst = arith.constant dense<0.000000e+00> : vector<392x128xf32>
    %4 = tpu.matmul %3, %0, %cst {dimension_numbers = #tpu.dot_dimension_numbers<[1], [0], [0], [1], [0, 0, 1, 1], [], []>} : vector<392x75xf32>, vector<75x128xf32>, vector<392x128xf32> -> vector<392x128xf32>
    %5 = vector.broadcast %1 : vector<1x128xf32> to vector<392x128xf32>
    %6 = arith.addf %4, %5 : vector<392x128xf32>
    %cst_6 = arith.constant 0.000000e+00 : f32
    %7 = vector.broadcast %cst_6 : f32 to vector<392x128xf32>
    %8 = arith.maximumf %6, %7 : vector<392x128xf32>
    %c1 = arith.constant 1 : index
    %c0_7 = arith.constant 0 : index
    %c0_8 = arith.constant 0 : index
    %9 = vector.load %arg1[%c1, %c0_7, %c0_8] : memref<4x392x75xf32, #tpu.memory_space<vmem>>, vector<1x392x75xf32>
    %10 = vector.shape_cast %9 : vector<1x392x75xf32> to vector<392x75xf32>
    %cst_9 = arith.constant dense<0.000000e+00> : vector<392x128xf32>
    %11 = tpu.matmul %10, %0, %cst_9 {dimension_numbers = #tpu.dot_dimension_numbers<[1], [0], [0], [1], [0, 0, 1, 1], [], []>} : vector<392x75xf32>, vector<75x128xf32>, vector<392x128xf32> -> vector<392x128xf32>
    %12 = vector.broadcast %1 : vector<1x128xf32> to vector<392x128xf32>
    %13 = arith.addf %11, %12 : vector<392x128xf32>
    %cst_10 = arith.constant 0.000000e+00 : f32
    %14 = vector.broadcast %cst_10 : f32 to vector<392x128xf32>
    %15 = arith.maximumf %13, %14 : vector<392x128xf32>
    %16 = arith.maximumf %8, %15 : vector<392x128xf32>
    %c2 = arith.constant 2 : index
    %c0_11 = arith.constant 0 : index
    %c0_12 = arith.constant 0 : index
    %17 = vector.load %arg1[%c2, %c0_11, %c0_12] : memref<4x392x75xf32, #tpu.memory_space<vmem>>, vector<1x392x75xf32>
    %18 = vector.shape_cast %17 : vector<1x392x75xf32> to vector<392x75xf32>
    %cst_13 = arith.constant dense<0.000000e+00> : vector<392x128xf32>
    %19 = tpu.matmul %18, %0, %cst_13 {dimension_numbers = #tpu.dot_dimension_numbers<[1], [0], [0], [1], [0, 0, 1, 1], [], []>} : vector<392x75xf32>, vector<75x128xf32>, vector<392x128xf32> -> vector<392x128xf32>
    %20 = vector.broadcast %1 : vector<1x128xf32> to vector<392x128xf32>
    %21 = arith.addf %19, %20 : vector<392x128xf32>
    %cst_14 = arith.constant 0.000000e+00 : f32
    %22 = vector.broadcast %cst_14 : f32 to vector<392x128xf32>
    %23 = arith.maximumf %21, %22 : vector<392x128xf32>
    %c3 = arith.constant 3 : index
    %c0_15 = arith.constant 0 : index
    %c0_16 = arith.constant 0 : index
    %24 = vector.load %arg1[%c3, %c0_15, %c0_16] : memref<4x392x75xf32, #tpu.memory_space<vmem>>, vector<1x392x75xf32>
    %25 = vector.shape_cast %24 : vector<1x392x75xf32> to vector<392x75xf32>
    %cst_17 = arith.constant dense<0.000000e+00> : vector<392x128xf32>
    %26 = tpu.matmul %25, %0, %cst_17 {dimension_numbers = #tpu.dot_dimension_numbers<[1], [0], [0], [1], [0, 0, 1, 1], [], []>} : vector<392x75xf32>, vector<75x128xf32>, vector<392x128xf32> -> vector<392x128xf32>
    %27 = vector.broadcast %1 : vector<1x128xf32> to vector<392x128xf32>
    %28 = arith.addf %26, %27 : vector<392x128xf32>
    %cst_18 = arith.constant 0.000000e+00 : f32
    %29 = vector.broadcast %cst_18 : f32 to vector<392x128xf32>
    %30 = arith.maximumf %28, %29 : vector<392x128xf32>
    %31 = arith.maximumf %23, %30 : vector<392x128xf32>
    %32 = arith.maximumf %16, %31 : vector<392x128xf32>
    %c0_19 = arith.constant 0 : index
    %c0_20 = arith.constant 0 : index
    %33 = vector.load %arg4[%c0_19, %c0_20] : memref<1x128xf32, #tpu.memory_space<vmem>>, vector<1x128xf32>
    %34 = vector.broadcast %33 : vector<1x128xf32> to vector<392x128xf32>
    %35 = arith.mulf %32, %34 : vector<392x128xf32>
    %c0_21 = arith.constant 0 : index
    %c0_22 = arith.constant 0 : index
    %36 = vector.load %arg5[%c0_21, %c0_22] : memref<392x128xf32, #tpu.memory_space<vmem>>, vector<392x128xf32>
    tpu.vector_store %arg5[%c0_21, %c0_22], %35 {strides = array<i32>} : memref<392x128xf32, #tpu.memory_space<vmem>>, vector<392x128xf32>,
    return
  }
  func.func @transform_0(%arg0: i32) -> (i32, i32, i32) {
    %c0_i32 = arith.constant 0 : i32
    %c0_i32_0 = arith.constant 0 : i32
    %c0_i32_1 = arith.constant 0 : i32
    return %c0_i32, %arg0, %c0_i32_0 : i32, i32, i32
  }
  func.func @transform_1(%arg0: i32) -> (i32, i32) {
    %c0_i32 = arith.constant 0 : i32
    %c0_i32_0 = arith.constant 0 : i32
    %c0_i32_1 = arith.constant 0 : i32
    return %c0_i32, %c0_i32_0 : i32, i32
  }
  func.func @transform_2(%arg0: i32) -> (i32, i32) {
    %c0_i32 = arith.constant 0 : i32
    %c0_i32_0 = arith.constant 0 : i32
    %c0_i32_1 = arith.constant 0 : i32
    return %c0_i32, %c0_i32_0 : i32, i32
  }
  func.func @transform_3(%arg0: i32) -> (i32, i32) {
    %c0_i32 = arith.constant 0 : i32
    %c0_i32_0 = arith.constant 0 : i32
    %c0_i32_1 = arith.constant 0 : i32
    return %c0_i32, %c0_i32_0 : i32, i32
  }
  func.func @transform_4(%arg0: i32) -> (i32, i32) {
    %c0_i32 = arith.constant 0 : i32
    %c0_i32_0 = arith.constant 0 : i32
    return %arg0, %c0_i32 : i32, i32
  }
}

module attributes {stable_mosaic.version = 11 : i64} {
  func.func @_conv_pool_prune_kernel(%arg0: i32, %arg1: memref<4x50x400xf32, #tpu.memory_space<vmem>>, %arg2: memref<400x128xf32, #tpu.memory_space<vmem>>, %arg3: memref<1x128xf32, #tpu.memory_space<vmem>>, %arg4: memref<1x128xf32, #tpu.memory_space<vmem>>, %arg5: memref<50x128xf32, #tpu.memory_space<vmem>>) attributes {dimension_semantics = [#tpu.dimension_semantics<parallel>], iteration_bounds = array<i64: 1>, scalar_prefetch = 0 : i64, scratch_operands = 0 : i64, tpu.core_type = #tpu.core_type<tc>, window_params = [{transform_indices = @transform_0, window_bounds = array<i64: 4, 50, 400>}, {pipeline_mode = #tpu.pipeline_mode<synchronous>, transform_indices = @transform_1, window_bounds = array<i64: 400, 128>}, {pipeline_mode = #tpu.pipeline_mode<synchronous>, transform_indices = @transform_2, window_bounds = array<i64: 1, 128>}, {pipeline_mode = #tpu.pipeline_mode<synchronous>, transform_indices = @transform_3, window_bounds = array<i64: 1, 128>}, {transform_indices = @transform_4, window_bounds = array<i64: 50, 128>}]} {
    %c0 = arith.constant 0 : index
    %c0_0 = arith.constant 0 : index
    %0 = vector.load %arg2[%c0, %c0_0] : memref<400x128xf32, #tpu.memory_space<vmem>>, vector<400x128xf32>
    %c0_1 = arith.constant 0 : index
    %c0_2 = arith.constant 0 : index
    %1 = vector.load %arg3[%c0_1, %c0_2] : memref<1x128xf32, #tpu.memory_space<vmem>>, vector<1x128xf32>
    %c0_3 = arith.constant 0 : index
    %c0_4 = arith.constant 0 : index
    %c0_5 = arith.constant 0 : index
    %2 = vector.load %arg1[%c0_3, %c0_4, %c0_5] : memref<4x50x400xf32, #tpu.memory_space<vmem>>, vector<1x50x400xf32>
    %3 = vector.shape_cast %2 : vector<1x50x400xf32> to vector<50x400xf32>
    %cst = arith.constant dense<0.000000e+00> : vector<50x128xf32>
    %4 = tpu.matmul %3, %0, %cst {dimension_numbers = #tpu.dot_dimension_numbers<[1], [0], [0], [1], [0, 0, 1, 1], [], []>} : vector<50x400xf32>, vector<400x128xf32>, vector<50x128xf32> -> vector<50x128xf32>
    %5 = vector.broadcast %1 : vector<1x128xf32> to vector<50x128xf32>
    %6 = arith.addf %4, %5 : vector<50x128xf32>
    %cst_6 = arith.constant 0.000000e+00 : f32
    %7 = vector.broadcast %cst_6 : f32 to vector<50x128xf32>
    %8 = arith.maximumf %6, %7 : vector<50x128xf32>
    %c1 = arith.constant 1 : index
    %c0_7 = arith.constant 0 : index
    %c0_8 = arith.constant 0 : index
    %9 = vector.load %arg1[%c1, %c0_7, %c0_8] : memref<4x50x400xf32, #tpu.memory_space<vmem>>, vector<1x50x400xf32>
    %10 = vector.shape_cast %9 : vector<1x50x400xf32> to vector<50x400xf32>
    %cst_9 = arith.constant dense<0.000000e+00> : vector<50x128xf32>
    %11 = tpu.matmul %10, %0, %cst_9 {dimension_numbers = #tpu.dot_dimension_numbers<[1], [0], [0], [1], [0, 0, 1, 1], [], []>} : vector<50x400xf32>, vector<400x128xf32>, vector<50x128xf32> -> vector<50x128xf32>
    %12 = vector.broadcast %1 : vector<1x128xf32> to vector<50x128xf32>
    %13 = arith.addf %11, %12 : vector<50x128xf32>
    %cst_10 = arith.constant 0.000000e+00 : f32
    %14 = vector.broadcast %cst_10 : f32 to vector<50x128xf32>
    %15 = arith.maximumf %13, %14 : vector<50x128xf32>
    %16 = arith.maximumf %8, %15 : vector<50x128xf32>
    %c2 = arith.constant 2 : index
    %c0_11 = arith.constant 0 : index
    %c0_12 = arith.constant 0 : index
    %17 = vector.load %arg1[%c2, %c0_11, %c0_12] : memref<4x50x400xf32, #tpu.memory_space<vmem>>, vector<1x50x400xf32>
    %18 = vector.shape_cast %17 : vector<1x50x400xf32> to vector<50x400xf32>
    %cst_13 = arith.constant dense<0.000000e+00> : vector<50x128xf32>
    %19 = tpu.matmul %18, %0, %cst_13 {dimension_numbers = #tpu.dot_dimension_numbers<[1], [0], [0], [1], [0, 0, 1, 1], [], []>} : vector<50x400xf32>, vector<400x128xf32>, vector<50x128xf32> -> vector<50x128xf32>
    %20 = vector.broadcast %1 : vector<1x128xf32> to vector<50x128xf32>
    %21 = arith.addf %19, %20 : vector<50x128xf32>
    %cst_14 = arith.constant 0.000000e+00 : f32
    %22 = vector.broadcast %cst_14 : f32 to vector<50x128xf32>
    %23 = arith.maximumf %21, %22 : vector<50x128xf32>
    %c3 = arith.constant 3 : index
    %c0_15 = arith.constant 0 : index
    %c0_16 = arith.constant 0 : index
    %24 = vector.load %arg1[%c3, %c0_15, %c0_16] : memref<4x50x400xf32, #tpu.memory_space<vmem>>, vector<1x50x400xf32>
    %25 = vector.shape_cast %24 : vector<1x50x400xf32> to vector<50x400xf32>
    %cst_17 = arith.constant dense<0.000000e+00> : vector<50x128xf32>
    %26 = tpu.matmul %25, %0, %cst_17 {dimension_numbers = #tpu.dot_dimension_numbers<[1], [0], [0], [1], [0, 0, 1, 1], [], []>} : vector<50x400xf32>, vector<400x128xf32>, vector<50x128xf32> -> vector<50x128xf32>
    %27 = vector.broadcast %1 : vector<1x128xf32> to vector<50x128xf32>
    %28 = arith.addf %26, %27 : vector<50x128xf32>
    %cst_18 = arith.constant 0.000000e+00 : f32
    %29 = vector.broadcast %cst_18 : f32 to vector<50x128xf32>
    %30 = arith.maximumf %28, %29 : vector<50x128xf32>
    %31 = arith.maximumf %23, %30 : vector<50x128xf32>
    %32 = arith.maximumf %16, %31 : vector<50x128xf32>
    %c0_19 = arith.constant 0 : index
    %c0_20 = arith.constant 0 : index
    %33 = vector.load %arg4[%c0_19, %c0_20] : memref<1x128xf32, #tpu.memory_space<vmem>>, vector<1x128xf32>
    %34 = vector.broadcast %33 : vector<1x128xf32> to vector<50x128xf32>
    %35 = arith.mulf %32, %34 : vector<50x128xf32>
    %c0_21 = arith.constant 0 : index
    %c0_22 = arith.constant 0 : index
    %36 = vector.load %arg5[%c0_21, %c0_22] : memref<50x128xf32, #tpu.memory_space<vmem>>, vector<50x128xf32>
    tpu.vector_store %arg5[%c0_21, %c0_22], %35 {strides = array<i32>} : memref<50x128xf32, #tpu.memory_space<vmem>>, vector<50x128xf32>,
    return
  }
  func.func @transform_0(%arg0: i32) -> (i32, i32, i32) {
    %c0_i32 = arith.constant 0 : i32
    %c0_i32_0 = arith.constant 0 : i32
    %c0_i32_1 = arith.constant 0 : i32
    return %c0_i32, %arg0, %c0_i32_0 : i32, i32, i32
  }
  func.func @transform_1(%arg0: i32) -> (i32, i32) {
    %c0_i32 = arith.constant 0 : i32
    %c0_i32_0 = arith.constant 0 : i32
    %c0_i32_1 = arith.constant 0 : i32
    return %c0_i32, %c0_i32_0 : i32, i32
  }
  func.func @transform_2(%arg0: i32) -> (i32, i32) {
    %c0_i32 = arith.constant 0 : i32
    %c0_i32_0 = arith.constant 0 : i32
    %c0_i32_1 = arith.constant 0 : i32
    return %c0_i32, %c0_i32_0 : i32, i32
  }
  func.func @transform_3(%arg0: i32) -> (i32, i32) {
    %c0_i32 = arith.constant 0 : i32
    %c0_i32_0 = arith.constant 0 : i32
    %c0_i32_1 = arith.constant 0 : i32
    return %c0_i32, %c0_i32_0 : i32, i32
  }
  func.func @transform_4(%arg0: i32) -> (i32, i32) {
    %c0_i32 = arith.constant 0 : i32
    %c0_i32_0 = arith.constant 0 : i32
    return %arg0, %c0_i32 : i32, i32
  }
}

module attributes {stable_mosaic.version = 11 : i64} {
  func.func @_mlp_kernel(%arg0: i32, %arg1: memref<2x800xf32, #tpu.memory_space<vmem>>, %arg2: memref<800x128xf32, #tpu.memory_space<vmem>>, %arg3: memref<1x128xf32, #tpu.memory_space<vmem>>, %arg4: memref<1x128xf32, #tpu.memory_space<vmem>>, %arg5: memref<128x128xf32, #tpu.memory_space<vmem>>, %arg6: memref<1x128xf32, #tpu.memory_space<vmem>>, %arg7: memref<1x128xf32, #tpu.memory_space<vmem>>, %arg8: memref<128x128xf32, #tpu.memory_space<vmem>>, %arg9: memref<1x128xf32, #tpu.memory_space<vmem>>, %arg10: memref<2x128xf32, #tpu.memory_space<vmem>>) attributes {dimension_semantics = [#tpu.dimension_semantics<parallel>], iteration_bounds = array<i64: 1>, scalar_prefetch = 0 : i64, scratch_operands = 0 : i64, tpu.core_type = #tpu.core_type<tc>, window_params = [{transform_indices = @transform_0, window_bounds = array<i64: 2, 800>}, {pipeline_mode = #tpu.pipeline_mode<synchronous>, transform_indices = @transform_1, window_bounds = array<i64: 800, 128>}, {pipeline_mode = #tpu.pipeline_mode<synchronous>, transform_indices = @transform_2, window_bounds = array<i64: 1, 128>}, {pipeline_mode = #tpu.pipeline_mode<synchronous>, transform_indices = @transform_3, window_bounds = array<i64: 1, 128>}, {pipeline_mode = #tpu.pipeline_mode<synchronous>, transform_indices = @transform_4, window_bounds = array<i64: 128, 128>}, {pipeline_mode = #tpu.pipeline_mode<synchronous>, transform_indices = @transform_5, window_bounds = array<i64: 1, 128>}, {pipeline_mode = #tpu.pipeline_mode<synchronous>, transform_indices = @transform_6, window_bounds = array<i64: 1, 128>}, {pipeline_mode = #tpu.pipeline_mode<synchronous>, transform_indices = @transform_7, window_bounds = array<i64: 128, 128>}, {pipeline_mode = #tpu.pipeline_mode<synchronous>, transform_indices = @transform_8, window_bounds = array<i64: 1, 128>}, {transform_indices = @transform_9, window_bounds = array<i64: 2, 128>}]} {
    %c0 = arith.constant 0 : index
    %c0_0 = arith.constant 0 : index
    %0 = vector.load %arg1[%c0, %c0_0] : memref<2x800xf32, #tpu.memory_space<vmem>>, vector<2x800xf32>
    %c0_1 = arith.constant 0 : index
    %c0_2 = arith.constant 0 : index
    %1 = vector.load %arg2[%c0_1, %c0_2] : memref<800x128xf32, #tpu.memory_space<vmem>>, vector<800x128xf32>
    %cst = arith.constant dense<0.000000e+00> : vector<2x128xf32>
    %2 = tpu.matmul %0, %1, %cst {dimension_numbers = #tpu.dot_dimension_numbers<[1], [0], [0], [1], [0, 0, 1, 1], [], []>} : vector<2x800xf32>, vector<800x128xf32>, vector<2x128xf32> -> vector<2x128xf32>
    %c0_3 = arith.constant 0 : index
    %c0_4 = arith.constant 0 : index
    %3 = vector.load %arg3[%c0_3, %c0_4] : memref<1x128xf32, #tpu.memory_space<vmem>>, vector<1x128xf32>
    %4 = vector.broadcast %3 : vector<1x128xf32> to vector<2x128xf32>
    %5 = arith.addf %2, %4 : vector<2x128xf32>
    %cst_5 = arith.constant 0.000000e+00 : f32
    %6 = vector.broadcast %cst_5 : f32 to vector<2x128xf32>
    %7 = arith.maximumf %5, %6 : vector<2x128xf32>
    %c0_6 = arith.constant 0 : index
    %c0_7 = arith.constant 0 : index
    %8 = vector.load %arg4[%c0_6, %c0_7] : memref<1x128xf32, #tpu.memory_space<vmem>>, vector<1x128xf32>
    %9 = vector.broadcast %8 : vector<1x128xf32> to vector<2x128xf32>
    %10 = arith.mulf %7, %9 : vector<2x128xf32>
    %c0_8 = arith.constant 0 : index
    %c0_9 = arith.constant 0 : index
    %11 = vector.load %arg5[%c0_8, %c0_9] : memref<128x128xf32, #tpu.memory_space<vmem>>, vector<128x128xf32>
    %cst_10 = arith.constant dense<0.000000e+00> : vector<2x128xf32>
    %12 = tpu.matmul %10, %11, %cst_10 {dimension_numbers = #tpu.dot_dimension_numbers<[1], [0], [0], [1], [0, 0, 1, 1], [], []>} : vector<2x128xf32>, vector<128x128xf32>, vector<2x128xf32> -> vector<2x128xf32>
    %c0_11 = arith.constant 0 : index
    %c0_12 = arith.constant 0 : index
    %13 = vector.load %arg6[%c0_11, %c0_12] : memref<1x128xf32, #tpu.memory_space<vmem>>, vector<1x128xf32>
    %14 = vector.broadcast %13 : vector<1x128xf32> to vector<2x128xf32>
    %15 = arith.addf %12, %14 : vector<2x128xf32>
    %cst_13 = arith.constant 0.000000e+00 : f32
    %16 = vector.broadcast %cst_13 : f32 to vector<2x128xf32>
    %17 = arith.maximumf %15, %16 : vector<2x128xf32>
    %c0_14 = arith.constant 0 : index
    %c0_15 = arith.constant 0 : index
    %18 = vector.load %arg7[%c0_14, %c0_15] : memref<1x128xf32, #tpu.memory_space<vmem>>, vector<1x128xf32>
    %19 = vector.broadcast %18 : vector<1x128xf32> to vector<2x128xf32>
    %20 = arith.mulf %17, %19 : vector<2x128xf32>
    %c0_16 = arith.constant 0 : index
    %c0_17 = arith.constant 0 : index
    %21 = vector.load %arg8[%c0_16, %c0_17] : memref<128x128xf32, #tpu.memory_space<vmem>>, vector<128x128xf32>
    %cst_18 = arith.constant dense<0.000000e+00> : vector<2x128xf32>
    %22 = tpu.matmul %20, %21, %cst_18 {dimension_numbers = #tpu.dot_dimension_numbers<[1], [0], [0], [1], [0, 0, 1, 1], [], []>} : vector<2x128xf32>, vector<128x128xf32>, vector<2x128xf32> -> vector<2x128xf32>
    %c0_19 = arith.constant 0 : index
    %c0_20 = arith.constant 0 : index
    %23 = vector.load %arg9[%c0_19, %c0_20] : memref<1x128xf32, #tpu.memory_space<vmem>>, vector<1x128xf32>
    %24 = vector.broadcast %23 : vector<1x128xf32> to vector<2x128xf32>
    %25 = arith.addf %22, %24 : vector<2x128xf32>
    %c0_21 = arith.constant 0 : index
    %c0_22 = arith.constant 0 : index
    %26 = vector.load %arg10[%c0_21, %c0_22] : memref<2x128xf32, #tpu.memory_space<vmem>>, vector<2x128xf32>
    tpu.vector_store %arg10[%c0_21, %c0_22], %25 {strides = array<i32>} : memref<2x128xf32, #tpu.memory_space<vmem>>, vector<2x128xf32>,
    return
  }
  func.func @transform_0(%arg0: i32) -> (i32, i32) {
    %c0_i32 = arith.constant 0 : i32
    %c0_i32_0 = arith.constant 0 : i32
    return %arg0, %c0_i32 : i32, i32
  }
  func.func @transform_1(%arg0: i32) -> (i32, i32) {
    %c0_i32 = arith.constant 0 : i32
    %c0_i32_0 = arith.constant 0 : i32
    %c0_i32_1 = arith.constant 0 : i32
    return %c0_i32, %c0_i32_0 : i32, i32
  }
  func.func @transform_2(%arg0: i32) -> (i32, i32) {
    %c0_i32 = arith.constant 0 : i32
    %c0_i32_0 = arith.constant 0 : i32
    %c0_i32_1 = arith.constant 0 : i32
    return %c0_i32, %c0_i32_0 : i32, i32
  }
  func.func @transform_3(%arg0: i32) -> (i32, i32) {
    %c0_i32 = arith.constant 0 : i32
    %c0_i32_0 = arith.constant 0 : i32
    %c0_i32_1 = arith.constant 0 : i32
    return %c0_i32, %c0_i32_0 : i32, i32
  }
  func.func @transform_4(%arg0: i32) -> (i32, i32) {
    %c0_i32 = arith.constant 0 : i32
    %c0_i32_0 = arith.constant 0 : i32
    %c0_i32_1 = arith.constant 0 : i32
    return %c0_i32, %c0_i32_0 : i32, i32
  }
  func.func @transform_5(%arg0: i32) -> (i32, i32) {
    %c0_i32 = arith.constant 0 : i32
    %c0_i32_0 = arith.constant 0 : i32
    %c0_i32_1 = arith.constant 0 : i32
    return %c0_i32, %c0_i32_0 : i32, i32
  }
  func.func @transform_6(%arg0: i32) -> (i32, i32) {
    %c0_i32 = arith.constant 0 : i32
    %c0_i32_0 = arith.constant 0 : i32
    %c0_i32_1 = arith.constant 0 : i32
    return %c0_i32, %c0_i32_0 : i32, i32
  }
  func.func @transform_7(%arg0: i32) -> (i32, i32) {
    %c0_i32 = arith.constant 0 : i32
    %c0_i32_0 = arith.constant 0 : i32
    %c0_i32_1 = arith.constant 0 : i32
    return %c0_i32, %c0_i32_0 : i32, i32
  }
  func.func @transform_8(%arg0: i32) -> (i32, i32) {
    %c0_i32 = arith.constant 0 : i32
    %c0_i32_0 = arith.constant 0 : i32
    %c0_i32_1 = arith.constant 0 : i32
    return %c0_i32, %c0_i32_0 : i32, i32
  }
  func.func @transform_9(%arg0: i32) -> (i32, i32) {
    %c0_i32 = arith.constant 0 : i32
    %c0_i32_0 = arith.constant 0 : i32
    return %arg0, %c0_i32 : i32, i32
  }
}

</mosaic_0001>

<llo_original>
// kernel: lenet_forward.3
$region0: #{lenet_forward.3}
  #allocation0 [shape = 'u32[]', space=smem, size = 0x4, offset = 0x4, fixed_abs, tag = 'smem constant byte address 0x4 - core index']
  #allocation1 [shape = 'u32[144,128]{1,0:T(1,128)}', space=vmem, size = 0x12000, scoped, tag = 'internal scratch']
  %s0 = inlined_call_operand.vmem [shape: f32[4,392,75], index: 0, kind: input, shape index: {}]
  %s1 = inlined_call_operand.vmem [shape: f32[75,128], index: 1, kind: input, shape index: {}]
  %s2 = inlined_call_operand.vmem [shape: f32[1,128], index: 2, kind: input, shape index: {}]
  %s3 = inlined_call_operand.vmem [shape: f32[1,128], index: 3, kind: input, shape index: {}]
  %s4 = inlined_call_operand.vmem [shape: f32[392,128], index: 4, kind: output, shape index: {}]
  %s5 = sld [smem:[#allocation0]]
  $region26: #{lenet_forward.3} parent=0
    _
  %s7 = ssub.s32 1, %s5
  %s8 = scalar_select 0, %s7, %s5
  // Predicated region
  $region2: #{lenet_forward.3} parent=0 // pred_check
    _
  $region3: #{lenet_forward.3} parent=0 // pred_check_branch
    %10 = sbr.rel (0) target = $region5
  $region4: #{lenet_forward.3} parent=0 // pred_region
    _
  $region5: #{lenet_forward.3} parent=0 // pred_fallthru
    _
  // Predicated region
  $region6: #{lenet_forward.3} parent=0 // pred_check
    _
  $region7: #{lenet_forward.3} parent=0 // pred_check_branch
    %12 = sbr.rel (0) target = $region9
  $region8: #{lenet_forward.3} parent=0 // pred_region
    _
  $region9: #{lenet_forward.3} parent=0 // pred_fallthru
    _
  // Predicated region
  $region10: #{lenet_forward.3} parent=0 // pred_check
    _
  $region11: #{lenet_forward.3} parent=0 // pred_check_branch
    %14 = sbr.rel (0) target = $region13
  $region12: #{lenet_forward.3} parent=0 // pred_region
    _
  $region13: #{lenet_forward.3} parent=0 // pred_fallthru
    _
  // Predicated region
  $region14: #{lenet_forward.3} parent=0 // pred_check
    _
  $region15: #{lenet_forward.3} parent=0 // pred_check_branch
    %16 = sbr.rel (0) target = $region17
  $region16: #{lenet_forward.3} parent=0 // pred_region
    _
  $region17: #{lenet_forward.3} parent=0 // pred_fallthru
    _
  %v17 = vld [vmem:[%s1] sm:$0xff]
  %v18 = vld [vmem:[%s1 + $0x8] sm:$0xff]
  %v19 = vld [vmem:[%s1 + $0x10] sm:$0xff]
  %v20 = vld [vmem:[%s1 + $0x18] sm:$0xff]
  %v21 = vld [vmem:[%s1 + $0x20] sm:$0xff]
  %v22 = vld [vmem:[%s1 + $0x28] sm:$0xff]
  %v23 = vld [vmem:[%s1 + $0x30] sm:$0xff]
  %v24 = vld [vmem:[%s1 + $0x38] sm:$0xff]
  %v25 = vld [vmem:[%s1 + $0x40] sm:$0xff]
  %v26 = vld [vmem:[%s1 + $0x48] sm:$0x7]
  %v27 = vld [vmem:[%s2] sm:$0x1]
  %v28 = vld [vmem:[%s0] sm:$0xff]
  %v29 = vld [vmem:[%s0 + $0x8] sm:$0xff]
  %v30 = vld [vmem:[%s0 + $0x10] sm:$0xff]
  %v31 = vld [vmem:[%s0 + $0x18] sm:$0xff]
  %v32 = vld [vmem:[%s0 + $0x20] sm:$0xff]
  %v33 = vld [vmem:[%s0 + $0x28] sm:$0xff]
  %v34 = vld [vmem:[%s0 + $0x30] sm:$0xff]
  %v35 = vld [vmem:[%s0 + $0x38] sm:$0xff]
  %v36 = vld [vmem:[%s0 + $0x40] sm:$0xff]
  %v37 = vld [vmem:[%s0 + $0x48] sm:$0xff]
  %v38 = vld [vmem:[%s0 + $0x50] sm:$0xff]
  %v39 = vld [vmem:[%s0 + $0x58] sm:$0xff]
  %v40 = vld [vmem:[%s0 + $0x60] sm:$0xff]
  %v41 = vld [vmem:[%s0 + $0x68] sm:$0xff]
  %v42 = vld [vmem:[%s0 + $0x70] sm:$0xff]
  %v43 = vld [vmem:[%s0 + $0x78] sm:$0xff]
  %v44 = vld [vmem:[%s0 + $0x80] sm:$0xff]
  %v45 = vld [vmem:[%s0 + $0x88] sm:$0xff]
  %v46 = vld [vmem:[%s0 + $0x90] sm:$0xff]
  %v47 = vld [vmem:[%s0 + $0x98] sm:$0xff]
  %v48 = vld [vmem:[%s0 + $0xa0] sm:$0xff]
  %v49 = vld [vmem:[%s0 + $0xa8] sm:$0xff]
  %v50 = vld [vmem:[%s0 + $0xb0] sm:$0xff]
  %v51 = vld [vmem:[%s0 + $0xb8] sm:$0xff]
  %v52 = vld [vmem:[%s0 + $0xc0] sm:$0xff]
  %v53 = vld [vmem:[%s0 + $0xc8] sm:$0xff]
  %v54 = vld [vmem:[%s0 + $0xd0] sm:$0xff]
  %v55 = vld [vmem:[%s0 + $0xd8] sm:$0xff]
  %v56 = vld [vmem:[%s0 + $0xe0] sm:$0xff]
  %v57 = vld [vmem:[%s0 + $0xe8] sm:$0xff]
  %v58 = vld [vmem:[%s0 + $0xf0] sm:$0xff]
  %v59 = vld [vmem:[%s0 + $0xf8] sm:$0xff]
  %v60 = vld [vmem:[%s0 + $0x100] sm:$0xff]
  %v61 = vld [vmem:[%s0 + $0x108] sm:$0xff]
  %v62 = vld [vmem:[%s0 + $0x110] sm:$0xff]
  %v63 = vld [vmem:[%s0 + $0x118] sm:$0xff]
  %v64 = vld [vmem:[%s0 + $0x120] sm:$0xff]
  %v65 = vld [vmem:[%s0 + $0x128] sm:$0xff]
  %v66 = vld [vmem:[%s0 + $0x130] sm:$0xff]
  %v67 = vld [vmem:[%s0 + $0x138] sm:$0xff]
  %v68 = vld [vmem:[%s0 + $0x140] sm:$0xff]
  %v69 = vld [vmem:[%s0 + $0x148] sm:$0xff]
  %v70 = vld [vmem:[%s0 + $0x150] sm:$0xff]
  %v71 = vld [vmem:[%s0 + $0x158] sm:$0xff]
  %v72 = vld [vmem:[%s0 + $0x160] sm:$0xff]
  %v73 = vld [vmem:[%s0 + $0x168] sm:$0xff]
  %v74 = vld [vmem:[%s0 + $0x170] sm:$0xff]
  %v75 = vld [vmem:[%s0 + $0x178] sm:$0xff]
  %v76 = vld [vmem:[%s0 + $0x180] sm:$0xff]
  %v78 = vlaneseq
  %v79 = vshrl.u32 %v78, 7
  %v80 = vsub.s32 0, %v79
  %v81 = vrot.slane %v27, %v80
  %vm83 = vcmask 613376
  %v85 = vsel %vm83, %v28, 0
  %v88 = vsel %vm83, %v29, 0
  %v91 = vsel %vm83, %v30, 0
  %v94 = vsel %vm83, %v31, 0
  %v97 = vsel %vm83, %v32, 0
  %v100 = vsel %vm83, %v33, 0
  %v103 = vsel %vm83, %v34, 0
  %v106 = vsel %vm83, %v35, 0
  %v109 = vsel %vm83, %v36, 0
  %v112 = vsel %vm83, %v37, 0
  %v115 = vsel %vm83, %v38, 0
  %v118 = vsel %vm83, %v39, 0
  %v121 = vsel %vm83, %v40, 0
  %v124 = vsel %vm83, %v41, 0
  %v127 = vsel %vm83, %v42, 0
  %v130 = vsel %vm83, %v43, 0
  %v133 = vsel %vm83, %v44, 0
  %v136 = vsel %vm83, %v45, 0
  %v139 = vsel %vm83, %v46, 0
  %v142 = vsel %vm83, %v47, 0
  %v145 = vsel %vm83, %v48, 0
  %v148 = vsel %vm83, %v49, 0
  %v151 = vsel %vm83, %v50, 0
  %v154 = vsel %vm83, %v51, 0
  %v157 = vsel %vm83, %v52, 0
  %v160 = vsel %vm83, %v53, 0
  %v163 = vsel %vm83, %v54, 0
  %v166 = vsel %vm83, %v55, 0
  %v169 = vsel %vm83, %v56, 0
  %v172 = vsel %vm83, %v57, 0
  %v175 = vsel %vm83, %v58, 0
  %v178 = vsel %vm83, %v59, 0
  %v181 = vsel %vm83, %v60, 0
  %v184 = vsel %vm83, %v61, 0
  %v187 = vsel %vm83, %v62, 0
  %v190 = vsel %vm83, %v63, 0
  %v193 = vsel %vm83, %v64, 0
  %v196 = vsel %vm83, %v65, 0
  %v199 = vsel %vm83, %v66, 0
  %v202 = vsel %vm83, %v67, 0
  %v205 = vsel %vm83, %v68, 0
  %v208 = vsel %vm83, %v69, 0
  %v211 = vsel %vm83, %v70, 0
  %v214 = vsel %vm83, %v71, 0
  %v217 = vsel %vm83, %v72, 0
  %v220 = vsel %vm83, %v73, 0
  %v223 = vsel %vm83, %v74, 0
  %v226 = vsel %vm83, %v75, 0
  %v229 = vsel %vm83, %v76, 0
  %vm231 = vcmask 1042432
  %v233 = vsel %vm231, %v26, 0
  %235 = vmatprep.subr.mxu0 0.0
  %236 = vmatpush1.msra.mxu0 %v17
  %237 = vmatprep.subr.mxu0 0.0
  %238 = vmatpush1.msra.mxu0 %v18
  %239 = vmatprep.subr.mxu0 0.0
  %240 = vmatpush1.msra.mxu0 %v19
  %241 = vmatprep.subr.mxu0 0.0
  %242 = vmatpush1.msra.mxu0 %v20
  %243 = vmatprep.subr.mxu0 0.0
  %244 = vmatpush1.msra.mxu0 %v21
  %245 = vmatprep.subr.mxu0 0.0
  %246 = vmatpush1.msra.mxu0 %v22
  %247 = vmatprep.subr.mxu0 0.0
  %248 = vmatpush1.msra.mxu0 %v23
  %249 = vmatprep.subr.mxu0 0.0
  %250 = vmatpush1.msra.mxu0 %v24
  %251 = vmatprep.subr.mxu0 0.0
  %252 = vmatpush1.msra.mxu0 %v25
  %253 = vmatprep.subr.mxu0 0.0
  %254 = vmatpush1.msra.mxu0 %v233
  %255 = vmatprep.subr.mxu0 0.0
  %256 = vmatpush1.msra.mxu0 0.0
  %257 = vmatprep.subr.mxu0 0.0
  %258 = vmatpush1.msra.mxu0 0.0
  %259 = vmatprep.subr.mxu0 0.0
  %260 = vmatpush1.msra.mxu0 0.0
  %261 = vmatprep.subr.mxu0 0.0
  %262 = vmatpush1.msra.mxu0 0.0
  %263 = vmatprep.subr.mxu0 0.0
  %264 = vmatpush1.msra.mxu0 0.0
  %265 = vmatprep.subr.mxu0 0.0
  %266 = vmatpush1.msra.mxu0 0.0
  %267 = vmatprep.subr.mxu0 0.0
  %268 = vmatpush1.msra.mxu0 0.0
  %269 = vmatprep.subr.mxu0 0.0
  %270 = vmatpush1.msra.mxu0 0.0
  %271 = vmatprep.subr.mxu0 0.0
  %272 = vmatpush1.msra.mxu0 0.0
  %273 = vmatprep.subr.mxu0 0.0
  %274 = vmatpush1.msra.mxu0 0.0
  %275 = vmatprep.subr.mxu0 0.0
  %276 = vmatpush1.msra.mxu0 0.0
  %277 = vmatprep.subr.mxu0 0.0
  %278 = vmatpush1.msra.mxu0 0.0
  %279 = vmatprep.subr.mxu0 0.0
  %280 = vmatpush1.msra.mxu0 0.0
  %281 = vmatprep.subr.mxu0 0.0
  %282 = vmatpush1.msra.mxu0 0.0
  %283 = vmatprep.subr.mxu0 0.0
  %284 = vmatpush1.msra.mxu0 0.0
  %285 = vmatprep.subr.mxu0 0.0
  %286 = vmatpush1.msra.mxu0 0.0
  %287 = vmatprep.subr.mxu0 0.0
  %288 = vmatpush1.msra.mxu0 0.0
  %289 = vmatprep.subr.mxu0 0.0
  %290 = vmatpush1.msra.mxu0 0.0
  %291 = vmatprep.subr.mxu0 0.0
  %292 = vmatpush1.msra.mxu0 0.0
  %293 = vmatprep.subr.mxu0 0.0
  %294 = vmatpush1.msra.mxu0 0.0
  %295 = vmatprep.subr.mxu0 0.0
  %296 = vmatpush1.msra.mxu0 0.0
  %297 = vmatprep.subr.mxu0 0.0
  %298 = vmatpush1.msra.mxu0 0.0
  %299 = vmatprep.mubr.f32.mxu0 0.0
  %300 = vmatmul.mubr.f32.gmra.mrb[0].mxu0 %v85
  %v301 = vpop.f32.mrb[0].mxu0
  %v302 = vadd.f32 %v81, %v301
  %v303 = vpop.f32.mrb[0].mxu0
  %304 = vmatprep.mubr.f32.mxu0 0.0
  %305 = vmatmul.mubr.f32.gmra.mrb[0].mxu0 %v88
  %v306 = vpop.f32.mrb[0].mxu0
  %v307 = vadd.f32 %v81, %v306
  %v308 = vpop.f32.mrb[0].mxu0
  %309 = vmatprep.mubr.f32.mxu0 0.0
  %310 = vmatmul.mubr.f32.gmra.mrb[0].mxu0 %v91
  %v311 = vpop.f32.mrb[0].mxu0
  %v312 = vadd.f32 %v81, %v311
  %v313 = vpop.f32.mrb[0].mxu0
  %314 = vmatprep.mubr.f32.mxu0 0.0
  %315 = vmatmul.mubr.f32.gmra.mrb[0].mxu0 %v94
  %v316 = vpop.f32.mrb[0].mxu0
  %v317 = vadd.f32 %v81, %v316
  %v318 = vpop.f32.mrb[0].mxu0
  %319 = vmatprep.mubr.f32.mxu0 0.0
  %320 = vmatmul.mubr.f32.gmra.mrb[0].mxu0 %v97
  %v321 = vpop.f32.mrb[0].mxu0
  %v322 = vadd.f32 %v81, %v321
  %v323 = vpop.f32.mrb[0].mxu0
  %324 = vmatprep.mubr.f32.mxu0 0.0
  %325 = vmatmul.mubr.f32.gmra.mrb[0].mxu0 %v100
  %v326 = vpop.f32.mrb[0].mxu0
  %v327 = vadd.f32 %v81, %v326
  %v328 = vpop.f32.mrb[0].mxu0
  %329 = vmatprep.mubr.f32.mxu0 0.0
  %330 = vmatmul.mubr.f32.gmra.mrb[0].mxu0 %v103
  %v331 = vpop.f32.mrb[0].mxu0
  %v332 = vadd.f32 %v81, %v331
  %v333 = vpop.f32.mrb[0].mxu0
  %334 = vmatprep.mubr.f32.mxu0 0.0
  %335 = vmatmul.mubr.f32.gmra.mrb[0].mxu0 %v106
  %v336 = vpop.f32.mrb[0].mxu0
  %v337 = vadd.f32 %v81, %v336
  %v338 = vpop.f32.mrb[0].mxu0
  %339 = vmatprep.mubr.f32.mxu0 0.0
  %340 = vmatmul.mubr.f32.gmra.mrb[0].mxu0 %v109
  %v341 = vpop.f32.mrb[0].mxu0
  %v342 = vadd.f32 %v81, %v341
  %v343 = vpop.f32.mrb[0].mxu0
  %344 = vmatprep.mubr.f32.mxu0 0.0
  %345 = vmatmul.mubr.f32.gmra.mrb[0].mxu0 %v112
  %v346 = vpop.f32.mrb[0].mxu0
  %v347 = vadd.f32 %v81, %v346
  %v348 = vpop.f32.mrb[0].mxu0
  %349 = vmatprep.mubr.f32.mxu0 0.0
  %350 = vmatmul.mubr.f32.gmra.mrb[0].mxu0 %v115
  %v351 = vpop.f32.mrb[0].mxu0
  %v352 = vadd.f32 %v81, %v351
  %v353 = vpop.f32.mrb[0].mxu0
  %354 = vmatprep.mubr.f32.mxu0 0.0
  %355 = vmatmul.mubr.f32.gmra.mrb[0].mxu0 %v118
  %v356 = vpop.f32.mrb[0].mxu0
  %v357 = vadd.f32 %v81, %v356
  %v358 = vpop.f32.mrb[0].mxu0
  %359 = vmatprep.mubr.f32.mxu0 0.0
  %360 = vmatmul.mubr.f32.gmra.mrb[0].mxu0 %v121
  %v361 = vpop.f32.mrb[0].mxu0
  %v362 = vadd.f32 %v81, %v361
  %v363 = vpop.f32.mrb[0].mxu0
  %364 = vmatprep.mubr.f32.mxu0 0.0
  %365 = vmatmul.mubr.f32.gmra.mrb[0].mxu0 %v124
  %v366 = vpop.f32.mrb[0].mxu0
  %v367 = vadd.f32 %v81, %v366
  %v368 = vpop.f32.mrb[0].mxu0
  %369 = vmatprep.mubr.f32.mxu0 0.0
  %370 = vmatmul.mubr.f32.gmra.mrb[0].mxu0 %v127
  %v371 = vpop.f32.mrb[0].mxu0
  %v372 = vadd.f32 %v81, %v371
  %v373 = vpop.f32.mrb[0].mxu0
  %374 = vmatprep.mubr.f32.mxu0 0.0
  %375 = vmatmul.mubr.f32.gmra.mrb[0].mxu0 %v130
  %v376 = vpop.f32.mrb[0].mxu0
  %v377 = vadd.f32 %v81, %v376
  %v378 = vpop.f32.mrb[0].mxu0
  %379 = vmatprep.mubr.f32.mxu0 0.0
  %380 = vmatmul.mubr.f32.gmra.mrb[0].mxu0 %v133
  %v381 = vpop.f32.mrb[0].mxu0
  %v382 = vadd.f32 %v81, %v381
  %v383 = vpop.f32.mrb[0].mxu0
  %384 = vmatprep.mubr.f32.mxu0 0.0
  %385 = vmatmul.mubr.f32.gmra.mrb[0].mxu0 %v136
  %v386 = vpop.f32.mrb[0].mxu0
  %v387 = vadd.f32 %v81, %v386
  %v388 = vpop.f32.mrb[0].mxu0
  %389 = vmatprep.mubr.f32.mxu0 0.0
  %390 = vmatmul.mubr.f32.gmra.mrb[0].mxu0 %v139
  %v391 = vpop.f32.mrb[0].mxu0
  %v392 = vadd.f32 %v81, %v391
  %v393 = vpop.f32.mrb[0].mxu0
  %394 = vmatprep.mubr.f32.mxu0 0.0
  %395 = vmatmul.mubr.f32.gmra.mrb[0].mxu0 %v142
  %v396 = vpop.f32.mrb[0].mxu0
  %v397 = vadd.f32 %v81, %v396
  %v398 = vpop.f32.mrb[0].mxu0
  %399 = vmatprep.mubr.f32.mxu0 0.0
  %400 = vmatmul.mubr.f32.gmra.mrb[0].mxu0 %v145
  %v401 = vpop.f32.mrb[0].mxu0
  %v402 = vadd.f32 %v81, %v401
  %v403 = vpop.f32.mrb[0].mxu0
  %404 = vmatprep.mubr.f32.mxu0 0.0
  %405 = vmatmul.mubr.f32.gmra.mrb[0].mxu0 %v148
  %v406 = vpop.f32.mrb[0].mxu0
  %v407 = vadd.f32 %v81, %v406
  %v408 = vpop.f32.mrb[0].mxu0
  %409 = vmatprep.mubr.f32.mxu0 0.0
  %410 = vmatmul.mubr.f32.gmra.mrb[0].mxu0 %v151
  %v411 = vpop.f32.mrb[0].mxu0
  %v412 = vadd.f32 %v81, %v411
  %v413 = vpop.f32.mrb[0].mxu0
  %414 = vmatprep.mubr.f32.mxu0 0.0
  %415 = vmatmul.mubr.f32.gmra.mrb[0].mxu0 %v154
  %v416 = vpop.f32.mrb[0].mxu0
  %v417 = vadd.f32 %v81, %v416
  %v418 = vpop.f32.mrb[0].mxu0
  %419 = vmatprep.mubr.f32.mxu0 0.0
  %420 = vmatmul.mubr.f32.gmra.mrb[0].mxu0 %v157
  %v421 = vpop.f32.mrb[0].mxu0
  %v422 = vadd.f32 %v81, %v421
  %v423 = vpop.f32.mrb[0].mxu0
  %424 = vmatprep.mubr.f32.mxu0 0.0
  %425 = vmatmul.mubr.f32.gmra.mrb[0].mxu0 %v160
  %v426 = vpop.f32.mrb[0].mxu0
  %v427 = vadd.f32 %v81, %v426
  %v428 = vpop.f32.mrb[0].mxu0
  %429 = vmatprep.mubr.f32.mxu0 0.0
  %430 = vmatmul.mubr.f32.gmra.mrb[0].mxu0 %v163
  %v431 = vpop.f32.mrb[0].mxu0
  %v432 = vadd.f32 %v81, %v431
  %v433 = vpop.f32.mrb[0].mxu0
  %434 = vmatprep.mubr.f32.mxu0 0.0
  %435 = vmatmul.mubr.f32.gmra.mrb[0].mxu0 %v166
  %v436 = vpop.f32.mrb[0].mxu0
  %v437 = vadd.f32 %v81, %v436
  %v438 = vpop.f32.mrb[0].mxu0
  %439 = vmatprep.mubr.f32.mxu0 0.0
  %440 = vmatmul.mubr.f32.gmra.mrb[0].mxu0 %v169
  %v441 = vpop.f32.mrb[0].mxu0
  %v442 = vadd.f32 %v81, %v441
  %v443 = vpop.f32.mrb[0].mxu0
  %444 = vmatprep.mubr.f32.mxu0 0.0
  %445 = vmatmul.mubr.f32.gmra.mrb[0].mxu0 %v172
  %v446 = vpop.f32.mrb[0].mxu0
  %v447 = vadd.f32 %v81, %v446
  %v448 = vpop.f32.mrb[0].mxu0
  %449 = vmatprep.mubr.f32.mxu0 0.0
  %450 = vmatmul.mubr.f32.gmra.mrb[0].mxu0 %v175
  %v451 = vpop.f32.mrb[0].mxu0
  %v452 = vadd.f32 %v81, %v451
  %v453 = vpop.f32.mrb[0].mxu0
  %454 = vmatprep.mubr.f32.mxu0 0.0
  %455 = vmatmul.mubr.f32.gmra.mrb[0].mxu0 %v178
  %v456 = vpop.f32.mrb[0].mxu0
  %v457 = vadd.f32 %v81, %v456
  %v458 = vpop.f32.mrb[0].mxu0
  %459 = vmatprep.mubr.f32.mxu0 0.0
  %460 = vmatmul.mubr.f32.gmra.mrb[0].mxu0 %v181
  %v461 = vpop.f32.mrb[0].mxu0
  %v462 = vadd.f32 %v81, %v461
  %v463 = vpop.f32.mrb[0].mxu0
  %464 = vmatprep.mubr.f32.mxu0 0.0
  %465 = vmatmul.mubr.f32.gmra.mrb[0].mxu0 %v184
  %v466 = vpop.f32.mrb[0].mxu0
  %v467 = vadd.f32 %v81, %v466
  %v468 = vpop.f32.mrb[0].mxu0
  %469 = vmatprep.mubr.f32.mxu0 0.0
  %470 = vmatmul.mubr.f32.gmra.mrb[0].mxu0 %v187
  %v471 = vpop.f32.mrb[0].mxu0
  %v472 = vadd.f32 %v81, %v471
  %v473 = vpop.f32.mrb[0].mxu0
  %474 = vmatprep.mubr.f32.mxu0 0.0
  %475 = vmatmul.mubr.f32.gmra.mrb[0].mxu0 %v190
  %v476 = vpop.f32.mrb[0].mxu0
  %v477 = vadd.f32 %v81, %v476
  %v478 = vpop.f32.mrb[0].mxu0
  %479 = vmatprep.mubr.f32.mxu0 0.0
  %480 = vmatmul.mubr.f32.gmra.mrb[0].mxu0 %v193
  %v481 = vpop.f32.mrb[0].mxu0
  %v482 = vadd.f32 %v81, %v481
  %v483 = vpop.f32.mrb[0].mxu0
  %484 = vmatprep.mubr.f32.mxu0 0.0
  %485 = vmatmul.mubr.f32.gmra.mrb[0].mxu0 %v196
  %v486 = vpop.f32.mrb[0].mxu0
  %v487 = vadd.f32 %v81, %v486
  %v488 = vpop.f32.mrb[0].mxu0
  %489 = vmatprep.mubr.f32.mxu0 0.0
  %490 = vmatmul.mubr.f32.gmra.mrb[0].mxu0 %v199
  %v491 = vpop.f32.mrb[0].mxu0
  %v492 = vadd.f32 %v81, %v491
  %v493 = vpop.f32.mrb[0].mxu0
  %494 = vmatprep.mubr.f32.mxu0 0.0
  %495 = vmatmul.mubr.f32.gmra.mrb[0].mxu0 %v202
  %v496 = vpop.f32.mrb[0].mxu0
  %v497 = vadd.f32 %v81, %v496
  %v498 = vpop.f32.mrb[0].mxu0
  %499 = vmatprep.mubr.f32.mxu0 0.0
  %500 = vmatmul.mubr.f32.gmra.mrb[0].mxu0 %v205
  %v501 = vpop.f32.mrb[0].mxu0
  %v502 = vadd.f32 %v81, %v501
  %v503 = vpop.f32.mrb[0].mxu0
  %504 = vmatprep.mubr.f32.mxu0 0.0
  %505 = vmatmul.mubr.f32.gmra.mrb[0].mxu0 %v208
  %v506 = vpop.f32.mrb[0].mxu0
  %v507 = vadd.f32 %v81, %v506
  %v508 = vpop.f32.mrb[0].mxu0
  %509 = vmatprep.mubr.f32.mxu0 0.0
  %510 = vmatmul.mubr.f32.gmra.mrb[0].mxu0 %v211
  %v511 = vpop.f32.mrb[0].mxu0
  %v512 = vadd.f32 %v81, %v511
  %v513 = vpop.f32.mrb[0].mxu0
  %514 = vmatprep.mubr.f32.mxu0 0.0
  %515 = vmatmul.mubr.f32.gmra.mrb[0].mxu0 %v214
  %v516 = vpop.f32.mrb[0].mxu0
  %v517 = vadd.f32 %v81, %v516
  %v518 = vpop.f32.mrb[0].mxu0
  %519 = vmatprep.mubr.f32.mxu0 0.0
  %520 = vmatmul.mubr.f32.gmra.mrb[0].mxu0 %v217
  %v521 = vpop.f32.mrb[0].mxu0
  %v522 = vadd.f32 %v81, %v521
  %v523 = vpop.f32.mrb[0].mxu0
  %524 = vmatprep.mubr.f32.mxu0 0.0
  %525 = vmatmul.mubr.f32.gmra.mrb[0].mxu0 %v220
  %v526 = vpop.f32.mrb[0].mxu0
  %v527 = vadd.f32 %v81, %v526
  %v528 = vpop.f32.mrb[0].mxu0
  %529 = vmatprep.mubr.f32.mxu0 0.0
  %530 = vmatmul.mubr.f32.gmra.mrb[0].mxu0 %v223
  %v531 = vpop.f32.mrb[0].mxu0
  %v532 = vadd.f32 %v81, %v531
  %v533 = vpop.f32.mrb[0].mxu0
  %534 = vmatprep.mubr.f32.mxu0 0.0
  %535 = vmatmul.mubr.f32.gmra.mrb[0].mxu0 %v226
  %v536 = vpop.f32.mrb[0].mxu0
  %v537 = vadd.f32 %v81, %v536
  %v538 = vpop.f32.mrb[0].mxu0
  %539 = vmatprep.mubr.f32.mxu0 0.0
  %540 = vmatmul.mubr.f32.gmra.mrb[0].mxu0 %v229
  %v541 = vpop.f32.mrb[0].mxu0
  %v542 = vadd.f32 %v81, %v541
  %v543 = vpop.f32.mrb[0].mxu0
  %544 = vdwg.mxu0
  %v545 = vmax.f32 %v302, 0.0
  %v546 = vmax.f32 %v307, 0.0
  %v547 = vmax.f32 %v312, 0.0
  %v548 = vmax.f32 %v317, 0.0
  %v549 = vmax.f32 %v322, 0.0
  %v550 = vmax.f32 %v327, 0.0
  %v551 = vmax.f32 %v332, 0.0
  %v552 = vmax.f32 %v337, 0.0
  %v553 = vmax.f32 %v342, 0.0
  %v554 = vmax.f32 %v347, 0.0
  %v555 = vmax.f32 %v352, 0.0
  %v556 = vmax.f32 %v357, 0.0
  %v557 = vmax.f32 %v362, 0.0
  %v558 = vmax.f32 %v367, 0.0
  %v559 = vmax.f32 %v372, 0.0
  %v560 = vmax.f32 %v377, 0.0
  %v561 = vmax.f32 %v382, 0.0
  %v562 = vmax.f32 %v387, 0.0
  %v563 = vmax.f32 %v392, 0.0
  %v564 = vmax.f32 %v397, 0.0
  %v565 = vmax.f32 %v402, 0.0
  %v566 = vmax.f32 %v407, 0.0
  %v567 = vmax.f32 %v412, 0.0
  %v568 = vmax.f32 %v417, 0.0
  %v569 = vmax.f32 %v422, 0.0
  %v570 = vmax.f32 %v427, 0.0
  %v571 = vmax.f32 %v432, 0.0
  %v572 = vmax.f32 %v437, 0.0
  %v573 = vmax.f32 %v442, 0.0
  %v574 = vmax.f32 %v447, 0.0
  %v575 = vmax.f32 %v452, 0.0
  %v576 = vmax.f32 %v457, 0.0
  %v577 = vmax.f32 %v462, 0.0
  %v578 = vmax.f32 %v467, 0.0
  %v579 = vmax.f32 %v472, 0.0
  %v580 = vmax.f32 %v477, 0.0
  %v581 = vmax.f32 %v482, 0.0
  %v582 = vmax.f32 %v487, 0.0
  %v583 = vmax.f32 %v492, 0.0
  %v584 = vmax.f32 %v497, 0.0
  %v585 = vmax.f32 %v502, 0.0
  %v586 = vmax.f32 %v507, 0.0
  %v587 = vmax.f32 %v512, 0.0
  %v588 = vmax.f32 %v517, 0.0
  %v589 = vmax.f32 %v522, 0.0
  %v590 = vmax.f32 %v527, 0.0
  %v591 = vmax.f32 %v532, 0.0
  %v592 = vmax.f32 %v537, 0.0
  %v593 = vmax.f32 %v542, 0.0
  %s594 = scalar_lea.vmem %s0, 392
  %v595 = vld [vmem:[%s594] sm:$0xff]
  %v596 = vld [vmem:[%s594 + $0x8] sm:$0xff]
  %v597 = vld [vmem:[%s594 + $0x10] sm:$0xff]
  %v598 = vld [vmem:[%s594 + $0x18] sm:$0xff]
  %v599 = vld [vmem:[%s594 + $0x20] sm:$0xff]
  %v600 = vld [vmem:[%s594 + $0x28] sm:$0xff]
  %v601 = vld [vmem:[%s594 + $0x30] sm:$0xff]
  %v602 = vld [vmem:[%s594 + $0x38] sm:$0xff]
  %v603 = vld [vmem:[%s594 + $0x40] sm:$0xff]
  %v604 = vld [vmem:[%s594 + $0x48] sm:$0xff]
  %v605 = vld [vmem:[%s594 + $0x50] sm:$0xff]
  %v606 = vld [vmem:[%s594 + $0x58] sm:$0xff]
  %v607 = vld [vmem:[%s594 + $0x60] sm:$0xff]
  %v608 = vld [vmem:[%s594 + $0x68] sm:$0xff]
  %v609 = vld [vmem:[%s594 + $0x70] sm:$0xff]
  %v610 = vld [vmem:[%s594 + $0x78] sm:$0xff]
  %v611 = vld [vmem:[%s594 + $0x80] sm:$0xff]
  %v612 = vld [vmem:[%s594 + $0x88] sm:$0xff]
  %v613 = vld [vmem:[%s594 + $0x90] sm:$0xff]
  %v614 = vld [vmem:[%s594 + $0x98] sm:$0xff]
  %v615 = vld [vmem:[%s594 + $0xa0] sm:$0xff]
  %v616 = vld [vmem:[%s594 + $0xa8] sm:$0xff]
  %v617 = vld [vmem:[%s594 + $0xb0] sm:$0xff]
  %v618 = vld [vmem:[%s594 + $0xb8] sm:$0xff]
  %v619 = vld [vmem:[%s594 + $0xc0] sm:$0xff]
  %v620 = vld [vmem:[%s594 + $0xc8] sm:$0xff]
  %v621 = vld [vmem:[%s594 + $0xd0] sm:$0xff]
  %v622 = vld [vmem:[%s594 + $0xd8] sm:$0xff]
  %v623 = vld [vmem:[%s594 + $0xe0] sm:$0xff]
  %v624 = vld [vmem:[%s594 + $0xe8] sm:$0xff]
  %v625 = vld [vmem:[%s594 + $0xf0] sm:$0xff]
  %v626 = vld [vmem:[%s594 + $0xf8] sm:$0xff]
  %v627 = vld [vmem:[%s594 + $0x100] sm:$0xff]
  %v628 = vld [vmem:[%s594 + $0x108] sm:$0xff]
  %v629 = vld [vmem:[%s594 + $0x110] sm:$0xff]
  %v630 = vld [vmem:[%s594 + $0x118] sm:$0xff]
  %v631 = vld [vmem:[%s594 + $0x120] sm:$0xff]
  %v632 = vld [vmem:[%s594 + $0x128] sm:$0xff]
  %v633 = vld [vmem:[%s594 + $0x130] sm:$0xff]
  %v634 = vld [vmem:[%s594 + $0x138] sm:$0xff]
  %v635 = vld [vmem:[%s594 + $0x140] sm:$0xff]
  %v636 = vld [vmem:[%s594 + $0x148] sm:$0xff]
  %v637 = vld [vmem:[%s594 + $0x150] sm:$0xff]
  %v638 = vld [vmem:[%s594 + $0x158] sm:$0xff]
  %v639 = vld [vmem:[%s594 + $0x160] sm:$0xff]
  %v640 = vld [vmem:[%s594 + $0x168] sm:$0xff]
  %v641 = vld [vmem:[%s594 + $0x170] sm:$0xff]
  %v642 = vld [vmem:[%s594 + $0x178] sm:$0xff]
  %v643 = vld [vmem:[%s594 + $0x180] sm:$0xff]
  %v645 = vsel %vm83, %v595, 0
  %v648 = vsel %vm83, %v596, 0
  %v651 = vsel %vm83, %v597, 0
  %v654 = vsel %vm83, %v598, 0
  %v657 = vsel %vm83, %v599, 0
  %v660 = vsel %vm83, %v600, 0
  %v663 = vsel %vm83, %v601, 0
  %v666 = vsel %vm83, %v602, 0
  %v669 = vsel %vm83, %v603, 0
  %v672 = vsel %vm83, %v604, 0
  %v675 = vsel %vm83, %v605, 0
  %v678 = vsel %vm83, %v606, 0
  %v681 = vsel %vm83, %v607, 0
  %v684 = vsel %vm83, %v608, 0
  %v687 = vsel %vm83, %v609, 0
  %v690 = vsel %vm83, %v610, 0
  %v693 = vsel %vm83, %v611, 0
  %v696 = vsel %vm83, %v612, 0
  %v699 = vsel %vm83, %v613, 0
  %v702 = vsel %vm83, %v614, 0
  %v705 = vsel %vm83, %v615, 0
  %v708 = vsel %vm83, %v616, 0
  %v711 = vsel %vm83, %v617, 0
  %v714 = vsel %vm83, %v618, 0
  %v717 = vsel %vm83, %v619, 0
  %v720 = vsel %vm83, %v620, 0
  %v723 = vsel %vm83, %v621, 0
  %v726 = vsel %vm83, %v622, 0
  %v729 = vsel %vm83, %v623, 0
  %v732 = vsel %vm83, %v624, 0
  %v735 = vsel %vm83, %v625, 0
  %v738 = vsel %vm83, %v626, 0
  %v741 = vsel %vm83, %v627, 0
  %v744 = vsel %vm83, %v628, 0
  %v747 = vsel %vm83, %v629, 0
  %v750 = vsel %vm83, %v630, 0
  %v753 = vsel %vm83, %v631, 0
  %v756 = vsel %vm83, %v632, 0
  %v759 = vsel %vm83, %v633, 0
  %v762 = vsel %vm83, %v634, 0
  %v765 = vsel %vm83, %v635, 0
  %v768 = vsel %vm83, %v636, 0
  %v771 = vsel %vm83, %v637, 0
  %v774 = vsel %vm83, %v638, 0
  %v777 = vsel %vm83, %v639, 0
  %v780 = vsel %vm83, %v640, 0
  %v783 = vsel %vm83, %v641, 0
  %v786 = vsel %vm83, %v642, 0
  %v789 = vsel %vm83, %v643, 0
  %791 = vmatprep.subr.mxu0 0.0
  %792 = vmatpush1.msra.mxu0 %v17
  %793 = vmatprep.subr.mxu0 0.0
  %794 = vmatpush1.msra.mxu0 %v18
  %795 = vmatprep.subr.mxu0 0.0
  %796 = vmatpush1.msra.mxu0 %v19
  %797 = vmatprep.subr.mxu0 0.0
  %798 = vmatpush1.msra.mxu0 %v20
  %799 = vmatprep.subr.mxu0 0.0
  %800 = vmatpush1.msra.mxu0 %v21
  %801 = vmatprep.subr.mxu0 0.0
  %802 = vmatpush1.msra.mxu0 %v22
  %803 = vmatprep.subr.mxu0 0.0
  %804 = vmatpush1.msra.mxu0 %v23
  %805 = vmatprep.subr.mxu0 0.0
  %806 = vmatpush1.msra.mxu0 %v24
  %807 = vmatprep.subr.mxu0 0.0
  %808 = vmatpush1.msra.mxu0 %v25
  %809 = vmatprep.subr.mxu0 0.0
  %810 = vmatpush1.msra.mxu0 %v233
  %811 = vmatprep.subr.mxu0 0.0
  %812 = vmatpush1.msra.mxu0 0.0
  %813 = vmatprep.subr.mxu0 0.0
  %814 = vmatpush1.msra.mxu0 0.0
  %815 = vmatprep.subr.mxu0 0.0
  %816 = vmatpush1.msra.mxu0 0.0
  %817 = vmatprep.subr.mxu0 0.0
  %818 = vmatpush1.msra.mxu0 0.0
  %819 = vmatprep.subr.mxu0 0.0
  %820 = vmatpush1.msra.mxu0 0.0
  %821 = vmatprep.subr.mxu0 0.0
  %822 = vmatpush1.msra.mxu0 0.0
  %823 = vmatprep.subr.mxu0 0.0
  %824 = vmatpush1.msra.mxu0 0.0
  %825 = vmatprep.subr.mxu0 0.0
  %826 = vmatpush1.msra.mxu0 0.0
  %827 = vmatprep.subr.mxu0 0.0
  %828 = vmatpush1.msra.mxu0 0.0
  %829 = vmatprep.subr.mxu0 0.0
  %830 = vmatpush1.msra.mxu0 0.0
  %831 = vmatprep.subr.mxu0 0.0
  %832 = vmatpush1.msra.mxu0 0.0
  %833 = vmatprep.subr.mxu0 0.0
  %834 = vmatpush1.msra.mxu0 0.0
  %835 = vmatprep.subr.mxu0 0.0
  %836 = vmatpush1.msra.mxu0 0.0
  %837 = vmatprep.subr.mxu0 0.0
  %838 = vmatpush1.msra.mxu0 0.0
  %839 = vmatprep.subr.mxu0 0.0
  %840 = vmatpush1.msra.mxu0 0.0
  %841 = vmatprep.subr.mxu0 0.0
  %842 = vmatpush1.msra.mxu0 0.0
  %843 = vmatprep.subr.mxu0 0.0
  %844 = vmatpush1.msra.mxu0 0.0
  %845 = vmatprep.subr.mxu0 0.0
  %846 = vmatpush1.msra.mxu0 0.0
  %847 = vmatprep.subr.mxu0 0.0
  %848 = vmatpush1.msra.mxu0 0.0
  %849 = vmatprep.subr.mxu0 0.0
  %850 = vmatpush1.msra.mxu0 0.0
  %851 = vmatprep.subr.mxu0 0.0
  %852 = vmatpush1.msra.mxu0 0.0
  %853 = vmatprep.subr.mxu0 0.0
  %854 = vmatpush1.msra.mxu0 0.0
  %855 = vmatprep.mubr.f32.mxu0 0.0
  %856 = vmatmul.mubr.f32.gmra.mrb[0].mxu0 %v645
  %v857 = vpop.f32.mrb[0].mxu0
  %v858 = vadd.f32 %v81, %v857
  %v859 = vpop.f32.mrb[0].mxu0
  %860 = vmatprep.mubr.f32.mxu0 0.0
  %861 = vmatmul.mubr.f32.gmra.mrb[0].mxu0 %v648
  %v862 = vpop.f32.mrb[0].mxu0
  %v863 = vadd.f32 %v81, %v862
  %v864 = vpop.f32.mrb[0].mxu0
  %865 = vmatprep.mubr.f32.mxu0 0.0
  %866 = vmatmul.mubr.f32.gmra.mrb[0].mxu0 %v651
  %v867 = vpop.f32.mrb[0].mxu0
  %v868 = vadd.f32 %v81, %v867
  %v869 = vpop.f32.mrb[0].mxu0
  %870 = vmatprep.mubr.f32.mxu0 0.0
  %871 = vmatmul.mubr.f32.gmra.mrb[0].mxu0 %v654
  %v872 = vpop.f32.mrb[0].mxu0
  %v873 = vadd.f32 %v81, %v872
  %v874 = vpop.f32.mrb[0].mxu0
  %875 = vmatprep.mubr.f32.mxu0 0.0
  %876 = vmatmul.mubr.f32.gmra.mrb[0].mxu0 %v657
  %v877 = vpop.f32.mrb[0].mxu0
  %v878 = vadd.f32 %v81, %v877
  %v879 = vpop.f32.mrb[0].mxu0
  %880 = vmatprep.mubr.f32.mxu0 0.0
  %881 = vmatmul.mubr.f32.gmra.mrb[0].mxu0 %v660
  %v882 = vpop.f32.mrb[0].mxu0
  %v883 = vadd.f32 %v81, %v882
  %v884 = vpop.f32.mrb[0].mxu0
  %885 = vmatprep.mubr.f32.mxu0 0.0
  %886 = vmatmul.mubr.f32.gmra.mrb[0].mxu0 %v663
  %v887 = vpop.f32.mrb[0].mxu0
  %v888 = vadd.f32 %v81, %v887
  %v889 = vpop.f32.mrb[0].mxu0
  %890 = vmatprep.mubr.f32.mxu0 0.0
  %891 = vmatmul.mubr.f32.gmra.mrb[0].mxu0 %v666
  %v892 = vpop.f32.mrb[0].mxu0
  %v893 = vadd.f32 %v81, %v892
  %v894 = vpop.f32.mrb[0].mxu0
  %895 = vmatprep.mubr.f32.mxu0 0.0
  %896 = vmatmul.mubr.f32.gmra.mrb[0].mxu0 %v669
  %v897 = vpop.f32.mrb[0].mxu0
  %v898 = vadd.f32 %v81, %v897
  %v899 = vpop.f32.mrb[0].mxu0
  %900 = vmatprep.mubr.f32.mxu0 0.0
  %901 = vmatmul.mubr.f32.gmra.mrb[0].mxu0 %v672
  %v902 = vpop.f32.mrb[0].mxu0
  %v903 = vadd.f32 %v81, %v902
  %v904 = vpop.f32.mrb[0].mxu0
  %905 = vmatprep.mubr.f32.mxu0 0.0
  %906 = vmatmul.mubr.f32.gmra.mrb[0].mxu0 %v675
  %v907 = vpop.f32.mrb[0].mxu0
  %v908 = vadd.f32 %v81, %v907
  %v909 = vpop.f32.mrb[0].mxu0
  %910 = vmatprep.mubr.f32.mxu0 0.0
  %911 = vmatmul.mubr.f32.gmra.mrb[0].mxu0 %v678
  %v912 = vpop.f32.mrb[0].mxu0
  %v913 = vadd.f32 %v81, %v912
  %v914 = vpop.f32.mrb[0].mxu0
  %915 = vmatprep.mubr.f32.mxu0 0.0
  %916 = vmatmul.mubr.f32.gmra.mrb[0].mxu0 %v681
  %v917 = vpop.f32.mrb[0].mxu0
  %v918 = vadd.f32 %v81, %v917
  %v919 = vpop.f32.mrb[0].mxu0
  %920 = vmatprep.mubr.f32.mxu0 0.0
  %921 = vmatmul.mubr.f32.gmra.mrb[0].mxu0 %v684
  %v922 = vpop.f32.mrb[0].mxu0
  %v923 = vadd.f32 %v81, %v922
  %v924 = vpop.f32.mrb[0].mxu0
  %925 = vmatprep.mubr.f32.mxu0 0.0
  %926 = vmatmul.mubr.f32.gmra.mrb[0].mxu0 %v687
  %v927 = vpop.f32.mrb[0].mxu0
  %v928 = vadd.f32 %v81, %v927
  %v929 = vpop.f32.mrb[0].mxu0
  %930 = vmatprep.mubr.f32.mxu0 0.0
  %931 = vmatmul.mubr.f32.gmra.mrb[0].mxu0 %v690
  %v932 = vpop.f32.mrb[0].mxu0
  %v933 = vadd.f32 %v81, %v932
  %v934 = vpop.f32.mrb[0].mxu0
  %935 = vmatprep.mubr.f32.mxu0 0.0
  %936 = vmatmul.mubr.f32.gmra.mrb[0].mxu0 %v693
  %v937 = vpop.f32.mrb[0].mxu0
  %v938 = vadd.f32 %v81, %v937
  %v939 = vpop.f32.mrb[0].mxu0
  %940 = vmatprep.mubr.f32.mxu0 0.0
  %941 = vmatmul.mubr.f32.gmra.mrb[0].mxu0 %v696
  %v942 = vpop.f32.mrb[0].mxu0
  %v943 = vadd.f32 %v81, %v942
  %v944 = vpop.f32.mrb[0].mxu0
  %945 = vmatprep.mubr.f32.mxu0 0.0
  %946 = vmatmul.mubr.f32.gmra.mrb[0].mxu0 %v699
  %v947 = vpop.f32.mrb[0].mxu0
  %v948 = vadd.f32 %v81, %v947
  %v949 = vpop.f32.mrb[0].mxu0
  %950 = vmatprep.mubr.f32.mxu0 0.0
  %951 = vmatmul.mubr.f32.gmra.mrb[0].mxu0 %v702
  %v952 = vpop.f32.mrb[0].mxu0
  %v953 = vadd.f32 %v81, %v952
  %v954 = vpop.f32.mrb[0].mxu0
  %955 = vmatprep.mubr.f32.mxu0 0.0
  %956 = vmatmul.mubr.f32.gmra.mrb[0].mxu0 %v705
  %v957 = vpop.f32.mrb[0].mxu0
  %v958 = vadd.f32 %v81, %v957
  %v959 = vpop.f32.mrb[0].mxu0
  %960 = vmatprep.mubr.f32.mxu0 0.0
  %961 = vmatmul.mubr.f32.gmra.mrb[0].mxu0 %v708
  %v962 = vpop.f32.mrb[0].mxu0
  %v963 = vadd.f32 %v81, %v962
  %v964 = vpop.f32.mrb[0].mxu0
  %965 = vmatprep.mubr.f32.mxu0 0.0
  %966 = vmatmul.mubr.f32.gmra.mrb[0].mxu0 %v711
  %v967 = vpop.f32.mrb[0].mxu0
  %v968 = vadd.f32 %v81, %v967
  %v969 = vpop.f32.mrb[0].mxu0
  %970 = vmatprep.mubr.f32.mxu0 0.0
  %971 = vmatmul.mubr.f32.gmra.mrb[0].mxu0 %v714
  %v972 = vpop.f32.mrb[0].mxu0
  %v973 = vadd.f32 %v81, %v972
  %v974 = vpop.f32.mrb[0].mxu0
  %975 = vmatprep.mubr.f32.mxu0 0.0
  %976 = vmatmul.mubr.f32.gmra.mrb[0].mxu0 %v717
  %v977 = vpop.f32.mrb[0].mxu0
  %v978 = vadd.f32 %v81, %v977
  %v979 = vpop.f32.mrb[0].mxu0
  %980 = vmatprep.mubr.f32.mxu0 0.0
  %981 = vmatmul.mubr.f32.gmra.mrb[0].mxu0 %v720
  %v982 = vpop.f32.mrb[0].mxu0
  %v983 = vadd.f32 %v81, %v982
  %v984 = vpop.f32.mrb[0].mxu0
  %985 = vmatprep.mubr.f32.mxu0 0.0
  %986 = vmatmul.mubr.f32.gmra.mrb[0].mxu0 %v723
  %v987 = vpop.f32.mrb[0].mxu0
  %v988 = vadd.f32 %v81, %v987
  %v989 = vpop.f32.mrb[0].mxu0
  %990 = vmatprep.mubr.f32.mxu0 0.0
  %991 = vmatmul.mubr.f32.gmra.mrb[0].mxu0 %v726
  %v992 = vpop.f32.mrb[0].mxu0
  %v993 = vadd.f32 %v81, %v992
  %v994 = vpop.f32.mrb[0].mxu0
  %995 = vmatprep.mubr.f32.mxu0 0.0
  %996 = vmatmul.mubr.f32.gmra.mrb[0].mxu0 %v729
  %v997 = vpop.f32.mrb[0].mxu0
  %v998 = vadd.f32 %v81, %v997
  %v999 = vpop.f32.mrb[0].mxu0
  %1000 = vmatprep.mubr.f32.mxu0 0.0
  %1001 = vmatmul.mubr.f32.gmra.mrb[0].mxu0 %v732
  %v1002 = vpop.f32.mrb[0].mxu0
  %v1003 = vadd.f32 %v81, %v1002
  %v1004 = vpop.f32.mrb[0].mxu0
  %1005 = vmatprep.mubr.f32.mxu0 0.0
  %1006 = vmatmul.mubr.f32.gmra.mrb[0].mxu0 %v735
  %v1007 = vpop.f32.mrb[0].mxu0
  %v1008 = vadd.f32 %v81, %v1007
  %v1009 = vpop.f32.mrb[0].mxu0
  %1010 = vmatprep.mubr.f32.mxu0 0.0
  %1011 = vmatmul.mubr.f32.gmra.mrb[0].mxu0 %v738
  %v1012 = vpop.f32.mrb[0].mxu0
  %v1013 = vadd.f32 %v81, %v1012
  %v1014 = vpop.f32.mrb[0].mxu0
  %1015 = vmatprep.mubr.f32.mxu0 0.0
  %1016 = vmatmul.mubr.f32.gmra.mrb[0].mxu0 %v741
  %v1017 = vpop.f32.mrb[0].mxu0
  %v1018 = vadd.f32 %v81, %v1017
  %v1019 = vpop.f32.mrb[0].mxu0
  %1020 = vmatprep.mubr.f32.mxu0 0.0
  %1021 = vmatmul.mubr.f32.gmra.mrb[0].mxu0 %v744
  %v1022 = vpop.f32.mrb[0].mxu0
  %v1023 = vadd.f32 %v81, %v1022
  %v1024 = vpop.f32.mrb[0].mxu0
  %1025 = vmatprep.mubr.f32.mxu0 0.0
  %1026 = vmatmul.mubr.f32.gmra.mrb[0].mxu0 %v747
  %v1027 = vpop.f32.mrb[0].mxu0
  %v1028 = vadd.f32 %v81, %v1027
  %v1029 = vpop.f32.mrb[0].mxu0
  %1030 = vmatprep.mubr.f32.mxu0 0.0
  %1031 = vmatmul.mubr.f32.gmra.mrb[0].mxu0 %v750
  %v1032 = vpop.f32.mrb[0].mxu0
  %v1033 = vadd.f32 %v81, %v1032
  %v1034 = vpop.f32.mrb[0].mxu0
  %1035 = vmatprep.mubr.f32.mxu0 0.0
  %1036 = vmatmul.mubr.f32.gmra.mrb[0].mxu0 %v753
  %v1037 = vpop.f32.mrb[0].mxu0
  %v1038 = vadd.f32 %v81, %v1037
  %v1039 = vpop.f32.mrb[0].mxu0
  %1040 = vmatprep.mubr.f32.mxu0 0.0
  %1041 = vmatmul.mubr.f32.gmra.mrb[0].mxu0 %v756
  %v1042 = vpop.f32.mrb[0].mxu0
  %v1043 = vadd.f32 %v81, %v1042
  %v1044 = vpop.f32.mrb[0].mxu0
  %1045 = vmatprep.mubr.f32.mxu0 0.0
  %1046 = vmatmul.mubr.f32.gmra.mrb[0].mxu0 %v759
  %v1047 = vpop.f32.mrb[0].mxu0
  %v1048 = vadd.f32 %v81, %v1047
  %v1049 = vpop.f32.mrb[0].mxu0
  %1050 = vmatprep.mubr.f32.mxu0 0.0
  %1051 = vmatmul.mubr.f32.gmra.mrb[0].mxu0 %v762
  %v1052 = vpop.f32.mrb[0].mxu0
  %v1053 = vadd.f32 %v81, %v1052
  %v1054 = vpop.f32.mrb[0].mxu0
  %1055 = vmatprep.mubr.f32.mxu0 0.0
  %1056 = vmatmul.mubr.f32.gmra.mrb[0].mxu0 %v765
  %v1057 = vpop.f32.mrb[0].mxu0
  %v1058 = vadd.f32 %v81, %v1057
  %v1059 = vpop.f32.mrb[0].mxu0
  %1060 = vmatprep.mubr.f32.mxu0 0.0
  %1061 = vmatmul.mubr.f32.gmra.mrb[0].mxu0 %v768
  %v1062 = vpop.f32.mrb[0].mxu0
  %v1063 = vadd.f32 %v81, %v1062
  %v1064 = vpop.f32.mrb[0].mxu0
  %1065 = vmatprep.mubr.f32.mxu0 0.0
  %1066 = vmatmul.mubr.f32.gmra.mrb[0].mxu0 %v771
  %v1067 = vpop.f32.mrb[0].mxu0
  %v1068 = vadd.f32 %v81, %v1067
  %v1069 = vpop.f32.mrb[0].mxu0
  %1070 = vmatprep.mubr.f32.mxu0 0.0
  %1071 = vmatmul.mubr.f32.gmra.mrb[0].mxu0 %v774
  %v1072 = vpop.f32.mrb[0].mxu0
  %v1073 = vadd.f32 %v81, %v1072
  %v1074 = vpop.f32.mrb[0].mxu0
  %1075 = vmatprep.mubr.f32.mxu0 0.0
  %1076 = vmatmul.mubr.f32.gmra.mrb[0].mxu0 %v777
  %v1077 = vpop.f32.mrb[0].mxu0
  %v1078 = vadd.f32 %v81, %v1077
  %v1079 = vpop.f32.mrb[0].mxu0
  %1080 = vmatprep.mubr.f32.mxu0 0.0
  %1081 = vmatmul.mubr.f32.gmra.mrb[0].mxu0 %v780
  %v1082 = vpop.f32.mrb[0].mxu0
  %v1083 = vadd.f32 %v81, %v1082
  %v1084 = vpop.f32.mrb[0].mxu0
  %1085 = vmatprep.mubr.f32.mxu0 0.0
  %1086 = vmatmul.mubr.f32.gmra.mrb[0].mxu0 %v783
  %v1087 = vpop.f32.mrb[0].mxu0
  %v1088 = vadd.f32 %v81, %v1087
  %v1089 = vpop.f32.mrb[0].mxu0
  %1090 = vmatprep.mubr.f32.mxu0 0.0
  %1091 = vmatmul.mubr.f32.gmra.mrb[0].mxu0 %v786
  %v1092 = vpop.f32.mrb[0].mxu0
  %v1093 = vadd.f32 %v81, %v1092
  %v1094 = vpop.f32.mrb[0].mxu0
  %1095 = vmatprep.mubr.f32.mxu0 0.0
  %1096 = vmatmul.mubr.f32.gmra.mrb[0].mxu0 %v789
  %v1097 = vpop.f32.mrb[0].mxu0
  %v1098 = vadd.f32 %v81, %v1097
  %v1099 = vpop.f32.mrb[0].mxu0
  %1100 = vdwg.mxu0
  %v1101 = vmax.f32 %v858, 0.0
  %v1102 = vmax.f32 %v863, 0.0
  %v1103 = vmax.f32 %v868, 0.0
  %v1104 = vmax.f32 %v873, 0.0
  %v1105 = vmax.f32 %v878, 0.0
  %v1106 = vmax.f32 %v883, 0.0
  %v1107 = vmax.f32 %v888, 0.0
  %v1108 = vmax.f32 %v893, 0.0
  %v1109 = vmax.f32 %v898, 0.0
  %v1110 = vmax.f32 %v903, 0.0
  %v1111 = vmax.f32 %v908, 0.0
  %v1112 = vmax.f32 %v913, 0.0
  %v1113 = vmax.f32 %v918, 0.0
  %v1114 = vmax.f32 %v923, 0.0
  %v1115 = vmax.f32 %v928, 0.0
  %v1116 = vmax.f32 %v933, 0.0
  %v1117 = vmax.f32 %v938, 0.0
  %v1118 = vmax.f32 %v943, 0.0
  %v1119 = vmax.f32 %v948, 0.0
  %v1120 = vmax.f32 %v953, 0.0
  %v1121 = vmax.f32 %v958, 0.0
  %v1122 = vmax.f32 %v963, 0.0
  %v1123 = vmax.f32 %v968, 0.0
  %v1124 = vmax.f32 %v973, 0.0
  %v1125 = vmax.f32 %v978, 0.0
  %v1126 = vmax.f32 %v983, 0.0
  %v1127 = vmax.f32 %v988, 0.0
  %v1128 = vmax.f32 %v993, 0.0
  %v1129 = vmax.f32 %v998, 0.0
  %v1130 = vmax.f32 %v1003, 0.0
  %v1131 = vmax.f32 %v1008, 0.0
  %v1132 = vmax.f32 %v1013, 0.0
  %v1133 = vmax.f32 %v1018, 0.0
  %v1134 = vmax.f32 %v1023, 0.0
  %v1135 = vmax.f32 %v1028, 0.0
  %v1136 = vmax.f32 %v1033, 0.0
  %v1137 = vmax.f32 %v1038, 0.0
  %v1138 = vmax.f32 %v1043, 0.0
  %v1139 = vmax.f32 %v1048, 0.0
  %v1140 = vmax.f32 %v1053, 0.0
  %v1141 = vmax.f32 %v1058, 0.0
  %v1142 = vmax.f32 %v1063, 0.0
  %v1143 = vmax.f32 %v1068, 0.0
  %v1144 = vmax.f32 %v1073, 0.0
  %v1145 = vmax.f32 %v1078, 0.0
  %v1146 = vmax.f32 %v1083, 0.0
  %v1147 = vmax.f32 %v1088, 0.0
  %v1148 = vmax.f32 %v1093, 0.0
  %v1149 = vmax.f32 %v1098, 0.0
  %v1150 = vmax.f32 %v545, %v1101
  %v1151 = vmax.f32 %v546, %v1102
  %v1152 = vmax.f32 %v547, %v1103
  %v1153 = vmax.f32 %v548, %v1104
  %v1154 = vmax.f32 %v549, %v1105
  %v1155 = vmax.f32 %v550, %v1106
  %v1156 = vmax.f32 %v551, %v1107
  %v1157 = vmax.f32 %v552, %v1108
  %v1158 = vmax.f32 %v553, %v1109
  %v1159 = vmax.f32 %v554, %v1110
  %v1160 = vmax.f32 %v555, %v1111
  %v1161 = vmax.f32 %v556, %v1112
  %v1162 = vmax.f32 %v557, %v1113
  %v1163 = vmax.f32 %v558, %v1114
  %v1164 = vmax.f32 %v559, %v1115
  %v1165 = vmax.f32 %v560, %v1116
  %v1166 = vmax.f32 %v561, %v1117
  %v1167 = vmax.f32 %v562, %v1118
  %v1168 = vmax.f32 %v563, %v1119
  %v1169 = vmax.f32 %v564, %v1120
  %v1170 = vmax.f32 %v565, %v1121
  %v1171 = vmax.f32 %v566, %v1122
  %v1172 = vmax.f32 %v567, %v1123
  %v1173 = vmax.f32 %v568, %v1124
  %v1174 = vmax.f32 %v569, %v1125
  %v1175 = vmax.f32 %v570, %v1126
  %v1176 = vmax.f32 %v571, %v1127
  %v1177 = vmax.f32 %v572, %v1128
  %v1178 = vmax.f32 %v573, %v1129
  %v1179 = vmax.f32 %v574, %v1130
  %v1180 = vmax.f32 %v575, %v1131
  %v1181 = vmax.f32 %v576, %v1132
  %v1182 = vmax.f32 %v577, %v1133
  %v1183 = vmax.f32 %v578, %v1134
  %v1184 = vmax.f32 %v579, %v1135
  %v1185 = vmax.f32 %v580, %v1136
  %v1186 = vmax.f32 %v581, %v1137
  %v1187 = vmax.f32 %v582, %v1138
  %v1188 = vmax.f32 %v583, %v1139
  %v1189 = vmax.f32 %v584, %v1140
  %v1190 = vmax.f32 %v585, %v1141
  %v1191 = vmax.f32 %v586, %v1142
  %v1192 = vmax.f32 %v587, %v1143
  %v1193 = vmax.f32 %v588, %v1144
  %v1194 = vmax.f32 %v589, %v1145
  %v1195 = vmax.f32 %v590, %v1146
  %v1196 = vmax.f32 %v591, %v1147
  %v1197 = vmax.f32 %v592, %v1148
  %v1198 = vmax.f32 %v593, %v1149
  %s1199 = scalar_lea.vmem %s0, 784
  %v1200 = vld [vmem:[%s1199] sm:$0xff]
  %v1201 = vld [vmem:[%s1199 + $0x8] sm:$0xff]
  %v1202 = vld [vmem:[%s1199 + $0x10] sm:$0xff]
  %v1203 = vld [vmem:[%s1199 + $0x18] sm:$0xff]
  %v1204 = vld [vmem:[%s1199 + $0x20] sm:$0xff]
  %v1205 = vld [vmem:[%s1199 + $0x28] sm:$0xff]
  %v1206 = vld [vmem:[%s1199 + $0x30] sm:$0xff]
  %v1207 = vld [vmem:[%s1199 + $0x38] sm:$0xff]
  %v1208 = vld [vmem:[%s1199 + $0x40] sm:$0xff]
  %v1209 = vld [vmem:[%s1199 + $0x48] sm:$0xff]
  %v1210 = vld [vmem:[%s1199 + $0x50] sm:$0xff]
  %v1211 = vld [vmem:[%s1199 + $0x58] sm:$0xff]
  %v1212 = vld [vmem:[%s1199 + $0x60] sm:$0xff]
  %v1213 = vld [vmem:[%s1199 + $0x68] sm:$0xff]
  %v1214 = vld [vmem:[%s1199 + $0x70] sm:$0xff]
  %v1215 = vld [vmem:[%s1199 + $0x78] sm:$0xff]
  %v1216 = vld [vmem:[%s1199 + $0x80] sm:$0xff]
  %v1217 = vld [vmem:[%s1199 + $0x88] sm:$0xff]
  %v1218 = vld [vmem:[%s1199 + $0x90] sm:$0xff]
  %v1219 = vld [vmem:[%s1199 + $0x98] sm:$0xff]
  %v1220 = vld [vmem:[%s1199 + $0xa0] sm:$0xff]
  %v1221 = vld [vmem:[%s1199 + $0xa8] sm:$0xff]
  %v1222 = vld [vmem:[%s1199 + $0xb0] sm:$0xff]
  %v1223 = vld [vmem:[%s1199 + $0xb8] sm:$0xff]
  %v1224 = vld [vmem:[%s1199 + $0xc0] sm:$0xff]
  %v1225 = vld [vmem:[%s1199 + $0xc8] sm:$0xff]
  %v1226 = vld [vmem:[%s1199 + $0xd0] sm:$0xff]
  %v1227 = vld [vmem:[%s1199 + $0xd8] sm:$0xff]
  %v1228 = vld [vmem:[%s1199 + $0xe0] sm:$0xff]
  %v1229 = vld [vmem:[%s1199 + $0xe8] sm:$0xff]
  %v1230 = vld [vmem:[%s1199 + $0xf0] sm:$0xff]
  %v1231 = vld [vmem:[%s1199 + $0xf8] sm:$0xff]
  %v1232 = vld [vmem:[%s1199 + $0x100] sm:$0xff]
  %v1233 = vld [vmem:[%s1199 + $0x108] sm:$0xff]
  %v1234 = vld [vmem:[%s1199 + $0x110] sm:$0xff]
  %v1235 = vld [vmem:[%s1199 + $0x118] sm:$0xff]
  %v1236 = vld [vmem:[%s1199 + $0x120] sm:$0xff]
  %v1237 = vld [vmem:[%s1199 + $0x128] sm:$0xff]
  %v1238 = vld [vmem:[%s1199 + $0x130] sm:$0xff]
  %v1239 = vld [vmem:[%s1199 + $0x138] sm:$0xff]
  %v1240 = vld [vmem:[%s1199 + $0x140] sm:$0xff]
  %v1241 = vld [vmem:[%s1199 + $0x148] sm:$0xff]
  %v1242 = vld [vmem:[%s1199 + $0x150] sm:$0xff]
  %v1243 = vld [vmem:[%s1199 + $0x158] sm:$0xff]
  %v1244 = vld [vmem:[%s1199 + $0x160] sm:$0xff]
  %v1245 = vld [vmem:[%s1199 + $0x168] sm:$0xff]
  %v1246 = vld [vmem:[%s1199 + $0x170] sm:$0xff]
  %v1247 = vld [vmem:[%s1199 + $0x178] sm:$0xff]
  %v1248 = vld [vmem:[%s1199 + $0x180] sm:$0xff]
  %v1250 = vsel %vm83, %v1200, 0
  %v1253 = vsel %vm83, %v1201, 0
  %v1256 = vsel %vm83, %v1202, 0
  %v1259 = vsel %vm83, %v1203, 0
  %v1262 = vsel %vm83, %v1204, 0
  %v1265 = vsel %vm83, %v1205, 0
  %v1268 = vsel %vm83, %v1206, 0
  %v1271 = vsel %vm83, %v1207, 0
  %v1274 = vsel %vm83, %v1208, 0
  %v1277 = vsel %vm83, %v1209, 0
  %v1280 = vsel %vm83, %v1210, 0
  %v1283 = vsel %vm83, %v1211, 0
  %v1286 = vsel %vm83, %v1212, 0
  %v1289 = vsel %vm83, %v1213, 0
  %v1292 = vsel %vm83, %v1214, 0
  %v1295 = vsel %vm83, %v1215, 0
  %v1298 = vsel %vm83, %v1216, 0
  %v1301 = vsel %vm83, %v1217, 0
  %v1304 = vsel %vm83, %v1218, 0
  %v1307 = vsel %vm83, %v1219, 0
  %v1310 = vsel %vm83, %v1220, 0
  %v1313 = vsel %vm83, %v1221, 0
  %v1316 = vsel %vm83, %v1222, 0
  %v1319 = vsel %vm83, %v1223, 0
  %v1322 = vsel %vm83, %v1224, 0
  %v1325 = vsel %vm83, %v1225, 0
  %v1328 = vsel %vm83, %v1226, 0
  %v1331 = vsel %vm83, %v1227, 0
  %v1334 = vsel %vm83, %v1228, 0
  %v1337 = vsel %vm83, %v1229, 0
  %v1340 = vsel %vm83, %v1230, 0
  %v1343 = vsel %vm83, %v1231, 0
  %v1346 = vsel %vm83, %v1232, 0
  %v1349 = vsel %vm83, %v1233, 0
  %v1352 = vsel %vm83, %v1234, 0
  %v1355 = vsel %vm83, %v1235, 0
  %v1358 = vsel %vm83, %v1236, 0
  %v1361 = vsel %vm83, %v1237, 0
  %v1364 = vsel %vm83, %v1238, 0
  %v1367 = vsel %vm83, %v1239, 0
  %v1370 = vsel %vm83, %v1240, 0
  %v1373 = vsel %vm83, %v1241, 0
  %v1376 = vsel %vm83, %v1242, 0
  %v1379 = vsel %vm83, %v1243, 0
  %v1382 = vsel %vm83, %v1244, 0
  %v1385 = vsel %vm83, %v1245, 0
  %v1388 = vsel %vm83, %v1246, 0
  %v1391 = vsel %vm83, %v1247, 0
  %v1394 = vsel %vm83, %v1248, 0
  %1396 = vmatprep.subr.mxu0 0.0
  %1397 = vmatpush1.msra.mxu0 %v17
  %1398 = vmatprep.subr.mxu0 0.0
  %1399 = vmatpush1.msra.mxu0 %v18
  %1400 = vmatprep.subr.mxu0 0.0
  %1401 = vmatpush1.msra.mxu0 %v19
  %1402 = vmatprep.subr.mxu0 0.0
  %1403 = vmatpush1.msra.mxu0 %v20
  %1404 = vmatprep.subr.mxu0 0.0
  %1405 = vmatpush1.msra.mxu0 %v21
  %1406 = vmatprep.subr.mxu0 0.0
  %1407 = vmatpush1.msra.mxu0 %v22
  %1408 = vmatprep.subr.mxu0 0.0
  %1409 = vmatpush1.msra.mxu0 %v23
  %1410 = vmatprep.subr.mxu0 0.0
  %1411 = vmatpush1.msra.mxu0 %v24
  %1412 = vmatprep.subr.mxu0 0.0
  %1413 = vmatpush1.msra.mxu0 %v25
  %1414 = vmatprep.subr.mxu0 0.0
  %1415 = vmatpush1.msra.mxu0 %v233
  %1416 = vmatprep.subr.mxu0 0.0
  %1417 = vmatpush1.msra.mxu0 0.0
  %1418 = vmatprep.subr.mxu0 0.0
  %1419 = vmatpush1.msra.mxu0 0.0
  %1420 = vmatprep.subr.mxu0 0.0
  %1421 = vmatpush1.msra.mxu0 0.0
  %1422 = vmatprep.subr.mxu0 0.0
  %1423 = vmatpush1.msra.mxu0 0.0
  %1424 = vmatprep.subr.mxu0 0.0
  %1425 = vmatpush1.msra.mxu0 0.0
  %1426 = vmatprep.subr.mxu0 0.0
  %1427 = vmatpush1.msra.mxu0 0.0
  %1428 = vmatprep.subr.mxu0 0.0
  %1429 = vmatpush1.msra.mxu0 0.0
  %1430 = vmatprep.subr.mxu0 0.0
  %1431 = vmatpush1.msra.mxu0 0.0
  %1432 = vmatprep.subr.mxu0 0.0
  %1433 = vmatpush1.msra.mxu0 0.0
  %1434 = vmatprep.subr.mxu0 0.0
  %1435 = vmatpush1.msra.mxu0 0.0
  %1436 = vmatprep.subr.mxu0 0.0
  %1437 = vmatpush1.msra.mxu0 0.0
  %1438 = vmatprep.subr.mxu0 0.0
  %1439 = vmatpush1.msra.mxu0 0.0
  %1440 = vmatprep.subr.mxu0 0.0
  %1441 = vmatpush1.msra.mxu0 0.0
  %1442 = vmatprep.subr.mxu0 0.0
  %1443 = vmatpush1.msra.mxu0 0.0
  %1444 = vmatprep.subr.mxu0 0.0
  %1445 = vmatpush1.msra.mxu0 0.0
  %1446 = vmatprep.subr.mxu0 0.0
  %1447 = vmatpush1.msra.mxu0 0.0
  %1448 = vmatprep.subr.mxu0 0.0
  %1449 = vmatpush1.msra.mxu0 0.0
  %1450 = vmatprep.subr.mxu0 0.0
  %1451 = vmatpush1.msra.mxu0 0.0
  %1452 = vmatprep.subr.mxu0 0.0
  %1453 = vmatpush1.msra.mxu0 0.0
  %1454 = vmatprep.subr.mxu0 0.0
  %1455 = vmatpush1.msra.mxu0 0.0
  %1456 = vmatprep.subr.mxu0 0.0
  %1457 = vmatpush1.msra.mxu0 0.0
  %1458 = vmatprep.subr.mxu0 0.0
  %1459 = vmatpush1.msra.mxu0 0.0
  %1460 = vmatprep.mubr.f32.mxu0 0.0
  %1461 = vmatmul.mubr.f32.gmra.mrb[0].mxu0 %v1250
  %v1462 = vpop.f32.mrb[0].mxu0
  %v1463 = vadd.f32 %v81, %v1462
  %v1464 = vpop.f32.mrb[0].mxu0
  %1465 = vmatprep.mubr.f32.mxu0 0.0
  %1466 = vmatmul.mubr.f32.gmra.mrb[0].mxu0 %v1253
  %v1467 = vpop.f32.mrb[0].mxu0
  %v1468 = vadd.f32 %v81, %v1467
  %v1469 = vpop.f32.mrb[0].mxu0
  %1470 = vmatprep.mubr.f32.mxu0 0.0
  %1471 = vmatmul.mubr.f32.gmra.mrb[0].mxu0 %v1256
  %v1472 = vpop.f32.mrb[0].mxu0
  %v1473 = vadd.f32 %v81, %v1472
  %v1474 = vpop.f32.mrb[0].mxu0
  %1475 = vmatprep.mubr.f32.mxu0 0.0
  %1476 = vmatmul.mubr.f32.gmra.mrb[0].mxu0 %v1259
  %v1477 = vpop.f32.mrb[0].mxu0
  %v1478 = vadd.f32 %v81, %v1477
  %v1479 = vpop.f32.mrb[0].mxu0
  %1480 = vmatprep.mubr.f32.mxu0 0.0
  %1481 = vmatmul.mubr.f32.gmra.mrb[0].mxu0 %v1262
  %v1482 = vpop.f32.mrb[0].mxu0
  %v1483 = vadd.f32 %v81, %v1482
  %v1484 = vpop.f32.mrb[0].mxu0
  %1485 = vmatprep.mubr.f32.mxu0 0.0
  %1486 = vmatmul.mubr.f32.gmra.mrb[0].mxu0 %v1265
  %v1487 = vpop.f32.mrb[0].mxu0
  %v1488 = vadd.f32 %v81, %v1487
  %v1489 = vpop.f32.mrb[0].mxu0
  %1490 = vmatprep.mubr.f32.mxu0 0.0
  %1491 = vmatmul.mubr.f32.gmra.mrb[0].mxu0 %v1268
  %v1492 = vpop.f32.mrb[0].mxu0
  %v1493 = vadd.f32 %v81, %v1492
  %v1494 = vpop.f32.mrb[0].mxu0
  %1495 = vmatprep.mubr.f32.mxu0 0.0
  %1496 = vmatmul.mubr.f32.gmra.mrb[0].mxu0 %v1271
  %v1497 = vpop.f32.mrb[0].mxu0
  %v1498 = vadd.f32 %v81, %v1497
  %v1499 = vpop.f32.mrb[0].mxu0
  %1500 = vmatprep.mubr.f32.mxu0 0.0
  %1501 = vmatmul.mubr.f32.gmra.mrb[0].mxu0 %v1274
  %v1502 = vpop.f32.mrb[0].mxu0
  %v1503 = vadd.f32 %v81, %v1502
  %v1504 = vpop.f32.mrb[0].mxu0
  %1505 = vmatprep.mubr.f32.mxu0 0.0
  %1506 = vmatmul.mubr.f32.gmra.mrb[0].mxu0 %v1277
  %v1507 = vpop.f32.mrb[0].mxu0
  %v1508 = vadd.f32 %v81, %v1507
  %v1509 = vpop.f32.mrb[0].mxu0
  %1510 = vmatprep.mubr.f32.mxu0 0.0
  %1511 = vmatmul.mubr.f32.gmra.mrb[0].mxu0 %v1280
  %v1512 = vpop.f32.mrb[0].mxu0
  %v1513 = vadd.f32 %v81, %v1512
  %v1514 = vpop.f32.mrb[0].mxu0
  %1515 = vmatprep.mubr.f32.mxu0 0.0
  %1516 = vmatmul.mubr.f32.gmra.mrb[0].mxu0 %v1283
  %v1517 = vpop.f32.mrb[0].mxu0
  %v1518 = vadd.f32 %v81, %v1517
  %v1519 = vpop.f32.mrb[0].mxu0
  %1520 = vmatprep.mubr.f32.mxu0 0.0
  %1521 = vmatmul.mubr.f32.gmra.mrb[0].mxu0 %v1286
  %v1522 = vpop.f32.mrb[0].mxu0
  %v1523 = vadd.f32 %v81, %v1522
  %v1524 = vpop.f32.mrb[0].mxu0
  %1525 = vmatprep.mubr.f32.mxu0 0.0
  %1526 = vmatmul.mubr.f32.gmra.mrb[0].mxu0 %v1289
  %v1527 = vpop.f32.mrb[0].mxu0
  %v1528 = vadd.f32 %v81, %v1527
  %v1529 = vpop.f32.mrb[0].mxu0
  %1530 = vmatprep.mubr.f32.mxu0 0.0
  %1531 = vmatmul.mubr.f32.gmra.mrb[0].mxu0 %v1292
  %v1532 = vpop.f32.mrb[0].mxu0
  %v1533 = vadd.f32 %v81, %v1532
  %v1534 = vpop.f32.mrb[0].mxu0
  %1535 = vmatprep.mubr.f32.mxu0 0.0
  %1536 = vmatmul.mubr.f32.gmra.mrb[0].mxu0 %v1295
  %v1537 = vpop.f32.mrb[0].mxu0
  %v1538 = vadd.f32 %v81, %v1537
  %v1539 = vpop.f32.mrb[0].mxu0
  %1540 = vmatprep.mubr.f32.mxu0 0.0
  %1541 = vmatmul.mubr.f32.gmra.mrb[0].mxu0 %v1298
  %v1542 = vpop.f32.mrb[0].mxu0
  %v1543 = vadd.f32 %v81, %v1542
  %v1544 = vpop.f32.mrb[0].mxu0
  %1545 = vmatprep.mubr.f32.mxu0 0.0
  %1546 = vmatmul.mubr.f32.gmra.mrb[0].mxu0 %v1301
  %v1547 = vpop.f32.mrb[0].mxu0
  %v1548 = vadd.f32 %v81, %v1547
  %v1549 = vpop.f32.mrb[0].mxu0
  %1550 = vmatprep.mubr.f32.mxu0 0.0
  %1551 = vmatmul.mubr.f32.gmra.mrb[0].mxu0 %v1304
  %v1552 = vpop.f32.mrb[0].mxu0
  %v1553 = vadd.f32 %v81, %v1552
  %v1554 = vpop.f32.mrb[0].mxu0
  %1555 = vmatprep.mubr.f32.mxu0 0.0
  %1556 = vmatmul.mubr.f32.gmra.mrb[0].mxu0 %v1307
  %v1557 = vpop.f32.mrb[0].mxu0
  %v1558 = vadd.f32 %v81, %v1557
  %v1559 = vpop.f32.mrb[0].mxu0
  %1560 = vmatprep.mubr.f32.mxu0 0.0
  %1561 = vmatmul.mubr.f32.gmra.mrb[0].mxu0 %v1310
  %v1562 = vpop.f32.mrb[0].mxu0
  %v1563 = vadd.f32 %v81, %v1562
  %v1564 = vpop.f32.mrb[0].mxu0
  %1565 = vmatprep.mubr.f32.mxu0 0.0
  %1566 = vmatmul.mubr.f32.gmra.mrb[0].mxu0 %v1313
  %v1567 = vpop.f32.mrb[0].mxu0
  %v1568 = vadd.f32 %v81, %v1567
  %v1569 = vpop.f32.mrb[0].mxu0
  %1570 = vmatprep.mubr.f32.mxu0 0.0
  %1571 = vmatmul.mubr.f32.gmra.mrb[0].mxu0 %v1316
  %v1572 = vpop.f32.mrb[0].mxu0
  %v1573 = vadd.f32 %v81, %v1572
  %v1574 = vpop.f32.mrb[0].mxu0
  %1575 = vmatprep.mubr.f32.mxu0 0.0
  %1576 = vmatmul.mubr.f32.gmra.mrb[0].mxu0 %v1319
  %v1577 = vpop.f32.mrb[0].mxu0
  %v1578 = vadd.f32 %v81, %v1577
  %v1579 = vpop.f32.mrb[0].mxu0
  %1580 = vmatprep.mubr.f32.mxu0 0.0
  %1581 = vmatmul.mubr.f32.gmra.mrb[0].mxu0 %v1322
  %v1582 = vpop.f32.mrb[0].mxu0
  %v1583 = vadd.f32 %v81, %v1582
  %v1584 = vpop.f32.mrb[0].mxu0
  %1585 = vmatprep.mubr.f32.mxu0 0.0
  %1586 = vmatmul.mubr.f32.gmra.mrb[0].mxu0 %v1325
  %v1587 = vpop.f32.mrb[0].mxu0
  %v1588 = vadd.f32 %v81, %v1587
  %v1589 = vpop.f32.mrb[0].mxu0
  %1590 = vmatprep.mubr.f32.mxu0 0.0
  %1591 = vmatmul.mubr.f32.gmra.mrb[0].mxu0 %v1328
  %v1592 = vpop.f32.mrb[0].mxu0
  %v1593 = vadd.f32 %v81, %v1592
  %v1594 = vpop.f32.mrb[0].mxu0
  %1595 = vmatprep.mubr.f32.mxu0 0.0
  %1596 = vmatmul.mubr.f32.gmra.mrb[0].mxu0 %v1331
  %v1597 = vpop.f32.mrb[0].mxu0
  %v1598 = vadd.f32 %v81, %v1597
  %v1599 = vpop.f32.mrb[0].mxu0
  %1600 = vmatprep.mubr.f32.mxu0 0.0
  %1601 = vmatmul.mubr.f32.gmra.mrb[0].mxu0 %v1334
  %v1602 = vpop.f32.mrb[0].mxu0
  %v1603 = vadd.f32 %v81, %v1602
  %v1604 = vpop.f32.mrb[0].mxu0
  %1605 = vmatprep.mubr.f32.mxu0 0.0
  %1606 = vmatmul.mubr.f32.gmra.mrb[0].mxu0 %v1337
  %v1607 = vpop.f32.mrb[0].mxu0
  %v1608 = vadd.f32 %v81, %v1607
  %v1609 = vpop.f32.mrb[0].mxu0
  %1610 = vmatprep.mubr.f32.mxu0 0.0
  %1611 = vmatmul.mubr.f32.gmra.mrb[0].mxu0 %v1340
  %v1612 = vpop.f32.mrb[0].mxu0
  %v1613 = vadd.f32 %v81, %v1612
  %v1614 = vpop.f32.mrb[0].mxu0
  %1615 = vmatprep.mubr.f32.mxu0 0.0
  %1616 = vmatmul.mubr.f32.gmra.mrb[0].mxu0 %v1343
  %v1617 = vpop.f32.mrb[0].mxu0
  %v1618 = vadd.f32 %v81, %v1617
  %v1619 = vpop.f32.mrb[0].mxu0
  %1620 = vmatprep.mubr.f32.mxu0 0.0
  %1621 = vmatmul.mubr.f32.gmra.mrb[0].mxu0 %v1346
  %v1622 = vpop.f32.mrb[0].mxu0
  %v1623 = vadd.f32 %v81, %v1622
  %v1624 = vpop.f32.mrb[0].mxu0
  %1625 = vmatprep.mubr.f32.mxu0 0.0
  %1626 = vmatmul.mubr.f32.gmra.mrb[0].mxu0 %v1349
  %v1627 = vpop.f32.mrb[0].mxu0
  %v1628 = vadd.f32 %v81, %v1627
  %v1629 = vpop.f32.mrb[0].mxu0
  %1630 = vmatprep.mubr.f32.mxu0 0.0
  %1631 = vmatmul.mubr.f32.gmra.mrb[0].mxu0 %v1352
  %v1632 = vpop.f32.mrb[0].mxu0
  %v1633 = vadd.f32 %v81, %v1632
  %v1634 = vpop.f32.mrb[0].mxu0
  %1635 = vmatprep.mubr.f32.mxu0 0.0
  %1636 = vmatmul.mubr.f32.gmra.mrb[0].mxu0 %v1355
  %v1637 = vpop.f32.mrb[0].mxu0
  %v1638 = vadd.f32 %v81, %v1637
  %v1639 = vpop.f32.mrb[0].mxu0
  %1640 = vmatprep.mubr.f32.mxu0 0.0
  %1641 = vmatmul.mubr.f32.gmra.mrb[0].mxu0 %v1358
  %v1642 = vpop.f32.mrb[0].mxu0
  %v1643 = vadd.f32 %v81, %v1642
  %v1644 = vpop.f32.mrb[0].mxu0
  %1645 = vmatprep.mubr.f32.mxu0 0.0
  %1646 = vmatmul.mubr.f32.gmra.mrb[0].mxu0 %v1361
  %v1647 = vpop.f32.mrb[0].mxu0
  %v1648 = vadd.f32 %v81, %v1647
  %v1649 = vpop.f32.mrb[0].mxu0
  %1650 = vmatprep.mubr.f32.mxu0 0.0
  %1651 = vmatmul.mubr.f32.gmra.mrb[0].mxu0 %v1364
  %v1652 = vpop.f32.mrb[0].mxu0
  %v1653 = vadd.f32 %v81, %v1652
  %v1654 = vpop.f32.mrb[0].mxu0
  %1655 = vmatprep.mubr.f32.mxu0 0.0
  %1656 = vmatmul.mubr.f32.gmra.mrb[0].mxu0 %v1367
  %v1657 = vpop.f32.mrb[0].mxu0
  %v1658 = vadd.f32 %v81, %v1657
  %v1659 = vpop.f32.mrb[0].mxu0
  %1660 = vmatprep.mubr.f32.mxu0 0.0
  %1661 = vmatmul.mubr.f32.gmra.mrb[0].mxu0 %v1370
  %v1662 = vpop.f32.mrb[0].mxu0
  %v1663 = vadd.f32 %v81, %v1662
  %v1664 = vpop.f32.mrb[0].mxu0
  %1665 = vmatprep.mubr.f32.mxu0 0.0
  %1666 = vmatmul.mubr.f32.gmra.mrb[0].mxu0 %v1373
  %v1667 = vpop.f32.mrb[0].mxu0
  %v1668 = vadd.f32 %v81, %v1667
  %v1669 = vpop.f32.mrb[0].mxu0
  %1670 = vmatprep.mubr.f32.mxu0 0.0
  %1671 = vmatmul.mubr.f32.gmra.mrb[0].mxu0 %v1376
  %v1672 = vpop.f32.mrb[0].mxu0
  %v1673 = vadd.f32 %v81, %v1672
  %v1674 = vpop.f32.mrb[0].mxu0
  %1675 = vmatprep.mubr.f32.mxu0 0.0
  %1676 = vmatmul.mubr.f32.gmra.mrb[0].mxu0 %v1379
  %v1677 = vpop.f32.mrb[0].mxu0
  %v1678 = vadd.f32 %v81, %v1677
  %v1679 = vpop.f32.mrb[0].mxu0
  %1680 = vmatprep.mubr.f32.mxu0 0.0
  %1681 = vmatmul.mubr.f32.gmra.mrb[0].mxu0 %v1382
  %v1682 = vpop.f32.mrb[0].mxu0
  %v1683 = vadd.f32 %v81, %v1682
  %v1684 = vpop.f32.mrb[0].mxu0
  %1685 = vmatprep.mubr.f32.mxu0 0.0
  %1686 = vmatmul.mubr.f32.gmra.mrb[0].mxu0 %v1385
  %v1687 = vpop.f32.mrb[0].mxu0
  %v1688 = vadd.f32 %v81, %v1687
  %v1689 = vpop.f32.mrb[0].mxu0
  %1690 = vmatprep.mubr.f32.mxu0 0.0
  %1691 = vmatmul.mubr.f32.gmra.mrb[0].mxu0 %v1388
  %v1692 = vpop.f32.mrb[0].mxu0
  %v1693 = vadd.f32 %v81, %v1692
  %v1694 = vpop.f32.mrb[0].mxu0
  %1695 = vmatprep.mubr.f32.mxu0 0.0
  %1696 = vmatmul.mubr.f32.gmra.mrb[0].mxu0 %v1391
  %v1697 = vpop.f32.mrb[0].mxu0
  %v1698 = vadd.f32 %v81, %v1697
  %v1699 = vpop.f32.mrb[0].mxu0
  %1700 = vmatprep.mubr.f32.mxu0 0.0
  %1701 = vmatmul.mubr.f32.gmra.mrb[0].mxu0 %v1394
  %v1702 = vpop.f32.mrb[0].mxu0
  %v1703 = vadd.f32 %v81, %v1702
  %v1704 = vpop.f32.mrb[0].mxu0
  %1705 = vdwg.mxu0
  %v1706 = vmax.f32 %v1463, 0.0
  %v1707 = vmax.f32 %v1468, 0.0
  %v1708 = vmax.f32 %v1473, 0.0
  %v1709 = vmax.f32 %v1478, 0.0
  %v1710 = vmax.f32 %v1483, 0.0
  %v1711 = vmax.f32 %v1488, 0.0
  %v1712 = vmax.f32 %v1493, 0.0
  %v1713 = vmax.f32 %v1498, 0.0
  %v1714 = vmax.f32 %v1503, 0.0
  %v1715 = vmax.f32 %v1508, 0.0
  %v1716 = vmax.f32 %v1513, 0.0
  %v1717 = vmax.f32 %v1518, 0.0
  %v1718 = vmax.f32 %v1523, 0.0
  %v1719 = vmax.f32 %v1528, 0.0
  %v1720 = vmax.f32 %v1533, 0.0
  %v1721 = vmax.f32 %v1538, 0.0
  %v1722 = vmax.f32 %v1543, 0.0
  %v1723 = vmax.f32 %v1548, 0.0
  %v1724 = vmax.f32 %v1553, 0.0
  %v1725 = vmax.f32 %v1558, 0.0
  %v1726 = vmax.f32 %v1563, 0.0
  %v1727 = vmax.f32 %v1568, 0.0
  %v1728 = vmax.f32 %v1573, 0.0
  %v1729 = vmax.f32 %v1578, 0.0
  %v1730 = vmax.f32 %v1583, 0.0
  %v1731 = vmax.f32 %v1588, 0.0
  %v1732 = vmax.f32 %v1593, 0.0
  %v1733 = vmax.f32 %v1598, 0.0
  %v1734 = vmax.f32 %v1603, 0.0
  %v1735 = vmax.f32 %v1608, 0.0
  %v1736 = vmax.f32 %v1613, 0.0
  %v1737 = vmax.f32 %v1618, 0.0
  %v1738 = vmax.f32 %v1623, 0.0
  %v1739 = vmax.f32 %v1628, 0.0
  %v1740 = vmax.f32 %v1633, 0.0
  %v1741 = vmax.f32 %v1638, 0.0
  %v1742 = vmax.f32 %v1643, 0.0
  %v1743 = vmax.f32 %v1648, 0.0
  %v1744 = vmax.f32 %v1653, 0.0
  %v1745 = vmax.f32 %v1658, 0.0
  %v1746 = vmax.f32 %v1663, 0.0
  %v1747 = vmax.f32 %v1668, 0.0
  %v1748 = vmax.f32 %v1673, 0.0
  %v1749 = vmax.f32 %v1678, 0.0
  %v1750 = vmax.f32 %v1683, 0.0
  %v1751 = vmax.f32 %v1688, 0.0
  %v1752 = vmax.f32 %v1693, 0.0
  %v1753 = vmax.f32 %v1698, 0.0
  %v1754 = vmax.f32 %v1703, 0.0
  %s1755 = scalar_lea.vmem %s0, 1176
  %v1756 = vld [vmem:[%s1755] sm:$0xff]
  %v1757 = vld [vmem:[%s1755 + $0x8] sm:$0xff]
  %v1758 = vld [vmem:[%s1755 + $0x10] sm:$0xff]
  %v1759 = vld [vmem:[%s1755 + $0x18] sm:$0xff]
  %v1760 = vld [vmem:[%s1755 + $0x20] sm:$0xff]
  %v1761 = vld [vmem:[%s1755 + $0x28] sm:$0xff]
  %v1762 = vld [vmem:[%s1755 + $0x30] sm:$0xff]
  %v1763 = vld [vmem:[%s1755 + $0x38] sm:$0xff]
  %v1764 = vld [vmem:[%s1755 + $0x40] sm:$0xff]
  %v1765 = vld [vmem:[%s1755 + $0x48] sm:$0xff]
  %v1766 = vld [vmem:[%s1755 + $0x50] sm:$0xff]
  %v1767 = vld [vmem:[%s1755 + $0x58] sm:$0xff]
  %v1768 = vld [vmem:[%s1755 + $0x60] sm:$0xff]
  %v1769 = vld [vmem:[%s1755 + $0x68] sm:$0xff]
  %v1770 = vld [vmem:[%s1755 + $0x70] sm:$0xff]
  %v1771 = vld [vmem:[%s1755 + $0x78] sm:$0xff]
  %v1772 = vld [vmem:[%s1755 + $0x80] sm:$0xff]
  %v1773 = vld [vmem:[%s1755 + $0x88] sm:$0xff]
  %v1774 = vld [vmem:[%s1755 + $0x90] sm:$0xff]
  %v1775 = vld [vmem:[%s1755 + $0x98] sm:$0xff]
  %v1776 = vld [vmem:[%s1755 + $0xa0] sm:$0xff]
  %v1777 = vld [vmem:[%s1755 + $0xa8] sm:$0xff]
  %v1778 = vld [vmem:[%s1755 + $0xb0] sm:$0xff]
  %v1779 = vld [vmem:[%s1755 + $0xb8] sm:$0xff]
  %v1780 = vld [vmem:[%s1755 + $0xc0] sm:$0xff]
  %v1781 = vld [vmem:[%s1755 + $0xc8] sm:$0xff]
  %v1782 = vld [vmem:[%s1755 + $0xd0] sm:$0xff]
  %v1783 = vld [vmem:[%s1755 + $0xd8] sm:$0xff]
  %v1784 = vld [vmem:[%s1755 + $0xe0] sm:$0xff]
  %v1785 = vld [vmem:[%s1755 + $0xe8] sm:$0xff]
  %v1786 = vld [vmem:[%s1755 + $0xf0] sm:$0xff]
  %v1787 = vld [vmem:[%s1755 + $0xf8] sm:$0xff]
  %v1788 = vld [vmem:[%s1755 + $0x100] sm:$0xff]
  %v1789 = vld [vmem:[%s1755 + $0x108] sm:$0xff]
  %v1790 = vld [vmem:[%s1755 + $0x110] sm:$0xff]
  %v1791 = vld [vmem:[%s1755 + $0x118] sm:$0xff]
  %v1792 = vld [vmem:[%s1755 + $0x120] sm:$0xff]
  %v1793 = vld [vmem:[%s1755 + $0x128] sm:$0xff]
  %v1794 = vld [vmem:[%s1755 + $0x130] sm:$0xff]
  %v1795 = vld [vmem:[%s1755 + $0x138] sm:$0xff]
  %v1796 = vld [vmem:[%s1755 + $0x140] sm:$0xff]
  %v1797 = vld [vmem:[%s1755 + $0x148] sm:$0xff]
  %v1798 = vld [vmem:[%s1755 + $0x150] sm:$0xff]
  %v1799 = vld [vmem:[%s1755 + $0x158] sm:$0xff]
  %v1800 = vld [vmem:[%s1755 + $0x160] sm:$0xff]
  %v1801 = vld [vmem:[%s1755 + $0x168] sm:$0xff]
  %v1802 = vld [vmem:[%s1755 + $0x170] sm:$0xff]
  %v1803 = vld [vmem:[%s1755 + $0x178] sm:$0xff]
  %v1804 = vld [vmem:[%s1755 + $0x180] sm:$0xff]
  %v1806 = vsel %vm83, %v1756, 0
  %v1809 = vsel %vm83, %v1757, 0
  %v1812 = vsel %vm83, %v1758, 0
  %v1815 = vsel %vm83, %v1759, 0
  %v1818 = vsel %vm83, %v1760, 0
  %v1821 = vsel %vm83, %v1761, 0
  %v1824 = vsel %vm83, %v1762, 0
  %v1827 = vsel %vm83, %v1763, 0
  %v1830 = vsel %vm83, %v1764, 0
  %v1833 = vsel %vm83, %v1765, 0
  %v1836 = vsel %vm83, %v1766, 0
  %v1839 = vsel %vm83, %v1767, 0
  %v1842 = vsel %vm83, %v1768, 0
  %v1845 = vsel %vm83, %v1769, 0
  %v1848 = vsel %vm83, %v1770, 0
  %v1851 = vsel %vm83, %v1771, 0
  %v1854 = vsel %vm83, %v1772, 0
  %v1857 = vsel %vm83, %v1773, 0
  %v1860 = vsel %vm83, %v1774, 0
  %v1863 = vsel %vm83, %v1775, 0
  %v1866 = vsel %vm83, %v1776, 0
  %v1869 = vsel %vm83, %v1777, 0
  %v1872 = vsel %vm83, %v1778, 0
  %v1875 = vsel %vm83, %v1779, 0
  %v1878 = vsel %vm83, %v1780, 0
  %v1881 = vsel %vm83, %v1781, 0
  %v1884 = vsel %vm83, %v1782, 0
  %v1887 = vsel %vm83, %v1783, 0
  %v1890 = vsel %vm83, %v1784, 0
  %v1893 = vsel %vm83, %v1785, 0
  %v1896 = vsel %vm83, %v1786, 0
  %v1899 = vsel %vm83, %v1787, 0
  %v1902 = vsel %vm83, %v1788, 0
  %v1905 = vsel %vm83, %v1789, 0
  %v1908 = vsel %vm83, %v1790, 0
  %v1911 = vsel %vm83, %v1791, 0
  %v1914 = vsel %vm83, %v1792, 0
  %v1917 = vsel %vm83, %v1793, 0
  %v1920 = vsel %vm83, %v1794, 0
  %v1923 = vsel %vm83, %v1795, 0
  %v1926 = vsel %vm83, %v1796, 0
  %v1929 = vsel %vm83, %v1797, 0
  %v1932 = vsel %vm83, %v1798, 0
  %v1935 = vsel %vm83, %v1799, 0
  %v1938 = vsel %vm83, %v1800, 0
  %v1941 = vsel %vm83, %v1801, 0
  %v1944 = vsel %vm83, %v1802, 0
  %v1947 = vsel %vm83, %v1803, 0
  %v1950 = vsel %vm83, %v1804, 0
  %1952 = vmatprep.subr.mxu0 0.0
  %1953 = vmatpush1.msra.mxu0 %v17
  %1954 = vmatprep.subr.mxu0 0.0
  %1955 = vmatpush1.msra.mxu0 %v18
  %1956 = vmatprep.subr.mxu0 0.0
  %1957 = vmatpush1.msra.mxu0 %v19
  %1958 = vmatprep.subr.mxu0 0.0
  %1959 = vmatpush1.msra.mxu0 %v20
  %1960 = vmatprep.subr.mxu0 0.0
  %1961 = vmatpush1.msra.mxu0 %v21
  %1962 = vmatprep.subr.mxu0 0.0
  %1963 = vmatpush1.msra.mxu0 %v22
  %1964 = vmatprep.subr.mxu0 0.0
  %1965 = vmatpush1.msra.mxu0 %v23
  %1966 = vmatprep.subr.mxu0 0.0
  %1967 = vmatpush1.msra.mxu0 %v24
  %1968 = vmatprep.subr.mxu0 0.0
  %1969 = vmatpush1.msra.mxu0 %v25
  %1970 = vmatprep.subr.mxu0 0.0
  %1971 = vmatpush1.msra.mxu0 %v233
  %1972 = vmatprep.subr.mxu0 0.0
  %1973 = vmatpush1.msra.mxu0 0.0
  %1974 = vmatprep.subr.mxu0 0.0
  %1975 = vmatpush1.msra.mxu0 0.0
  %1976 = vmatprep.subr.mxu0 0.0
  %1977 = vmatpush1.msra.mxu0 0.0
  %1978 = vmatprep.subr.mxu0 0.0
  %1979 = vmatpush1.msra.mxu0 0.0
  %1980 = vmatprep.subr.mxu0 0.0
  %1981 = vmatpush1.msra.mxu0 0.0
  %1982 = vmatprep.subr.mxu0 0.0
  %1983 = vmatpush1.msra.mxu0 0.0
  %1984 = vmatprep.subr.mxu0 0.0
  %1985 = vmatpush1.msra.mxu0 0.0
  %1986 = vmatprep.subr.mxu0 0.0
  %1987 = vmatpush1.msra.mxu0 0.0
  %1988 = vmatprep.subr.mxu0 0.0
  %1989 = vmatpush1.msra.mxu0 0.0
  %1990 = vmatprep.subr.mxu0 0.0
  %1991 = vmatpush1.msra.mxu0 0.0
  %1992 = vmatprep.subr.mxu0 0.0
  %1993 = vmatpush1.msra.mxu0 0.0
  %1994 = vmatprep.subr.mxu0 0.0
  %1995 = vmatpush1.msra.mxu0 0.0
  %1996 = vmatprep.subr.mxu0 0.0
  %1997 = vmatpush1.msra.mxu0 0.0
  %1998 = vmatprep.subr.mxu0 0.0
  %1999 = vmatpush1.msra.mxu0 0.0
  %2000 = vmatprep.subr.mxu0 0.0
  %2001 = vmatpush1.msra.mxu0 0.0
  %2002 = vmatprep.subr.mxu0 0.0
  %2003 = vmatpush1.msra.mxu0 0.0
  %2004 = vmatprep.subr.mxu0 0.0
  %2005 = vmatpush1.msra.mxu0 0.0
  %2006 = vmatprep.subr.mxu0 0.0
  %2007 = vmatpush1.msra.mxu0 0.0
  %2008 = vmatprep.subr.mxu0 0.0
  %2009 = vmatpush1.msra.mxu0 0.0
  %2010 = vmatprep.subr.mxu0 0.0
  %2011 = vmatpush1.msra.mxu0 0.0
  %2012 = vmatprep.subr.mxu0 0.0
  %2013 = vmatpush1.msra.mxu0 0.0
  %2014 = vmatprep.subr.mxu0 0.0
  %2015 = vmatpush1.msra.mxu0 0.0
  %2016 = vmatprep.mubr.f32.mxu0 0.0
  %2017 = vmatmul.mubr.f32.gmra.mrb[0].mxu0 %v1806
  %v2018 = vpop.f32.mrb[0].mxu0
  %v2019 = vadd.f32 %v81, %v2018
  %v2020 = vpop.f32.mrb[0].mxu0
  %2021 = vmatprep.mubr.f32.mxu0 0.0
  %2022 = vmatmul.mubr.f32.gmra.mrb[0].mxu0 %v1809
  %v2023 = vpop.f32.mrb[0].mxu0
  %v2024 = vadd.f32 %v81, %v2023
  %v2025 = vpop.f32.mrb[0].mxu0
  %2026 = vmatprep.mubr.f32.mxu0 0.0
  %2027 = vmatmul.mubr.f32.gmra.mrb[0].mxu0 %v1812
  %v2028 = vpop.f32.mrb[0].mxu0
  %v2029 = vadd.f32 %v81, %v2028
  %v2030 = vpop.f32.mrb[0].mxu0
  %2031 = vmatprep.mubr.f32.mxu0 0.0
  %2032 = vmatmul.mubr.f32.gmra.mrb[0].mxu0 %v1815
  %v2033 = vpop.f32.mrb[0].mxu0
  %v2034 = vadd.f32 %v81, %v2033
  %v2035 = vpop.f32.mrb[0].mxu0
  %2036 = vmatprep.mubr.f32.mxu0 0.0
  %2037 = vmatmul.mubr.f32.gmra.mrb[0].mxu0 %v1818
  %v2038 = vpop.f32.mrb[0].mxu0
  %v2039 = vadd.f32 %v81, %v2038
  %v2040 = vpop.f32.mrb[0].mxu0
  %2041 = vmatprep.mubr.f32.mxu0 0.0
  %2042 = vmatmul.mubr.f32.gmra.mrb[0].mxu0 %v1821
  %v2043 = vpop.f32.mrb[0].mxu0
  %v2044 = vadd.f32 %v81, %v2043
  %v2045 = vpop.f32.mrb[0].mxu0
  %2046 = vmatprep.mubr.f32.mxu0 0.0
  %2047 = vmatmul.mubr.f32.gmra.mrb[0].mxu0 %v1824
  %v2048 = vpop.f32.mrb[0].mxu0
  %v2049 = vadd.f32 %v81, %v2048
  %v2050 = vpop.f32.mrb[0].mxu0
  %2051 = vmatprep.mubr.f32.mxu0 0.0
  %2052 = vmatmul.mubr.f32.gmra.mrb[0].mxu0 %v1827
  %v2053 = vpop.f32.mrb[0].mxu0
  %v2054 = vadd.f32 %v81, %v2053
  %v2055 = vpop.f32.mrb[0].mxu0
  %2056 = vmatprep.mubr.f32.mxu0 0.0
  %2057 = vmatmul.mubr.f32.gmra.mrb[0].mxu0 %v1830
  %v2058 = vpop.f32.mrb[0].mxu0
  %v2059 = vadd.f32 %v81, %v2058
  %v2060 = vpop.f32.mrb[0].mxu0
  %2061 = vmatprep.mubr.f32.mxu0 0.0
  %2062 = vmatmul.mubr.f32.gmra.mrb[0].mxu0 %v1833
  %v2063 = vpop.f32.mrb[0].mxu0
  %v2064 = vadd.f32 %v81, %v2063
  %v2065 = vpop.f32.mrb[0].mxu0
  %2066 = vmatprep.mubr.f32.mxu0 0.0
  %2067 = vmatmul.mubr.f32.gmra.mrb[0].mxu0 %v1836
  %v2068 = vpop.f32.mrb[0].mxu0
  %v2069 = vadd.f32 %v81, %v2068
  %v2070 = vpop.f32.mrb[0].mxu0
  %2071 = vmatprep.mubr.f32.mxu0 0.0
  %2072 = vmatmul.mubr.f32.gmra.mrb[0].mxu0 %v1839
  %v2073 = vpop.f32.mrb[0].mxu0
  %v2074 = vadd.f32 %v81, %v2073
  %v2075 = vpop.f32.mrb[0].mxu0
  %2076 = vmatprep.mubr.f32.mxu0 0.0
  %2077 = vmatmul.mubr.f32.gmra.mrb[0].mxu0 %v1842
  %v2078 = vpop.f32.mrb[0].mxu0
  %v2079 = vadd.f32 %v81, %v2078
  %v2080 = vpop.f32.mrb[0].mxu0
  %2081 = vmatprep.mubr.f32.mxu0 0.0
  %2082 = vmatmul.mubr.f32.gmra.mrb[0].mxu0 %v1845
  %v2083 = vpop.f32.mrb[0].mxu0
  %v2084 = vadd.f32 %v81, %v2083
  %v2085 = vpop.f32.mrb[0].mxu0
  %2086 = vmatprep.mubr.f32.mxu0 0.0
  %2087 = vmatmul.mubr.f32.gmra.mrb[0].mxu0 %v1848
  %v2088 = vpop.f32.mrb[0].mxu0
  %v2089 = vadd.f32 %v81, %v2088
  %v2090 = vpop.f32.mrb[0].mxu0
  %2091 = vmatprep.mubr.f32.mxu0 0.0
  %2092 = vmatmul.mubr.f32.gmra.mrb[0].mxu0 %v1851
  %v2093 = vpop.f32.mrb[0].mxu0
  %v2094 = vadd.f32 %v81, %v2093
  %v2095 = vpop.f32.mrb[0].mxu0
  %2096 = vmatprep.mubr.f32.mxu0 0.0
  %2097 = vmatmul.mubr.f32.gmra.mrb[0].mxu0 %v1854
  %v2098 = vpop.f32.mrb[0].mxu0
  %v2099 = vadd.f32 %v81, %v2098
  %v2100 = vpop.f32.mrb[0].mxu0
  %2101 = vmatprep.mubr.f32.mxu0 0.0
  %2102 = vmatmul.mubr.f32.gmra.mrb[0].mxu0 %v1857
  %v2103 = vpop.f32.mrb[0].mxu0
  %v2104 = vadd.f32 %v81, %v2103
  %v2105 = vpop.f32.mrb[0].mxu0
  %2106 = vmatprep.mubr.f32.mxu0 0.0
  %2107 = vmatmul.mubr.f32.gmra.mrb[0].mxu0 %v1860
  %v2108 = vpop.f32.mrb[0].mxu0
  %v2109 = vadd.f32 %v81, %v2108
  %v2110 = vpop.f32.mrb[0].mxu0
  %2111 = vmatprep.mubr.f32.mxu0 0.0
  %2112 = vmatmul.mubr.f32.gmra.mrb[0].mxu0 %v1863
  %v2113 = vpop.f32.mrb[0].mxu0
  %v2114 = vadd.f32 %v81, %v2113
  %v2115 = vpop.f32.mrb[0].mxu0
  %2116 = vmatprep.mubr.f32.mxu0 0.0
  %2117 = vmatmul.mubr.f32.gmra.mrb[0].mxu0 %v1866
  %v2118 = vpop.f32.mrb[0].mxu0
  %v2119 = vadd.f32 %v81, %v2118
  %v2120 = vpop.f32.mrb[0].mxu0
  %2121 = vmatprep.mubr.f32.mxu0 0.0
  %2122 = vmatmul.mubr.f32.gmra.mrb[0].mxu0 %v1869
  %v2123 = vpop.f32.mrb[0].mxu0
  %v2124 = vadd.f32 %v81, %v2123
  %v2125 = vpop.f32.mrb[0].mxu0
  %2126 = vmatprep.mubr.f32.mxu0 0.0
  %2127 = vmatmul.mubr.f32.gmra.mrb[0].mxu0 %v1872
  %v2128 = vpop.f32.mrb[0].mxu0
  %v2129 = vadd.f32 %v81, %v2128
  %v2130 = vpop.f32.mrb[0].mxu0
  %2131 = vmatprep.mubr.f32.mxu0 0.0
  %2132 = vmatmul.mubr.f32.gmra.mrb[0].mxu0 %v1875
  %v2133 = vpop.f32.mrb[0].mxu0
  %v2134 = vadd.f32 %v81, %v2133
  %v2135 = vpop.f32.mrb[0].mxu0
  %2136 = vmatprep.mubr.f32.mxu0 0.0
  %2137 = vmatmul.mubr.f32.gmra.mrb[0].mxu0 %v1878
  %v2138 = vpop.f32.mrb[0].mxu0
  %v2139 = vadd.f32 %v81, %v2138
  %v2140 = vpop.f32.mrb[0].mxu0
  %2141 = vmatprep.mubr.f32.mxu0 0.0
  %2142 = vmatmul.mubr.f32.gmra.mrb[0].mxu0 %v1881
  %v2143 = vpop.f32.mrb[0].mxu0
  %v2144 = vadd.f32 %v81, %v2143
  %v2145 = vpop.f32.mrb[0].mxu0
  %2146 = vmatprep.mubr.f32.mxu0 0.0
  %2147 = vmatmul.mubr.f32.gmra.mrb[0].mxu0 %v1884
  %v2148 = vpop.f32.mrb[0].mxu0
  %v2149 = vadd.f32 %v81, %v2148
  %v2150 = vpop.f32.mrb[0].mxu0
  %2151 = vmatprep.mubr.f32.mxu0 0.0
  %2152 = vmatmul.mubr.f32.gmra.mrb[0].mxu0 %v1887
  %v2153 = vpop.f32.mrb[0].mxu0
  %v2154 = vadd.f32 %v81, %v2153
  %v2155 = vpop.f32.mrb[0].mxu0
  %2156 = vmatprep.mubr.f32.mxu0 0.0
  %2157 = vmatmul.mubr.f32.gmra.mrb[0].mxu0 %v1890
  %v2158 = vpop.f32.mrb[0].mxu0
  %v2159 = vadd.f32 %v81, %v2158
  %v2160 = vpop.f32.mrb[0].mxu0
  %2161 = vmatprep.mubr.f32.mxu0 0.0
  %2162 = vmatmul.mubr.f32.gmra.mrb[0].mxu0 %v1893
  %v2163 = vpop.f32.mrb[0].mxu0
  %v2164 = vadd.f32 %v81, %v2163
  %v2165 = vpop.f32.mrb[0].mxu0
  %2166 = vmatprep.mubr.f32.mxu0 0.0
  %2167 = vmatmul.mubr.f32.gmra.mrb[0].mxu0 %v1896
  %v2168 = vpop.f32.mrb[0].mxu0
  %v2169 = vadd.f32 %v81, %v2168
  %v2170 = vpop.f32.mrb[0].mxu0
  %2171 = vmatprep.mubr.f32.mxu0 0.0
  %2172 = vmatmul.mubr.f32.gmra.mrb[0].mxu0 %v1899
  %v2173 = vpop.f32.mrb[0].mxu0
  %v2174 = vadd.f32 %v81, %v2173
  %v2175 = vpop.f32.mrb[0].mxu0
  %2176 = vmatprep.mubr.f32.mxu0 0.0
  %2177 = vmatmul.mubr.f32.gmra.mrb[0].mxu0 %v1902
  %v2178 = vpop.f32.mrb[0].mxu0
  %v2179 = vadd.f32 %v81, %v2178
  %v2180 = vpop.f32.mrb[0].mxu0
  %2181 = vmatprep.mubr.f32.mxu0 0.0
  %2182 = vmatmul.mubr.f32.gmra.mrb[0].mxu0 %v1905
  %v2183 = vpop.f32.mrb[0].mxu0
  %v2184 = vadd.f32 %v81, %v2183
  %v2185 = vpop.f32.mrb[0].mxu0
  %2186 = vmatprep.mubr.f32.mxu0 0.0
  %2187 = vmatmul.mubr.f32.gmra.mrb[0].mxu0 %v1908
  %v2188 = vpop.f32.mrb[0].mxu0
  %v2189 = vadd.f32 %v81, %v2188
  %v2190 = vpop.f32.mrb[0].mxu0
  %2191 = vmatprep.mubr.f32.mxu0 0.0
  %2192 = vmatmul.mubr.f32.gmra.mrb[0].mxu0 %v1911
  %v2193 = vpop.f32.mrb[0].mxu0
  %v2194 = vadd.f32 %v81, %v2193
  %v2195 = vpop.f32.mrb[0].mxu0
  %2196 = vmatprep.mubr.f32.mxu0 0.0
  %2197 = vmatmul.mubr.f32.gmra.mrb[0].mxu0 %v1914
  %v2198 = vpop.f32.mrb[0].mxu0
  %v2199 = vadd.f32 %v81, %v2198
  %v2200 = vpop.f32.mrb[0].mxu0
  %2201 = vmatprep.mubr.f32.mxu0 0.0
  %2202 = vmatmul.mubr.f32.gmra.mrb[0].mxu0 %v1917
  %v2203 = vpop.f32.mrb[0].mxu0
  %v2204 = vadd.f32 %v81, %v2203
  %v2205 = vpop.f32.mrb[0].mxu0
  %2206 = vmatprep.mubr.f32.mxu0 0.0
  %2207 = vmatmul.mubr.f32.gmra.mrb[0].mxu0 %v1920
  %v2208 = vpop.f32.mrb[0].mxu0
  %v2209 = vadd.f32 %v81, %v2208
  %v2210 = vpop.f32.mrb[0].mxu0
  %2211 = vmatprep.mubr.f32.mxu0 0.0
  %2212 = vmatmul.mubr.f32.gmra.mrb[0].mxu0 %v1923
  %v2213 = vpop.f32.mrb[0].mxu0
  %v2214 = vadd.f32 %v81, %v2213
  %v2215 = vpop.f32.mrb[0].mxu0
  %2216 = vmatprep.mubr.f32.mxu0 0.0
  %2217 = vmatmul.mubr.f32.gmra.mrb[0].mxu0 %v1926
  %v2218 = vpop.f32.mrb[0].mxu0
  %v2219 = vadd.f32 %v81, %v2218
  %v2220 = vpop.f32.mrb[0].mxu0
  %2221 = vmatprep.mubr.f32.mxu0 0.0
  %2222 = vmatmul.mubr.f32.gmra.mrb[0].mxu0 %v1929
  %v2223 = vpop.f32.mrb[0].mxu0
  %v2224 = vadd.f32 %v81, %v2223
  %v2225 = vpop.f32.mrb[0].mxu0
  %2226 = vmatprep.mubr.f32.mxu0 0.0
  %2227 = vmatmul.mubr.f32.gmra.mrb[0].mxu0 %v1932
  %v2228 = vpop.f32.mrb[0].mxu0
  %v2229 = vadd.f32 %v81, %v2228
  %v2230 = vpop.f32.mrb[0].mxu0
  %2231 = vmatprep.mubr.f32.mxu0 0.0
  %2232 = vmatmul.mubr.f32.gmra.mrb[0].mxu0 %v1935
  %v2233 = vpop.f32.mrb[0].mxu0
  %v2234 = vadd.f32 %v81, %v2233
  %v2235 = vpop.f32.mrb[0].mxu0
  %2236 = vmatprep.mubr.f32.mxu0 0.0
  %2237 = vmatmul.mubr.f32.gmra.mrb[0].mxu0 %v1938
  %v2238 = vpop.f32.mrb[0].mxu0
  %v2239 = vadd.f32 %v81, %v2238
  %v2240 = vpop.f32.mrb[0].mxu0
  %2241 = vmatprep.mubr.f32.mxu0 0.0
  %2242 = vmatmul.mubr.f32.gmra.mrb[0].mxu0 %v1941
  %v2243 = vpop.f32.mrb[0].mxu0
  %v2244 = vadd.f32 %v81, %v2243
  %v2245 = vpop.f32.mrb[0].mxu0
  %2246 = vmatprep.mubr.f32.mxu0 0.0
  %2247 = vmatmul.mubr.f32.gmra.mrb[0].mxu0 %v1944
  %v2248 = vpop.f32.mrb[0].mxu0
  %v2249 = vadd.f32 %v81, %v2248
  %v2250 = vpop.f32.mrb[0].mxu0
  %2251 = vmatprep.mubr.f32.mxu0 0.0
  %2252 = vmatmul.mubr.f32.gmra.mrb[0].mxu0 %v1947
  %v2253 = vpop.f32.mrb[0].mxu0
  %v2254 = vadd.f32 %v81, %v2253
  %v2255 = vpop.f32.mrb[0].mxu0
  %2256 = vmatprep.mubr.f32.mxu0 0.0
  %2257 = vmatmul.mubr.f32.gmra.mrb[0].mxu0 %v1950
  %v2258 = vpop.f32.mrb[0].mxu0
  %v2259 = vadd.f32 %v81, %v2258
  %v2260 = vpop.f32.mrb[0].mxu0
  %2261 = vdwg.mxu0
  %v2262 = vmax.f32 %v2019, 0.0
  %v2263 = vmax.f32 %v2024, 0.0
  %v2264 = vmax.f32 %v2029, 0.0
  %v2265 = vmax.f32 %v2034, 0.0
  %v2266 = vmax.f32 %v2039, 0.0
  %v2267 = vmax.f32 %v2044, 0.0
  %v2268 = vmax.f32 %v2049, 0.0
  %v2269 = vmax.f32 %v2054, 0.0
  %v2270 = vmax.f32 %v2059, 0.0
  %v2271 = vmax.f32 %v2064, 0.0
  %v2272 = vmax.f32 %v2069, 0.0
  %v2273 = vmax.f32 %v2074, 0.0
  %v2274 = vmax.f32 %v2079, 0.0
  %v2275 = vmax.f32 %v2084, 0.0
  %v2276 = vmax.f32 %v2089, 0.0
  %v2277 = vmax.f32 %v2094, 0.0
  %v2278 = vmax.f32 %v2099, 0.0
  %v2279 = vmax.f32 %v2104, 0.0
  %v2280 = vmax.f32 %v2109, 0.0
  %v2281 = vmax.f32 %v2114, 0.0
  %v2282 = vmax.f32 %v2119, 0.0
  %v2283 = vmax.f32 %v2124, 0.0
  %v2284 = vmax.f32 %v2129, 0.0
  %v2285 = vmax.f32 %v2134, 0.0
  %v2286 = vmax.f32 %v2139, 0.0
  %v2287 = vmax.f32 %v2144, 0.0
  %v2288 = vmax.f32 %v2149, 0.0
  %v2289 = vmax.f32 %v2154, 0.0
  %v2290 = vmax.f32 %v2159, 0.0
  %v2291 = vmax.f32 %v2164, 0.0
  %v2292 = vmax.f32 %v2169, 0.0
  %v2293 = vmax.f32 %v2174, 0.0
  %v2294 = vmax.f32 %v2179, 0.0
  %v2295 = vmax.f32 %v2184, 0.0
  %v2296 = vmax.f32 %v2189, 0.0
  %v2297 = vmax.f32 %v2194, 0.0
  %v2298 = vmax.f32 %v2199, 0.0
  %v2299 = vmax.f32 %v2204, 0.0
  %v2300 = vmax.f32 %v2209, 0.0
  %v2301 = vmax.f32 %v2214, 0.0
  %v2302 = vmax.f32 %v2219, 0.0
  %v2303 = vmax.f32 %v2224, 0.0
  %v2304 = vmax.f32 %v2229, 0.0
  %v2305 = vmax.f32 %v2234, 0.0
  %v2306 = vmax.f32 %v2239, 0.0
  %v2307 = vmax.f32 %v2244, 0.0
  %v2308 = vmax.f32 %v2249, 0.0
  %v2309 = vmax.f32 %v2254, 0.0
  %v2310 = vmax.f32 %v2259, 0.0
  %v2311 = vmax.f32 %v1706, %v2262
  %v2312 = vmax.f32 %v1707, %v2263
  %v2313 = vmax.f32 %v1708, %v2264
  %v2314 = vmax.f32 %v1709, %v2265
  %v2315 = vmax.f32 %v1710, %v2266
  %v2316 = vmax.f32 %v1711, %v2267
  %v2317 = vmax.f32 %v1712, %v2268
  %v2318 = vmax.f32 %v1713, %v2269
  %v2319 = vmax.f32 %v1714, %v2270
  %v2320 = vmax.f32 %v1715, %v2271
  %v2321 = vmax.f32 %v1716, %v2272
  %v2322 = vmax.f32 %v1717, %v2273
  %v2323 = vmax.f32 %v1718, %v2274
  %v2324 = vmax.f32 %v1719, %v2275
  %v2325 = vmax.f32 %v1720, %v2276
  %v2326 = vmax.f32 %v1721, %v2277
  %v2327 = vmax.f32 %v1722, %v2278
  %v2328 = vmax.f32 %v1723, %v2279
  %v2329 = vmax.f32 %v1724, %v2280
  %v2330 = vmax.f32 %v1725, %v2281
  %v2331 = vmax.f32 %v1726, %v2282
  %v2332 = vmax.f32 %v1727, %v2283
  %v2333 = vmax.f32 %v1728, %v2284
  %v2334 = vmax.f32 %v1729, %v2285
  %v2335 = vmax.f32 %v1730, %v2286
  %v2336 = vmax.f32 %v1731, %v2287
  %v2337 = vmax.f32 %v1732, %v2288
  %v2338 = vmax.f32 %v1733, %v2289
  %v2339 = vmax.f32 %v1734, %v2290
  %v2340 = vmax.f32 %v1735, %v2291
  %v2341 = vmax.f32 %v1736, %v2292
  %v2342 = vmax.f32 %v1737, %v2293
  %v2343 = vmax.f32 %v1738, %v2294
  %v2344 = vmax.f32 %v1739, %v2295
  %v2345 = vmax.f32 %v1740, %v2296
  %v2346 = vmax.f32 %v1741, %v2297
  %v2347 = vmax.f32 %v1742, %v2298
  %v2348 = vmax.f32 %v1743, %v2299
  %v2349 = vmax.f32 %v1744, %v2300
  %v2350 = vmax.f32 %v1745, %v2301
  %v2351 = vmax.f32 %v1746, %v2302
  %v2352 = vmax.f32 %v1747, %v2303
  %v2353 = vmax.f32 %v1748, %v2304
  %v2354 = vmax.f32 %v1749, %v2305
  %v2355 = vmax.f32 %v1750, %v2306
  %v2356 = vmax.f32 %v1751, %v2307
  %v2357 = vmax.f32 %v1752, %v2308
  %v2358 = vmax.f32 %v1753, %v2309
  %v2359 = vmax.f32 %v1754, %v2310
  %v2360 = vmax.f32 %v1150, %v2311
  %v2361 = vmax.f32 %v1151, %v2312
  %v2362 = vmax.f32 %v1152, %v2313
  %v2363 = vmax.f32 %v1153, %v2314
  %v2364 = vmax.f32 %v1154, %v2315
  %v2365 = vmax.f32 %v1155, %v2316
  %v2366 = vmax.f32 %v1156, %v2317
  %v2367 = vmax.f32 %v1157, %v2318
  %v2368 = vmax.f32 %v1158, %v2319
  %v2369 = vmax.f32 %v1159, %v2320
  %v2370 = vmax.f32 %v1160, %v2321
  %v2371 = vmax.f32 %v1161, %v2322
  %v2372 = vmax.f32 %v1162, %v2323
  %v2373 = vmax.f32 %v1163, %v2324
  %v2374 = vmax.f32 %v1164, %v2325
  %v2375 = vmax.f32 %v1165, %v2326
  %v2376 = vmax.f32 %v1166, %v2327
  %v2377 = vmax.f32 %v1167, %v2328
  %v2378 = vmax.f32 %v1168, %v2329
  %v2379 = vmax.f32 %v1169, %v2330
  %v2380 = vmax.f32 %v1170, %v2331
  %v2381 = vmax.f32 %v1171, %v2332
  %v2382 = vmax.f32 %v1172, %v2333
  %v2383 = vmax.f32 %v1173, %v2334
  %v2384 = vmax.f32 %v1174, %v2335
  %v2385 = vmax.f32 %v1175, %v2336
  %v2386 = vmax.f32 %v1176, %v2337
  %v2387 = vmax.f32 %v1177, %v2338
  %v2388 = vmax.f32 %v1178, %v2339
  %v2389 = vmax.f32 %v1179, %v2340
  %v2390 = vmax.f32 %v1180, %v2341
  %v2391 = vmax.f32 %v1181, %v2342
  %v2392 = vmax.f32 %v1182, %v2343
  %v2393 = vmax.f32 %v1183, %v2344
  %v2394 = vmax.f32 %v1184, %v2345
  %v2395 = vmax.f32 %v1185, %v2346
  %v2396 = vmax.f32 %v1186, %v2347
  %v2397 = vmax.f32 %v1187, %v2348
  %v2398 = vmax.f32 %v1188, %v2349
  %v2399 = vmax.f32 %v1189, %v2350
  %v2400 = vmax.f32 %v1190, %v2351
  %v2401 = vmax.f32 %v1191, %v2352
  %v2402 = vmax.f32 %v1192, %v2353
  %v2403 = vmax.f32 %v1193, %v2354
  %v2404 = vmax.f32 %v1194, %v2355
  %v2405 = vmax.f32 %v1195, %v2356
  %v2406 = vmax.f32 %v1196, %v2357
  %v2407 = vmax.f32 %v1197, %v2358
  %v2408 = vmax.f32 %v1198, %v2359
  %v2409 = vld [vmem:[%s3] sm:$0x1]
  %v2411 = vlaneseq
  %v2412 = vshrl.u32 %v2411, 7
  %v2413 = vsub.s32 0, %v2412
  %v2414 = vrot.slane %v2409, %v2413
  %v2416 = vmul.f32 %v2360, %v2414
  %v2417 = vmul.f32 %v2361, %v2414
  %v2418 = vmul.f32 %v2362, %v2414
  %v2419 = vmul.f32 %v2363, %v2414
  %v2420 = vmul.f32 %v2364, %v2414
  %v2421 = vmul.f32 %v2365, %v2414
  %v2422 = vmul.f32 %v2366, %v2414
  %v2423 = vmul.f32 %v2367, %v2414
  %v2424 = vmul.f32 %v2368, %v2414
  %v2425 = vmul.f32 %v2369, %v2414
  %v2426 = vmul.f32 %v2370, %v2414
  %v2427 = vmul.f32 %v2371, %v2414
  %v2428 = vmul.f32 %v2372, %v2414
  %v2429 = vmul.f32 %v2373, %v2414
  %v2430 = vmul.f32 %v2374, %v2414
  %v2431 = vmul.f32 %v2375, %v2414
  %v2432 = vmul.f32 %v2376, %v2414
  %v2433 = vmul.f32 %v2377, %v2414
  %v2434 = vmul.f32 %v2378, %v2414
  %v2435 = vmul.f32 %v2379, %v2414
  %v2436 = vmul.f32 %v2380, %v2414
  %v2437 = vmul.f32 %v2381, %v2414
  %v2438 = vmul.f32 %v2382, %v2414
  %v2439 = vmul.f32 %v2383, %v2414
  %v2440 = vmul.f32 %v2384, %v2414
  %v2441 = vmul.f32 %v2385, %v2414
  %v2442 = vmul.f32 %v2386, %v2414
  %v2443 = vmul.f32 %v2387, %v2414
  %v2444 = vmul.f32 %v2388, %v2414
  %v2445 = vmul.f32 %v2389, %v2414
  %v2446 = vmul.f32 %v2390, %v2414
  %v2447 = vmul.f32 %v2391, %v2414
  %v2448 = vmul.f32 %v2392, %v2414
  %v2449 = vmul.f32 %v2393, %v2414
  %v2450 = vmul.f32 %v2394, %v2414
  %v2451 = vmul.f32 %v2395, %v2414
  %v2452 = vmul.f32 %v2396, %v2414
  %v2453 = vmul.f32 %v2397, %v2414
  %v2454 = vmul.f32 %v2398, %v2414
  %v2455 = vmul.f32 %v2399, %v2414
  %v2456 = vmul.f32 %v2400, %v2414
  %v2457 = vmul.f32 %v2401, %v2414
  %v2458 = vmul.f32 %v2402, %v2414
  %v2459 = vmul.f32 %v2403, %v2414
  %v2460 = vmul.f32 %v2404, %v2414
  %v2461 = vmul.f32 %v2405, %v2414
  %v2462 = vmul.f32 %v2406, %v2414
  %v2463 = vmul.f32 %v2407, %v2414
  %v2464 = vmul.f32 %v2408, %v2414
  %2465 = vst [vmem:[%s4] sm:$0xff] %v2416
  %2466 = vst [vmem:[%s4 + $0x8] sm:$0xff] %v2417
  %2467 = vst [vmem:[%s4 + $0x10] sm:$0xff] %v2418
  %2468 = vst [vmem:[%s4 + $0x18] sm:$0xff] %v2419
  %2469 = vst [vmem:[%s4 + $0x20] sm:$0xff] %v2420
  %2470 = vst [vmem:[%s4 + $0x28] sm:$0xff] %v2421
  %2471 = vst [vmem:[%s4 + $0x30] sm:$0xff] %v2422
  %2472 = vst [vmem:[%s4 + $0x38] sm:$0xff] %v2423
  %2473 = vst [vmem:[%s4 + $0x40] sm:$0xff] %v2424
  %2474 = vst [vmem:[%s4 + $0x48] sm:$0xff] %v2425
  %2475 = vst [vmem:[%s4 + $0x50] sm:$0xff] %v2426
  %2476 = vst [vmem:[%s4 + $0x58] sm:$0xff] %v2427
  %2477 = vst [vmem:[%s4 + $0x60] sm:$0xff] %v2428
  %2478 = vst [vmem:[%s4 + $0x68] sm:$0xff] %v2429
  %2479 = vst [vmem:[%s4 + $0x70] sm:$0xff] %v2430
  %2480 = vst [vmem:[%s4 + $0x78] sm:$0xff] %v2431
  %2481 = vst [vmem:[%s4 + $0x80] sm:$0xff] %v2432
  %2482 = vst [vmem:[%s4 + $0x88] sm:$0xff] %v2433
  %2483 = vst [vmem:[%s4 + $0x90] sm:$0xff] %v2434
  %2484 = vst [vmem:[%s4 + $0x98] sm:$0xff] %v2435
  %2485 = vst [vmem:[%s4 + $0xa0] sm:$0xff] %v2436
  %2486 = vst [vmem:[%s4 + $0xa8] sm:$0xff] %v2437
  %2487 = vst [vmem:[%s4 + $0xb0] sm:$0xff] %v2438
  %2488 = vst [vmem:[%s4 + $0xb8] sm:$0xff] %v2439
  %2489 = vst [vmem:[%s4 + $0xc0] sm:$0xff] %v2440
  %2490 = vst [vmem:[%s4 + $0xc8] sm:$0xff] %v2441
  %2491 = vst [vmem:[%s4 + $0xd0] sm:$0xff] %v2442
  %2492 = vst [vmem:[%s4 + $0xd8] sm:$0xff] %v2443
  %2493 = vst [vmem:[%s4 + $0xe0] sm:$0xff] %v2444
  %2494 = vst [vmem:[%s4 + $0xe8] sm:$0xff] %v2445
  %2495 = vst [vmem:[%s4 + $0xf0] sm:$0xff] %v2446
  %2496 = vst [vmem:[%s4 + $0xf8] sm:$0xff] %v2447
  %2497 = vst [vmem:[%s4 + $0x100] sm:$0xff] %v2448
  %2498 = vst [vmem:[%s4 + $0x108] sm:$0xff] %v2449
  %2499 = vst [vmem:[%s4 + $0x110] sm:$0xff] %v2450
  %2500 = vst [vmem:[%s4 + $0x118] sm:$0xff] %v2451
  %2501 = vst [vmem:[%s4 + $0x120] sm:$0xff] %v2452
  %2502 = vst [vmem:[%s4 + $0x128] sm:$0xff] %v2453
  %2503 = vst [vmem:[%s4 + $0x130] sm:$0xff] %v2454
  %2504 = vst [vmem:[%s4 + $0x138] sm:$0xff] %v2455
  %2505 = vst [vmem:[%s4 + $0x140] sm:$0xff] %v2456
  %2506 = vst [vmem:[%s4 + $0x148] sm:$0xff] %v2457
  %2507 = vst [vmem:[%s4 + $0x150] sm:$0xff] %v2458
  %2508 = vst [vmem:[%s4 + $0x158] sm:$0xff] %v2459
  %2509 = vst [vmem:[%s4 + $0x160] sm:$0xff] %v2460
  %2510 = vst [vmem:[%s4 + $0x168] sm:$0xff] %v2461
  %2511 = vst [vmem:[%s4 + $0x170] sm:$0xff] %v2462
  %2512 = vst [vmem:[%s4 + $0x178] sm:$0xff] %v2463
  %2513 = vst [vmem:[%s4 + $0x180] sm:$0xff] %v2464
  // Predicated region
  $region18: #{lenet_forward.3} parent=0 // pred_check
    _
  $region19: #{lenet_forward.3} parent=0 // pred_check_branch
    %2515 = sbr.rel (0) target = $region21
  $region20: #{lenet_forward.3} parent=0 // pred_region
    _
  $region21: #{lenet_forward.3} parent=0 // pred_fallthru
    _
  // Predicated region
  $region22: #{lenet_forward.3} parent=0 // pred_check
    _
  $region23: #{lenet_forward.3} parent=0 // pred_check_branch
    %2517 = sbr.rel (0) target = $region25
  $region24: #{lenet_forward.3} parent=0 // pred_region
    _
  $region25: #{lenet_forward.3} parent=0 // pred_fallthru
    _

// kernel: lenet_forward.4
$region0: #{lenet_forward.4}
  #allocation0 [shape = 'u32[]', space=smem, size = 0x4, offset = 0x4, fixed_abs, tag = 'smem constant byte address 0x4 - core index']
  #allocation1 [shape = 'u32[144,128]{1,0:T(1,128)}', space=vmem, size = 0x12000, scoped, tag = 'internal scratch']
  %s0 = inlined_call_operand.vmem [shape: f32[4,50,400], index: 0, kind: input, shape index: {}]
  %s1 = inlined_call_operand.vmem [shape: f32[400,128], index: 1, kind: input, shape index: {}]
  %s2 = inlined_call_operand.vmem [shape: f32[1,128], index: 2, kind: input, shape index: {}]
  %s3 = inlined_call_operand.vmem [shape: f32[1,128], index: 3, kind: input, shape index: {}]
  %s4 = inlined_call_operand.vmem [shape: f32[50,128], index: 4, kind: output, shape index: {}]
  %s5 = sld [smem:[#allocation0]]
  $region26: #{lenet_forward.4} parent=0
    _
  %s7 = ssub.s32 1, %s5
  %s8 = scalar_select 0, %s7, %s5
  // Predicated region
  $region2: #{lenet_forward.4} parent=0 // pred_check
    _
  $region3: #{lenet_forward.4} parent=0 // pred_check_branch
    %10 = sbr.rel (0) target = $region5
  $region4: #{lenet_forward.4} parent=0 // pred_region
    _
  $region5: #{lenet_forward.4} parent=0 // pred_fallthru
    _
  // Predicated region
  $region6: #{lenet_forward.4} parent=0 // pred_check
    _
  $region7: #{lenet_forward.4} parent=0 // pred_check_branch
    %12 = sbr.rel (0) target = $region9
  $region8: #{lenet_forward.4} parent=0 // pred_region
    _
  $region9: #{lenet_forward.4} parent=0 // pred_fallthru
    _
  // Predicated region
  $region10: #{lenet_forward.4} parent=0 // pred_check
    _
  $region11: #{lenet_forward.4} parent=0 // pred_check_branch
    %14 = sbr.rel (0) target = $region13
  $region12: #{lenet_forward.4} parent=0 // pred_region
    _
  $region13: #{lenet_forward.4} parent=0 // pred_fallthru
    _
  // Predicated region
  $region14: #{lenet_forward.4} parent=0 // pred_check
    _
  $region15: #{lenet_forward.4} parent=0 // pred_check_branch
    %16 = sbr.rel (0) target = $region17
  $region16: #{lenet_forward.4} parent=0 // pred_region
    _
  $region17: #{lenet_forward.4} parent=0 // pred_fallthru
    _
  %v17 = vld [vmem:[%s1] sm:$0xff]
  %v18 = vld [vmem:[%s1 + $0x8] sm:$0xff]
  %v19 = vld [vmem:[%s1 + $0x10] sm:$0xff]
  %v20 = vld [vmem:[%s1 + $0x18] sm:$0xff]
  %v21 = vld [vmem:[%s1 + $0x20] sm:$0xff]
  %v22 = vld [vmem:[%s1 + $0x28] sm:$0xff]
  %v23 = vld [vmem:[%s1 + $0x30] sm:$0xff]
  %v24 = vld [vmem:[%s1 + $0x38] sm:$0xff]
  %v25 = vld [vmem:[%s1 + $0x40] sm:$0xff]
  %v26 = vld [vmem:[%s1 + $0x48] sm:$0xff]
  %v27 = vld [vmem:[%s1 + $0x50] sm:$0xff]
  %v28 = vld [vmem:[%s1 + $0x58] sm:$0xff]
  %v29 = vld [vmem:[%s1 + $0x60] sm:$0xff]
  %v30 = vld [vmem:[%s1 + $0x68] sm:$0xff]
  %v31 = vld [vmem:[%s1 + $0x70] sm:$0xff]
  %v32 = vld [vmem:[%s1 + $0x78] sm:$0xff]
  %v33 = vld [vmem:[%s1 + $0x80] sm:$0xff]
  %v34 = vld [vmem:[%s1 + $0x88] sm:$0xff]
  %v35 = vld [vmem:[%s1 + $0x90] sm:$0xff]
  %v36 = vld [vmem:[%s1 + $0x98] sm:$0xff]
  %v37 = vld [vmem:[%s1 + $0xa0] sm:$0xff]
  %v38 = vld [vmem:[%s1 + $0xa8] sm:$0xff]
  %v39 = vld [vmem:[%s1 + $0xb0] sm:$0xff]
  %v40 = vld [vmem:[%s1 + $0xb8] sm:$0xff]
  %v41 = vld [vmem:[%s1 + $0xc0] sm:$0xff]
  %v42 = vld [vmem:[%s1 + $0xc8] sm:$0xff]
  %v43 = vld [vmem:[%s1 + $0xd0] sm:$0xff]
  %v44 = vld [vmem:[%s1 + $0xd8] sm:$0xff]
  %v45 = vld [vmem:[%s1 + $0xe0] sm:$0xff]
  %v46 = vld [vmem:[%s1 + $0xe8] sm:$0xff]
  %v47 = vld [vmem:[%s1 + $0xf0] sm:$0xff]
  %v48 = vld [vmem:[%s1 + $0xf8] sm:$0xff]
  %v49 = vld [vmem:[%s1 + $0x100] sm:$0xff]
  %v50 = vld [vmem:[%s1 + $0x108] sm:$0xff]
  %v51 = vld [vmem:[%s1 + $0x110] sm:$0xff]
  %v52 = vld [vmem:[%s1 + $0x118] sm:$0xff]
  %v53 = vld [vmem:[%s1 + $0x120] sm:$0xff]
  %v54 = vld [vmem:[%s1 + $0x128] sm:$0xff]
  %v55 = vld [vmem:[%s1 + $0x130] sm:$0xff]
  %v56 = vld [vmem:[%s1 + $0x138] sm:$0xff]
  %v57 = vld [vmem:[%s1 + $0x140] sm:$0xff]
  %v58 = vld [vmem:[%s1 + $0x148] sm:$0xff]
  %v59 = vld [vmem:[%s1 + $0x150] sm:$0xff]
  %v60 = vld [vmem:[%s1 + $0x158] sm:$0xff]
  %v61 = vld [vmem:[%s1 + $0x160] sm:$0xff]
  %v62 = vld [vmem:[%s1 + $0x168] sm:$0xff]
  %v63 = vld [vmem:[%s1 + $0x170] sm:$0xff]
  %v64 = vld [vmem:[%s1 + $0x178] sm:$0xff]
  %v65 = vld [vmem:[%s1 + $0x180] sm:$0xff]
  %v66 = vld [vmem:[%s1 + $0x188] sm:$0xff]
  %v67 = vld [vmem:[%s2] sm:$0x1]
  %v68 = vld [vmem:[%s0] sm:$0xff]
  %v69 = vld [vmem:[%s0 + $0x8] sm:$0xff]
  %v70 = vld [vmem:[%s0 + $0x10] sm:$0xff]
  %v71 = vld [vmem:[%s0 + $0x18] sm:$0xff]
  %v72 = vld [vmem:[%s0 + $0x20] sm:$0xff]
  %v73 = vld [vmem:[%s0 + $0x28] sm:$0xff]
  %v74 = vld [vmem:[%s0 + $0x30] sm:$0xff]
  %v75 = vld [vmem:[%s0 + $0x38] sm:$0xff]
  %v76 = vld [vmem:[%s0 + $0x40] sm:$0xff]
  %v77 = vld [vmem:[%s0 + $0x48] sm:$0xff]
  %v78 = vld [vmem:[%s0 + $0x50] sm:$0xff]
  %v79 = vld [vmem:[%s0 + $0x58] sm:$0xff]
  %v80 = vld [vmem:[%s0 + $0x60] sm:$0xff]
  %v81 = vld [vmem:[%s0 + $0x68] sm:$0xff]
  %v82 = vld [vmem:[%s0 + $0x70] sm:$0xff]
  %v83 = vld [vmem:[%s0 + $0x78] sm:$0xff]
  %v84 = vld [vmem:[%s0 + $0x80] sm:$0xff]
  %v85 = vld [vmem:[%s0 + $0x88] sm:$0xff]
  %v86 = vld [vmem:[%s0 + $0x90] sm:$0xff]
  %v87 = vld [vmem:[%s0 + $0x98] sm:$0xff]
  %v88 = vld [vmem:[%s0 + $0xa0] sm:$0xff]
  %v89 = vld [vmem:[%s0 + $0xa8] sm:$0xff]
  %v90 = vld [vmem:[%s0 + $0xb0] sm:$0xff]
  %v91 = vld [vmem:[%s0 + $0xb8] sm:$0xff]
  %v92 = vld [vmem:[%s0 + $0xc0] sm:$0x3]
  %v93 = vld [vmem:[%s0 + $0xc8] sm:$0x3]
  %v94 = vld [vmem:[%s0 + $0xd0] sm:$0x3]
  %v95 = vld [vmem:[%s0 + $0xd8] sm:$0x3]
  %v97 = vlaneseq
  %v98 = vshrl.u32 %v97, 7
  %v99 = vsub.s32 0, %v98
  %v100 = vrot.slane %v67, %v99
  %vm102 = vcmask 130048
  %v104 = vsel %vm102, %v71, 0
  %v107 = vsel %vm102, %v75, 0
  %v110 = vsel %vm102, %v79, 0
  %v113 = vsel %vm102, %v83, 0
  %v116 = vsel %vm102, %v87, 0
  %v119 = vsel %vm102, %v91, 0
  %v122 = vsel %vm102, %v95, 0
  %124 = vmatprep.subr.mxu0 0.0
  %125 = vmatpush1.msra.mxu0 %v17
  %126 = vmatprep.subr.mxu0 0.0
  %127 = vmatpush1.msra.mxu0 %v18
  %128 = vmatprep.subr.mxu0 0.0
  %129 = vmatpush1.msra.mxu0 %v19
  %130 = vmatprep.subr.mxu0 0.0
  %131 = vmatpush1.msra.mxu0 %v20
  %132 = vmatprep.subr.mxu0 0.0
  %133 = vmatpush1.msra.mxu0 %v21
  %134 = vmatprep.subr.mxu0 0.0
  %135 = vmatpush1.msra.mxu0 %v22
  %136 = vmatprep.subr.mxu0 0.0
  %137 = vmatpush1.msra.mxu0 %v23
  %138 = vmatprep.subr.mxu0 0.0
  %139 = vmatpush1.msra.mxu0 %v24
  %140 = vmatprep.subr.mxu0 0.0
  %141 = vmatpush1.msra.mxu0 %v25
  %142 = vmatprep.subr.mxu0 0.0
  %143 = vmatpush1.msra.mxu0 %v26
  %144 = vmatprep.subr.mxu0 0.0
  %145 = vmatpush1.msra.mxu0 %v27
  %146 = vmatprep.subr.mxu0 0.0
  %147 = vmatpush1.msra.mxu0 %v28
  %148 = vmatprep.subr.mxu0 0.0
  %149 = vmatpush1.msra.mxu0 %v29
  %150 = vmatprep.subr.mxu0 0.0
  %151 = vmatpush1.msra.mxu0 %v30
  %152 = vmatprep.subr.mxu0 0.0
  %153 = vmatpush1.msra.mxu0 %v31
  %154 = vmatprep.subr.mxu0 0.0
  %155 = vmatpush1.msra.mxu0 %v32
  %156 = vmatprep.subr.mxu0 0.0
  %157 = vmatpush1.msra.mxu0 %v33
  %158 = vmatprep.subr.mxu0 0.0
  %159 = vmatpush1.msra.mxu0 %v34
  %160 = vmatprep.subr.mxu0 0.0
  %161 = vmatpush1.msra.mxu0 %v35
  %162 = vmatprep.subr.mxu0 0.0
  %163 = vmatpush1.msra.mxu0 %v36
  %164 = vmatprep.subr.mxu0 0.0
  %165 = vmatpush1.msra.mxu0 %v37
  %166 = vmatprep.subr.mxu0 0.0
  %167 = vmatpush1.msra.mxu0 %v38
  %168 = vmatprep.subr.mxu0 0.0
  %169 = vmatpush1.msra.mxu0 %v39
  %170 = vmatprep.subr.mxu0 0.0
  %171 = vmatpush1.msra.mxu0 %v40
  %172 = vmatprep.subr.mxu0 0.0
  %173 = vmatpush1.msra.mxu0 %v41
  %174 = vmatprep.subr.mxu0 0.0
  %175 = vmatpush1.msra.mxu0 %v42
  %176 = vmatprep.subr.mxu0 0.0
  %177 = vmatpush1.msra.mxu0 %v43
  %178 = vmatprep.subr.mxu0 0.0
  %179 = vmatpush1.msra.mxu0 %v44
  %180 = vmatprep.subr.mxu0 0.0
  %181 = vmatpush1.msra.mxu0 %v45
  %182 = vmatprep.subr.mxu0 0.0
  %183 = vmatpush1.msra.mxu0 %v46
  %184 = vmatprep.subr.mxu0 0.0
  %185 = vmatpush1.msra.mxu0 %v47
  %186 = vmatprep.subr.mxu0 0.0
  %187 = vmatpush1.msra.mxu0 %v48
  %188 = vmatprep.mubr.f32.mxu0 %v69
  %189 = vmatmul.mubr.f32.gmra.mrb[0].mxu0 %v68
  %v190 = vpop.f32.mrb[0].mxu0
  %v191 = vadd.f32 %v100, %v190
  %v192 = vpop.f32.mrb[0].mxu0
  %193 = vmatprep.mubr.f32.mxu0 %v73
  %194 = vmatmul.mubr.f32.gmra.mrb[0].mxu0 %v72
  %v195 = vpop.f32.mrb[0].mxu0
  %v196 = vadd.f32 %v100, %v195
  %v197 = vpop.f32.mrb[0].mxu0
  %198 = vmatprep.mubr.f32.mxu0 %v77
  %199 = vmatmul.mubr.f32.gmra.mrb[0].mxu0 %v76
  %v200 = vpop.f32.mrb[0].mxu0
  %v201 = vadd.f32 %v100, %v200
  %v202 = vpop.f32.mrb[0].mxu0
  %203 = vmatprep.mubr.f32.mxu0 %v81
  %204 = vmatmul.mubr.f32.gmra.mrb[0].mxu0 %v80
  %v205 = vpop.f32.mrb[0].mxu0
  %v206 = vadd.f32 %v100, %v205
  %v207 = vpop.f32.mrb[0].mxu0
  %208 = vmatprep.mubr.f32.mxu0 %v85
  %209 = vmatmul.mubr.f32.gmra.mrb[0].mxu0 %v84
  %v210 = vpop.f32.mrb[0].mxu0
  %v211 = vadd.f32 %v100, %v210
  %v212 = vpop.f32.mrb[0].mxu0
  %213 = vmatprep.mubr.f32.mxu0 %v89
  %214 = vmatmul.mubr.f32.gmra.mrb[0].mxu0 %v88
  %v215 = vpop.f32.mrb[0].mxu0
  %v216 = vadd.f32 %v100, %v215
  %v217 = vpop.f32.mrb[0].mxu0
  %218 = vmatprep.mubr.f32.mxu0 %v93
  %219 = vmatmul.mubr.f32.gmra.mrb[0].mxu0 %v92
  %v220 = vpop.f32.mrb[0].mxu0
  %v221 = vadd.f32 %v100, %v220
  %v222 = vpop.f32.mrb[0].mxu0
  %223 = vdwg.mxu0
  %224 = vmatprep.subr.mxu0 0.0
  %225 = vmatpush1.msra.mxu0 %v49
  %226 = vmatprep.subr.mxu0 0.0
  %227 = vmatpush1.msra.mxu0 %v50
  %228 = vmatprep.subr.mxu0 0.0
  %229 = vmatpush1.msra.mxu0 %v51
  %230 = vmatprep.subr.mxu0 0.0
  %231 = vmatpush1.msra.mxu0 %v52
  %232 = vmatprep.subr.mxu0 0.0
  %233 = vmatpush1.msra.mxu0 %v53
  %234 = vmatprep.subr.mxu0 0.0
  %235 = vmatpush1.msra.mxu0 %v54
  %236 = vmatprep.subr.mxu0 0.0
  %237 = vmatpush1.msra.mxu0 %v55
  %238 = vmatprep.subr.mxu0 0.0
  %239 = vmatpush1.msra.mxu0 %v56
  %240 = vmatprep.subr.mxu0 0.0
  %241 = vmatpush1.msra.mxu0 %v57
  %242 = vmatprep.subr.mxu0 0.0
  %243 = vmatpush1.msra.mxu0 %v58
  %244 = vmatprep.subr.mxu0 0.0
  %245 = vmatpush1.msra.mxu0 %v59
  %246 = vmatprep.subr.mxu0 0.0
  %247 = vmatpush1.msra.mxu0 %v60
  %248 = vmatprep.subr.mxu0 0.0
  %249 = vmatpush1.msra.mxu0 %v61
  %250 = vmatprep.subr.mxu0 0.0
  %251 = vmatpush1.msra.mxu0 %v62
  %252 = vmatprep.subr.mxu0 0.0
  %253 = vmatpush1.msra.mxu0 %v63
  %254 = vmatprep.subr.mxu0 0.0
  %255 = vmatpush1.msra.mxu0 %v64
  %256 = vmatprep.subr.mxu0 0.0
  %257 = vmatpush1.msra.mxu0 %v65
  %258 = vmatprep.subr.mxu0 0.0
  %259 = vmatpush1.msra.mxu0 %v66
  %260 = vmatprep.subr.mxu0 0.0
  %261 = vmatpush1.msra.mxu0 0.0
  %262 = vmatprep.subr.mxu0 0.0
  %263 = vmatpush1.msra.mxu0 0.0
  %264 = vmatprep.subr.mxu0 0.0
  %265 = vmatpush1.msra.mxu0 0.0
  %266 = vmatprep.subr.mxu0 0.0
  %267 = vmatpush1.msra.mxu0 0.0
  %268 = vmatprep.subr.mxu0 0.0
  %269 = vmatpush1.msra.mxu0 0.0
  %270 = vmatprep.subr.mxu0 0.0
  %271 = vmatpush1.msra.mxu0 0.0
  %272 = vmatprep.subr.mxu0 0.0
  %273 = vmatpush1.msra.mxu0 0.0
  %274 = vmatprep.subr.mxu0 0.0
  %275 = vmatpush1.msra.mxu0 0.0
  %276 = vmatprep.subr.mxu0 0.0
  %277 = vmatpush1.msra.mxu0 0.0
  %278 = vmatprep.subr.mxu0 0.0
  %279 = vmatpush1.msra.mxu0 0.0
  %280 = vmatprep.subr.mxu0 0.0
  %281 = vmatpush1.msra.mxu0 0.0
  %282 = vmatprep.subr.mxu0 0.0
  %283 = vmatpush1.msra.mxu0 0.0
  %284 = vmatprep.subr.mxu0 0.0
  %285 = vmatpush1.msra.mxu0 0.0
  %286 = vmatprep.subr.mxu0 0.0
  %287 = vmatpush1.msra.mxu0 0.0
  %288 = vmatprep.mubr.f32.mxu0 %v104
  %289 = vmatmul.mubr.f32.gmra.mrb[0].mxu0 %v70
  %v290 = vpop.f32.mrb[0].mxu0
  %v291 = vadd.f32 %v191, %v290
  %v292 = vpop.f32.mrb[0].mxu0
  %293 = vmatprep.mubr.f32.mxu0 %v107
  %294 = vmatmul.mubr.f32.gmra.mrb[0].mxu0 %v74
  %v295 = vpop.f32.mrb[0].mxu0
  %v296 = vadd.f32 %v196, %v295
  %v297 = vpop.f32.mrb[0].mxu0
  %298 = vmatprep.mubr.f32.mxu0 %v110
  %299 = vmatmul.mubr.f32.gmra.mrb[0].mxu0 %v78
  %v300 = vpop.f32.mrb[0].mxu0
  %v301 = vadd.f32 %v201, %v300
  %v302 = vpop.f32.mrb[0].mxu0
  %303 = vmatprep.mubr.f32.mxu0 %v113
  %304 = vmatmul.mubr.f32.gmra.mrb[0].mxu0 %v82
  %v305 = vpop.f32.mrb[0].mxu0
  %v306 = vadd.f32 %v206, %v305
  %v307 = vpop.f32.mrb[0].mxu0
  %308 = vmatprep.mubr.f32.mxu0 %v116
  %309 = vmatmul.mubr.f32.gmra.mrb[0].mxu0 %v86
  %v310 = vpop.f32.mrb[0].mxu0
  %v311 = vadd.f32 %v211, %v310
  %v312 = vpop.f32.mrb[0].mxu0
  %313 = vmatprep.mubr.f32.mxu0 %v119
  %314 = vmatmul.mubr.f32.gmra.mrb[0].mxu0 %v90
  %v315 = vpop.f32.mrb[0].mxu0
  %v316 = vadd.f32 %v216, %v315
  %v317 = vpop.f32.mrb[0].mxu0
  %318 = vmatprep.mubr.f32.mxu0 %v122
  %319 = vmatmul.mubr.f32.gmra.mrb[0].mxu0 %v94
  %v320 = vpop.f32.mrb[0].mxu0
  %v321 = vadd.f32 %v221, %v320
  %v322 = vpop.f32.mrb[0].mxu0
  %323 = vdwg.mxu0
  %v324 = vmax.f32 %v291, 0.0
  %v325 = vmax.f32 %v296, 0.0
  %v326 = vmax.f32 %v301, 0.0
  %v327 = vmax.f32 %v306, 0.0
  %v328 = vmax.f32 %v311, 0.0
  %v329 = vmax.f32 %v316, 0.0
  %v330 = vmax.f32 %v321, 0.0
  %s331 = scalar_lea.vmem %s0, 224
  %v332 = vld [vmem:[%s331] sm:$0xff]
  %v333 = vld [vmem:[%s331 + $0x8] sm:$0xff]
  %v334 = vld [vmem:[%s331 + $0x10] sm:$0xff]
  %v335 = vld [vmem:[%s331 + $0x18] sm:$0xff]
  %v336 = vld [vmem:[%s331 + $0x20] sm:$0xff]
  %v337 = vld [vmem:[%s331 + $0x28] sm:$0xff]
  %v338 = vld [vmem:[%s331 + $0x30] sm:$0xff]
  %v339 = vld [vmem:[%s331 + $0x38] sm:$0xff]
  %v340 = vld [vmem:[%s331 + $0x40] sm:$0xff]
  %v341 = vld [vmem:[%s331 + $0x48] sm:$0xff]
  %v342 = vld [vmem:[%s331 + $0x50] sm:$0xff]
  %v343 = vld [vmem:[%s331 + $0x58] sm:$0xff]
  %v344 = vld [vmem:[%s331 + $0x60] sm:$0xff]
  %v345 = vld [vmem:[%s331 + $0x68] sm:$0xff]
  %v346 = vld [vmem:[%s331 + $0x70] sm:$0xff]
  %v347 = vld [vmem:[%s331 + $0x78] sm:$0xff]
  %v348 = vld [vmem:[%s331 + $0x80] sm:$0xff]
  %v349 = vld [vmem:[%s331 + $0x88] sm:$0xff]
  %v350 = vld [vmem:[%s331 + $0x90] sm:$0xff]
  %v351 = vld [vmem:[%s331 + $0x98] sm:$0xff]
  %v352 = vld [vmem:[%s331 + $0xa0] sm:$0xff]
  %v353 = vld [vmem:[%s331 + $0xa8] sm:$0xff]
  %v354 = vld [vmem:[%s331 + $0xb0] sm:$0xff]
  %v355 = vld [vmem:[%s331 + $0xb8] sm:$0xff]
  %v356 = vld [vmem:[%s331 + $0xc0] sm:$0x3]
  %v357 = vld [vmem:[%s331 + $0xc8] sm:$0x3]
  %v358 = vld [vmem:[%s331 + $0xd0] sm:$0x3]
  %v359 = vld [vmem:[%s331 + $0xd8] sm:$0x3]
  %v361 = vsel %vm102, %v335, 0
  %v364 = vsel %vm102, %v339, 0
  %v367 = vsel %vm102, %v343, 0
  %v370 = vsel %vm102, %v347, 0
  %v373 = vsel %vm102, %v351, 0
  %v376 = vsel %vm102, %v355, 0
  %v379 = vsel %vm102, %v359, 0
  %381 = vmatprep.subr.mxu0 0.0
  %382 = vmatpush1.msra.mxu0 %v17
  %383 = vmatprep.subr.mxu0 0.0
  %384 = vmatpush1.msra.mxu0 %v18
  %385 = vmatprep.subr.mxu0 0.0
  %386 = vmatpush1.msra.mxu0 %v19
  %387 = vmatprep.subr.mxu0 0.0
  %388 = vmatpush1.msra.mxu0 %v20
  %389 = vmatprep.subr.mxu0 0.0
  %390 = vmatpush1.msra.mxu0 %v21
  %391 = vmatprep.subr.mxu0 0.0
  %392 = vmatpush1.msra.mxu0 %v22
  %393 = vmatprep.subr.mxu0 0.0
  %394 = vmatpush1.msra.mxu0 %v23
  %395 = vmatprep.subr.mxu0 0.0
  %396 = vmatpush1.msra.mxu0 %v24
  %397 = vmatprep.subr.mxu0 0.0
  %398 = vmatpush1.msra.mxu0 %v25
  %399 = vmatprep.subr.mxu0 0.0
  %400 = vmatpush1.msra.mxu0 %v26
  %401 = vmatprep.subr.mxu0 0.0
  %402 = vmatpush1.msra.mxu0 %v27
  %403 = vmatprep.subr.mxu0 0.0
  %404 = vmatpush1.msra.mxu0 %v28
  %405 = vmatprep.subr.mxu0 0.0
  %406 = vmatpush1.msra.mxu0 %v29
  %407 = vmatprep.subr.mxu0 0.0
  %408 = vmatpush1.msra.mxu0 %v30
  %409 = vmatprep.subr.mxu0 0.0
  %410 = vmatpush1.msra.mxu0 %v31
  %411 = vmatprep.subr.mxu0 0.0
  %412 = vmatpush1.msra.mxu0 %v32
  %413 = vmatprep.subr.mxu0 0.0
  %414 = vmatpush1.msra.mxu0 %v33
  %415 = vmatprep.subr.mxu0 0.0
  %416 = vmatpush1.msra.mxu0 %v34
  %417 = vmatprep.subr.mxu0 0.0
  %418 = vmatpush1.msra.mxu0 %v35
  %419 = vmatprep.subr.mxu0 0.0
  %420 = vmatpush1.msra.mxu0 %v36
  %421 = vmatprep.subr.mxu0 0.0
  %422 = vmatpush1.msra.mxu0 %v37
  %423 = vmatprep.subr.mxu0 0.0
  %424 = vmatpush1.msra.mxu0 %v38
  %425 = vmatprep.subr.mxu0 0.0
  %426 = vmatpush1.msra.mxu0 %v39
  %427 = vmatprep.subr.mxu0 0.0
  %428 = vmatpush1.msra.mxu0 %v40
  %429 = vmatprep.subr.mxu0 0.0
  %430 = vmatpush1.msra.mxu0 %v41
  %431 = vmatprep.subr.mxu0 0.0
  %432 = vmatpush1.msra.mxu0 %v42
  %433 = vmatprep.subr.mxu0 0.0
  %434 = vmatpush1.msra.mxu0 %v43
  %435 = vmatprep.subr.mxu0 0.0
  %436 = vmatpush1.msra.mxu0 %v44
  %437 = vmatprep.subr.mxu0 0.0
  %438 = vmatpush1.msra.mxu0 %v45
  %439 = vmatprep.subr.mxu0 0.0
  %440 = vmatpush1.msra.mxu0 %v46
  %441 = vmatprep.subr.mxu0 0.0
  %442 = vmatpush1.msra.mxu0 %v47
  %443 = vmatprep.subr.mxu0 0.0
  %444 = vmatpush1.msra.mxu0 %v48
  %445 = vmatprep.mubr.f32.mxu0 %v333
  %446 = vmatmul.mubr.f32.gmra.mrb[0].mxu0 %v332
  %v447 = vpop.f32.mrb[0].mxu0
  %v448 = vadd.f32 %v100, %v447
  %v449 = vpop.f32.mrb[0].mxu0
  %450 = vmatprep.mubr.f32.mxu0 %v337
  %451 = vmatmul.mubr.f32.gmra.mrb[0].mxu0 %v336
  %v452 = vpop.f32.mrb[0].mxu0
  %v453 = vadd.f32 %v100, %v452
  %v454 = vpop.f32.mrb[0].mxu0
  %455 = vmatprep.mubr.f32.mxu0 %v341
  %456 = vmatmul.mubr.f32.gmra.mrb[0].mxu0 %v340
  %v457 = vpop.f32.mrb[0].mxu0
  %v458 = vadd.f32 %v100, %v457
  %v459 = vpop.f32.mrb[0].mxu0
  %460 = vmatprep.mubr.f32.mxu0 %v345
  %461 = vmatmul.mubr.f32.gmra.mrb[0].mxu0 %v344
  %v462 = vpop.f32.mrb[0].mxu0
  %v463 = vadd.f32 %v100, %v462
  %v464 = vpop.f32.mrb[0].mxu0
  %465 = vmatprep.mubr.f32.mxu0 %v349
  %466 = vmatmul.mubr.f32.gmra.mrb[0].mxu0 %v348
  %v467 = vpop.f32.mrb[0].mxu0
  %v468 = vadd.f32 %v100, %v467
  %v469 = vpop.f32.mrb[0].mxu0
  %470 = vmatprep.mubr.f32.mxu0 %v353
  %471 = vmatmul.mubr.f32.gmra.mrb[0].mxu0 %v352
  %v472 = vpop.f32.mrb[0].mxu0
  %v473 = vadd.f32 %v100, %v472
  %v474 = vpop.f32.mrb[0].mxu0
  %475 = vmatprep.mubr.f32.mxu0 %v357
  %476 = vmatmul.mubr.f32.gmra.mrb[0].mxu0 %v356
  %v477 = vpop.f32.mrb[0].mxu0
  %v478 = vadd.f32 %v100, %v477
  %v479 = vpop.f32.mrb[0].mxu0
  %480 = vdwg.mxu0
  %481 = vmatprep.subr.mxu0 0.0
  %482 = vmatpush1.msra.mxu0 %v49
  %483 = vmatprep.subr.mxu0 0.0
  %484 = vmatpush1.msra.mxu0 %v50
  %485 = vmatprep.subr.mxu0 0.0
  %486 = vmatpush1.msra.mxu0 %v51
  %487 = vmatprep.subr.mxu0 0.0
  %488 = vmatpush1.msra.mxu0 %v52
  %489 = vmatprep.subr.mxu0 0.0
  %490 = vmatpush1.msra.mxu0 %v53
  %491 = vmatprep.subr.mxu0 0.0
  %492 = vmatpush1.msra.mxu0 %v54
  %493 = vmatprep.subr.mxu0 0.0
  %494 = vmatpush1.msra.mxu0 %v55
  %495 = vmatprep.subr.mxu0 0.0
  %496 = vmatpush1.msra.mxu0 %v56
  %497 = vmatprep.subr.mxu0 0.0
  %498 = vmatpush1.msra.mxu0 %v57
  %499 = vmatprep.subr.mxu0 0.0
  %500 = vmatpush1.msra.mxu0 %v58
  %501 = vmatprep.subr.mxu0 0.0
  %502 = vmatpush1.msra.mxu0 %v59
  %503 = vmatprep.subr.mxu0 0.0
  %504 = vmatpush1.msra.mxu0 %v60
  %505 = vmatprep.subr.mxu0 0.0
  %506 = vmatpush1.msra.mxu0 %v61
  %507 = vmatprep.subr.mxu0 0.0
  %508 = vmatpush1.msra.mxu0 %v62
  %509 = vmatprep.subr.mxu0 0.0
  %510 = vmatpush1.msra.mxu0 %v63
  %511 = vmatprep.subr.mxu0 0.0
  %512 = vmatpush1.msra.mxu0 %v64
  %513 = vmatprep.subr.mxu0 0.0
  %514 = vmatpush1.msra.mxu0 %v65
  %515 = vmatprep.subr.mxu0 0.0
  %516 = vmatpush1.msra.mxu0 %v66
  %517 = vmatprep.subr.mxu0 0.0
  %518 = vmatpush1.msra.mxu0 0.0
  %519 = vmatprep.subr.mxu0 0.0
  %520 = vmatpush1.msra.mxu0 0.0
  %521 = vmatprep.subr.mxu0 0.0
  %522 = vmatpush1.msra.mxu0 0.0
  %523 = vmatprep.subr.mxu0 0.0
  %524 = vmatpush1.msra.mxu0 0.0
  %525 = vmatprep.subr.mxu0 0.0
  %526 = vmatpush1.msra.mxu0 0.0
  %527 = vmatprep.subr.mxu0 0.0
  %528 = vmatpush1.msra.mxu0 0.0
  %529 = vmatprep.subr.mxu0 0.0
  %530 = vmatpush1.msra.mxu0 0.0
  %531 = vmatprep.subr.mxu0 0.0
  %532 = vmatpush1.msra.mxu0 0.0
  %533 = vmatprep.subr.mxu0 0.0
  %534 = vmatpush1.msra.mxu0 0.0
  %535 = vmatprep.subr.mxu0 0.0
  %536 = vmatpush1.msra.mxu0 0.0
  %537 = vmatprep.subr.mxu0 0.0
  %538 = vmatpush1.msra.mxu0 0.0
  %539 = vmatprep.subr.mxu0 0.0
  %540 = vmatpush1.msra.mxu0 0.0
  %541 = vmatprep.subr.mxu0 0.0
  %542 = vmatpush1.msra.mxu0 0.0
  %543 = vmatprep.subr.mxu0 0.0
  %544 = vmatpush1.msra.mxu0 0.0
  %545 = vmatprep.mubr.f32.mxu0 %v361
  %546 = vmatmul.mubr.f32.gmra.mrb[0].mxu0 %v334
  %v547 = vpop.f32.mrb[0].mxu0
  %v548 = vadd.f32 %v448, %v547
  %v549 = vpop.f32.mrb[0].mxu0
  %550 = vmatprep.mubr.f32.mxu0 %v364
  %551 = vmatmul.mubr.f32.gmra.mrb[0].mxu0 %v338
  %v552 = vpop.f32.mrb[0].mxu0
  %v553 = vadd.f32 %v453, %v552
  %v554 = vpop.f32.mrb[0].mxu0
  %555 = vmatprep.mubr.f32.mxu0 %v367
  %556 = vmatmul.mubr.f32.gmra.mrb[0].mxu0 %v342
  %v557 = vpop.f32.mrb[0].mxu0
  %v558 = vadd.f32 %v458, %v557
  %v559 = vpop.f32.mrb[0].mxu0
  %560 = vmatprep.mubr.f32.mxu0 %v370
  %561 = vmatmul.mubr.f32.gmra.mrb[0].mxu0 %v346
  %v562 = vpop.f32.mrb[0].mxu0
  %v563 = vadd.f32 %v463, %v562
  %v564 = vpop.f32.mrb[0].mxu0
  %565 = vmatprep.mubr.f32.mxu0 %v373
  %566 = vmatmul.mubr.f32.gmra.mrb[0].mxu0 %v350
  %v567 = vpop.f32.mrb[0].mxu0
  %v568 = vadd.f32 %v468, %v567
  %v569 = vpop.f32.mrb[0].mxu0
  %570 = vmatprep.mubr.f32.mxu0 %v376
  %571 = vmatmul.mubr.f32.gmra.mrb[0].mxu0 %v354
  %v572 = vpop.f32.mrb[0].mxu0
  %v573 = vadd.f32 %v473, %v572
  %v574 = vpop.f32.mrb[0].mxu0
  %575 = vmatprep.mubr.f32.mxu0 %v379
  %576 = vmatmul.mubr.f32.gmra.mrb[0].mxu0 %v358
  %v577 = vpop.f32.mrb[0].mxu0
  %v578 = vadd.f32 %v478, %v577
  %v579 = vpop.f32.mrb[0].mxu0
  %580 = vdwg.mxu0
  %v581 = vmax.f32 %v548, 0.0
  %v582 = vmax.f32 %v553, 0.0
  %v583 = vmax.f32 %v558, 0.0
  %v584 = vmax.f32 %v563, 0.0
  %v585 = vmax.f32 %v568, 0.0
  %v586 = vmax.f32 %v573, 0.0
  %v587 = vmax.f32 %v578, 0.0
  %v588 = vmax.f32 %v324, %v581
  %v589 = vmax.f32 %v325, %v582
  %v590 = vmax.f32 %v326, %v583
  %v591 = vmax.f32 %v327, %v584
  %v592 = vmax.f32 %v328, %v585
  %v593 = vmax.f32 %v329, %v586
  %v594 = vmax.f32 %v330, %v587
  %s595 = scalar_lea.vmem %s0, 448
  %v596 = vld [vmem:[%s595] sm:$0xff]
  %v597 = vld [vmem:[%s595 + $0x8] sm:$0xff]
  %v598 = vld [vmem:[%s595 + $0x10] sm:$0xff]
  %v599 = vld [vmem:[%s595 + $0x18] sm:$0xff]
  %v600 = vld [vmem:[%s595 + $0x20] sm:$0xff]
  %v601 = vld [vmem:[%s595 + $0x28] sm:$0xff]
  %v602 = vld [vmem:[%s595 + $0x30] sm:$0xff]
  %v603 = vld [vmem:[%s595 + $0x38] sm:$0xff]
  %v604 = vld [vmem:[%s595 + $0x40] sm:$0xff]
  %v605 = vld [vmem:[%s595 + $0x48] sm:$0xff]
  %v606 = vld [vmem:[%s595 + $0x50] sm:$0xff]
  %v607 = vld [vmem:[%s595 + $0x58] sm:$0xff]
  %v608 = vld [vmem:[%s595 + $0x60] sm:$0xff]
  %v609 = vld [vmem:[%s595 + $0x68] sm:$0xff]
  %v610 = vld [vmem:[%s595 + $0x70] sm:$0xff]
  %v611 = vld [vmem:[%s595 + $0x78] sm:$0xff]
  %v612 = vld [vmem:[%s595 + $0x80] sm:$0xff]
  %v613 = vld [vmem:[%s595 + $0x88] sm:$0xff]
  %v614 = vld [vmem:[%s595 + $0x90] sm:$0xff]
  %v615 = vld [vmem:[%s595 + $0x98] sm:$0xff]
  %v616 = vld [vmem:[%s595 + $0xa0] sm:$0xff]
  %v617 = vld [vmem:[%s595 + $0xa8] sm:$0xff]
  %v618 = vld [vmem:[%s595 + $0xb0] sm:$0xff]
  %v619 = vld [vmem:[%s595 + $0xb8] sm:$0xff]
  %v620 = vld [vmem:[%s595 + $0xc0] sm:$0x3]
  %v621 = vld [vmem:[%s595 + $0xc8] sm:$0x3]
  %v622 = vld [vmem:[%s595 + $0xd0] sm:$0x3]
  %v623 = vld [vmem:[%s595 + $0xd8] sm:$0x3]
  %v625 = vsel %vm102, %v599, 0
  %v628 = vsel %vm102, %v603, 0
  %v631 = vsel %vm102, %v607, 0
  %v634 = vsel %vm102, %v611, 0
  %v637 = vsel %vm102, %v615, 0
  %v640 = vsel %vm102, %v619, 0
  %v643 = vsel %vm102, %v623, 0
  %645 = vmatprep.subr.mxu0 0.0
  %646 = vmatpush1.msra.mxu0 %v17
  %647 = vmatprep.subr.mxu0 0.0
  %648 = vmatpush1.msra.mxu0 %v18
  %649 = vmatprep.subr.mxu0 0.0
  %650 = vmatpush1.msra.mxu0 %v19
  %651 = vmatprep.subr.mxu0 0.0
  %652 = vmatpush1.msra.mxu0 %v20
  %653 = vmatprep.subr.mxu0 0.0
  %654 = vmatpush1.msra.mxu0 %v21
  %655 = vmatprep.subr.mxu0 0.0
  %656 = vmatpush1.msra.mxu0 %v22
  %657 = vmatprep.subr.mxu0 0.0
  %658 = vmatpush1.msra.mxu0 %v23
  %659 = vmatprep.subr.mxu0 0.0
  %660 = vmatpush1.msra.mxu0 %v24
  %661 = vmatprep.subr.mxu0 0.0
  %662 = vmatpush1.msra.mxu0 %v25
  %663 = vmatprep.subr.mxu0 0.0
  %664 = vmatpush1.msra.mxu0 %v26
  %665 = vmatprep.subr.mxu0 0.0
  %666 = vmatpush1.msra.mxu0 %v27
  %667 = vmatprep.subr.mxu0 0.0
  %668 = vmatpush1.msra.mxu0 %v28
  %669 = vmatprep.subr.mxu0 0.0
  %670 = vmatpush1.msra.mxu0 %v29
  %671 = vmatprep.subr.mxu0 0.0
  %672 = vmatpush1.msra.mxu0 %v30
  %673 = vmatprep.subr.mxu0 0.0
  %674 = vmatpush1.msra.mxu0 %v31
  %675 = vmatprep.subr.mxu0 0.0
  %676 = vmatpush1.msra.mxu0 %v32
  %677 = vmatprep.subr.mxu0 0.0
  %678 = vmatpush1.msra.mxu0 %v33
  %679 = vmatprep.subr.mxu0 0.0
  %680 = vmatpush1.msra.mxu0 %v34
  %681 = vmatprep.subr.mxu0 0.0
  %682 = vmatpush1.msra.mxu0 %v35
  %683 = vmatprep.subr.mxu0 0.0
  %684 = vmatpush1.msra.mxu0 %v36
  %685 = vmatprep.subr.mxu0 0.0
  %686 = vmatpush1.msra.mxu0 %v37
  %687 = vmatprep.subr.mxu0 0.0
  %688 = vmatpush1.msra.mxu0 %v38
  %689 = vmatprep.subr.mxu0 0.0
  %690 = vmatpush1.msra.mxu0 %v39
  %691 = vmatprep.subr.mxu0 0.0
  %692 = vmatpush1.msra.mxu0 %v40
  %693 = vmatprep.subr.mxu0 0.0
  %694 = vmatpush1.msra.mxu0 %v41
  %695 = vmatprep.subr.mxu0 0.0
  %696 = vmatpush1.msra.mxu0 %v42
  %697 = vmatprep.subr.mxu0 0.0
  %698 = vmatpush1.msra.mxu0 %v43
  %699 = vmatprep.subr.mxu0 0.0
  %700 = vmatpush1.msra.mxu0 %v44
  %701 = vmatprep.subr.mxu0 0.0
  %702 = vmatpush1.msra.mxu0 %v45
  %703 = vmatprep.subr.mxu0 0.0
  %704 = vmatpush1.msra.mxu0 %v46
  %705 = vmatprep.subr.mxu0 0.0
  %706 = vmatpush1.msra.mxu0 %v47
  %707 = vmatprep.subr.mxu0 0.0
  %708 = vmatpush1.msra.mxu0 %v48
  %709 = vmatprep.mubr.f32.mxu0 %v597
  %710 = vmatmul.mubr.f32.gmra.mrb[0].mxu0 %v596
  %v711 = vpop.f32.mrb[0].mxu0
  %v712 = vadd.f32 %v100, %v711
  %v713 = vpop.f32.mrb[0].mxu0
  %714 = vmatprep.mubr.f32.mxu0 %v601
  %715 = vmatmul.mubr.f32.gmra.mrb[0].mxu0 %v600
  %v716 = vpop.f32.mrb[0].mxu0
  %v717 = vadd.f32 %v100, %v716
  %v718 = vpop.f32.mrb[0].mxu0
  %719 = vmatprep.mubr.f32.mxu0 %v605
  %720 = vmatmul.mubr.f32.gmra.mrb[0].mxu0 %v604
  %v721 = vpop.f32.mrb[0].mxu0
  %v722 = vadd.f32 %v100, %v721
  %v723 = vpop.f32.mrb[0].mxu0
  %724 = vmatprep.mubr.f32.mxu0 %v609
  %725 = vmatmul.mubr.f32.gmra.mrb[0].mxu0 %v608
  %v726 = vpop.f32.mrb[0].mxu0
  %v727 = vadd.f32 %v100, %v726
  %v728 = vpop.f32.mrb[0].mxu0
  %729 = vmatprep.mubr.f32.mxu0 %v613
  %730 = vmatmul.mubr.f32.gmra.mrb[0].mxu0 %v612
  %v731 = vpop.f32.mrb[0].mxu0
  %v732 = vadd.f32 %v100, %v731
  %v733 = vpop.f32.mrb[0].mxu0
  %734 = vmatprep.mubr.f32.mxu0 %v617
  %735 = vmatmul.mubr.f32.gmra.mrb[0].mxu0 %v616
  %v736 = vpop.f32.mrb[0].mxu0
  %v737 = vadd.f32 %v100, %v736
  %v738 = vpop.f32.mrb[0].mxu0
  %739 = vmatprep.mubr.f32.mxu0 %v621
  %740 = vmatmul.mubr.f32.gmra.mrb[0].mxu0 %v620
  %v741 = vpop.f32.mrb[0].mxu0
  %v742 = vadd.f32 %v100, %v741
  %v743 = vpop.f32.mrb[0].mxu0
  %744 = vdwg.mxu0
  %745 = vmatprep.subr.mxu0 0.0
  %746 = vmatpush1.msra.mxu0 %v49
  %747 = vmatprep.subr.mxu0 0.0
  %748 = vmatpush1.msra.mxu0 %v50
  %749 = vmatprep.subr.mxu0 0.0
  %750 = vmatpush1.msra.mxu0 %v51
  %751 = vmatprep.subr.mxu0 0.0
  %752 = vmatpush1.msra.mxu0 %v52
  %753 = vmatprep.subr.mxu0 0.0
  %754 = vmatpush1.msra.mxu0 %v53
  %755 = vmatprep.subr.mxu0 0.0
  %756 = vmatpush1.msra.mxu0 %v54
  %757 = vmatprep.subr.mxu0 0.0
  %758 = vmatpush1.msra.mxu0 %v55
  %759 = vmatprep.subr.mxu0 0.0
  %760 = vmatpush1.msra.mxu0 %v56
  %761 = vmatprep.subr.mxu0 0.0
  %762 = vmatpush1.msra.mxu0 %v57
  %763 = vmatprep.subr.mxu0 0.0
  %764 = vmatpush1.msra.mxu0 %v58
  %765 = vmatprep.subr.mxu0 0.0
  %766 = vmatpush1.msra.mxu0 %v59
  %767 = vmatprep.subr.mxu0 0.0
  %768 = vmatpush1.msra.mxu0 %v60
  %769 = vmatprep.subr.mxu0 0.0
  %770 = vmatpush1.msra.mxu0 %v61
  %771 = vmatprep.subr.mxu0 0.0
  %772 = vmatpush1.msra.mxu0 %v62
  %773 = vmatprep.subr.mxu0 0.0
  %774 = vmatpush1.msra.mxu0 %v63
  %775 = vmatprep.subr.mxu0 0.0
  %776 = vmatpush1.msra.mxu0 %v64
  %777 = vmatprep.subr.mxu0 0.0
  %778 = vmatpush1.msra.mxu0 %v65
  %779 = vmatprep.subr.mxu0 0.0
  %780 = vmatpush1.msra.mxu0 %v66
  %781 = vmatprep.subr.mxu0 0.0
  %782 = vmatpush1.msra.mxu0 0.0
  %783 = vmatprep.subr.mxu0 0.0
  %784 = vmatpush1.msra.mxu0 0.0
  %785 = vmatprep.subr.mxu0 0.0
  %786 = vmatpush1.msra.mxu0 0.0
  %787 = vmatprep.subr.mxu0 0.0
  %788 = vmatpush1.msra.mxu0 0.0
  %789 = vmatprep.subr.mxu0 0.0
  %790 = vmatpush1.msra.mxu0 0.0
  %791 = vmatprep.subr.mxu0 0.0
  %792 = vmatpush1.msra.mxu0 0.0
  %793 = vmatprep.subr.mxu0 0.0
  %794 = vmatpush1.msra.mxu0 0.0
  %795 = vmatprep.subr.mxu0 0.0
  %796 = vmatpush1.msra.mxu0 0.0
  %797 = vmatprep.subr.mxu0 0.0
  %798 = vmatpush1.msra.mxu0 0.0
  %799 = vmatprep.subr.mxu0 0.0
  %800 = vmatpush1.msra.mxu0 0.0
  %801 = vmatprep.subr.mxu0 0.0
  %802 = vmatpush1.msra.mxu0 0.0
  %803 = vmatprep.subr.mxu0 0.0
  %804 = vmatpush1.msra.mxu0 0.0
  %805 = vmatprep.subr.mxu0 0.0
  %806 = vmatpush1.msra.mxu0 0.0
  %807 = vmatprep.subr.mxu0 0.0
  %808 = vmatpush1.msra.mxu0 0.0
  %809 = vmatprep.mubr.f32.mxu0 %v625
  %810 = vmatmul.mubr.f32.gmra.mrb[0].mxu0 %v598
  %v811 = vpop.f32.mrb[0].mxu0
  %v812 = vadd.f32 %v712, %v811
  %v813 = vpop.f32.mrb[0].mxu0
  %814 = vmatprep.mubr.f32.mxu0 %v628
  %815 = vmatmul.mubr.f32.gmra.mrb[0].mxu0 %v602
  %v816 = vpop.f32.mrb[0].mxu0
  %v817 = vadd.f32 %v717, %v816
  %v818 = vpop.f32.mrb[0].mxu0
  %819 = vmatprep.mubr.f32.mxu0 %v631
  %820 = vmatmul.mubr.f32.gmra.mrb[0].mxu0 %v606
  %v821 = vpop.f32.mrb[0].mxu0
  %v822 = vadd.f32 %v722, %v821
  %v823 = vpop.f32.mrb[0].mxu0
  %824 = vmatprep.mubr.f32.mxu0 %v634
  %825 = vmatmul.mubr.f32.gmra.mrb[0].mxu0 %v610
  %v826 = vpop.f32.mrb[0].mxu0
  %v827 = vadd.f32 %v727, %v826
  %v828 = vpop.f32.mrb[0].mxu0
  %829 = vmatprep.mubr.f32.mxu0 %v637
  %830 = vmatmul.mubr.f32.gmra.mrb[0].mxu0 %v614
  %v831 = vpop.f32.mrb[0].mxu0
  %v832 = vadd.f32 %v732, %v831
  %v833 = vpop.f32.mrb[0].mxu0
  %834 = vmatprep.mubr.f32.mxu0 %v640
  %835 = vmatmul.mubr.f32.gmra.mrb[0].mxu0 %v618
  %v836 = vpop.f32.mrb[0].mxu0
  %v837 = vadd.f32 %v737, %v836
  %v838 = vpop.f32.mrb[0].mxu0
  %839 = vmatprep.mubr.f32.mxu0 %v643
  %840 = vmatmul.mubr.f32.gmra.mrb[0].mxu0 %v622
  %v841 = vpop.f32.mrb[0].mxu0
  %v842 = vadd.f32 %v742, %v841
  %v843 = vpop.f32.mrb[0].mxu0
  %844 = vdwg.mxu0
  %v845 = vmax.f32 %v812, 0.0
  %v846 = vmax.f32 %v817, 0.0
  %v847 = vmax.f32 %v822, 0.0
  %v848 = vmax.f32 %v827, 0.0
  %v849 = vmax.f32 %v832, 0.0
  %v850 = vmax.f32 %v837, 0.0
  %v851 = vmax.f32 %v842, 0.0
  %s852 = scalar_lea.vmem %s0, 672
  %v853 = vld [vmem:[%s852] sm:$0xff]
  %v854 = vld [vmem:[%s852 + $0x8] sm:$0xff]
  %v855 = vld [vmem:[%s852 + $0x10] sm:$0xff]
  %v856 = vld [vmem:[%s852 + $0x18] sm:$0xff]
  %v857 = vld [vmem:[%s852 + $0x20] sm:$0xff]
  %v858 = vld [vmem:[%s852 + $0x28] sm:$0xff]
  %v859 = vld [vmem:[%s852 + $0x30] sm:$0xff]
  %v860 = vld [vmem:[%s852 + $0x38] sm:$0xff]
  %v861 = vld [vmem:[%s852 + $0x40] sm:$0xff]
  %v862 = vld [vmem:[%s852 + $0x48] sm:$0xff]
  %v863 = vld [vmem:[%s852 + $0x50] sm:$0xff]
  %v864 = vld [vmem:[%s852 + $0x58] sm:$0xff]
  %v865 = vld [vmem:[%s852 + $0x60] sm:$0xff]
  %v866 = vld [vmem:[%s852 + $0x68] sm:$0xff]
  %v867 = vld [vmem:[%s852 + $0x70] sm:$0xff]
  %v868 = vld [vmem:[%s852 + $0x78] sm:$0xff]
  %v869 = vld [vmem:[%s852 + $0x80] sm:$0xff]
  %v870 = vld [vmem:[%s852 + $0x88] sm:$0xff]
  %v871 = vld [vmem:[%s852 + $0x90] sm:$0xff]
  %v872 = vld [vmem:[%s852 + $0x98] sm:$0xff]
  %v873 = vld [vmem:[%s852 + $0xa0] sm:$0xff]
  %v874 = vld [vmem:[%s852 + $0xa8] sm:$0xff]
  %v875 = vld [vmem:[%s852 + $0xb0] sm:$0xff]
  %v876 = vld [vmem:[%s852 + $0xb8] sm:$0xff]
  %v877 = vld [vmem:[%s852 + $0xc0] sm:$0x3]
  %v878 = vld [vmem:[%s852 + $0xc8] sm:$0x3]
  %v879 = vld [vmem:[%s852 + $0xd0] sm:$0x3]
  %v880 = vld [vmem:[%s852 + $0xd8] sm:$0x3]
  %v882 = vsel %vm102, %v856, 0
  %v885 = vsel %vm102, %v860, 0
  %v888 = vsel %vm102, %v864, 0
  %v891 = vsel %vm102, %v868, 0
  %v894 = vsel %vm102, %v872, 0
  %v897 = vsel %vm102, %v876, 0
  %v900 = vsel %vm102, %v880, 0
  %902 = vmatprep.subr.mxu0 0.0
  %903 = vmatpush1.msra.mxu0 %v17
  %904 = vmatprep.subr.mxu0 0.0
  %905 = vmatpush1.msra.mxu0 %v18
  %906 = vmatprep.subr.mxu0 0.0
  %907 = vmatpush1.msra.mxu0 %v19
  %908 = vmatprep.subr.mxu0 0.0
  %909 = vmatpush1.msra.mxu0 %v20
  %910 = vmatprep.subr.mxu0 0.0
  %911 = vmatpush1.msra.mxu0 %v21
  %912 = vmatprep.subr.mxu0 0.0
  %913 = vmatpush1.msra.mxu0 %v22
  %914 = vmatprep.subr.mxu0 0.0
  %915 = vmatpush1.msra.mxu0 %v23
  %916 = vmatprep.subr.mxu0 0.0
  %917 = vmatpush1.msra.mxu0 %v24
  %918 = vmatprep.subr.mxu0 0.0
  %919 = vmatpush1.msra.mxu0 %v25
  %920 = vmatprep.subr.mxu0 0.0
  %921 = vmatpush1.msra.mxu0 %v26
  %922 = vmatprep.subr.mxu0 0.0
  %923 = vmatpush1.msra.mxu0 %v27
  %924 = vmatprep.subr.mxu0 0.0
  %925 = vmatpush1.msra.mxu0 %v28
  %926 = vmatprep.subr.mxu0 0.0
  %927 = vmatpush1.msra.mxu0 %v29
  %928 = vmatprep.subr.mxu0 0.0
  %929 = vmatpush1.msra.mxu0 %v30
  %930 = vmatprep.subr.mxu0 0.0
  %931 = vmatpush1.msra.mxu0 %v31
  %932 = vmatprep.subr.mxu0 0.0
  %933 = vmatpush1.msra.mxu0 %v32
  %934 = vmatprep.subr.mxu0 0.0
  %935 = vmatpush1.msra.mxu0 %v33
  %936 = vmatprep.subr.mxu0 0.0
  %937 = vmatpush1.msra.mxu0 %v34
  %938 = vmatprep.subr.mxu0 0.0
  %939 = vmatpush1.msra.mxu0 %v35
  %940 = vmatprep.subr.mxu0 0.0
  %941 = vmatpush1.msra.mxu0 %v36
  %942 = vmatprep.subr.mxu0 0.0
  %943 = vmatpush1.msra.mxu0 %v37
  %944 = vmatprep.subr.mxu0 0.0
  %945 = vmatpush1.msra.mxu0 %v38
  %946 = vmatprep.subr.mxu0 0.0
  %947 = vmatpush1.msra.mxu0 %v39
  %948 = vmatprep.subr.mxu0 0.0
  %949 = vmatpush1.msra.mxu0 %v40
  %950 = vmatprep.subr.mxu0 0.0
  %951 = vmatpush1.msra.mxu0 %v41
  %952 = vmatprep.subr.mxu0 0.0
  %953 = vmatpush1.msra.mxu0 %v42
  %954 = vmatprep.subr.mxu0 0.0
  %955 = vmatpush1.msra.mxu0 %v43
  %956 = vmatprep.subr.mxu0 0.0
  %957 = vmatpush1.msra.mxu0 %v44
  %958 = vmatprep.subr.mxu0 0.0
  %959 = vmatpush1.msra.mxu0 %v45
  %960 = vmatprep.subr.mxu0 0.0
  %961 = vmatpush1.msra.mxu0 %v46
  %962 = vmatprep.subr.mxu0 0.0
  %963 = vmatpush1.msra.mxu0 %v47
  %964 = vmatprep.subr.mxu0 0.0
  %965 = vmatpush1.msra.mxu0 %v48
  %966 = vmatprep.mubr.f32.mxu0 %v854
  %967 = vmatmul.mubr.f32.gmra.mrb[0].mxu0 %v853
  %v968 = vpop.f32.mrb[0].mxu0
  %v969 = vadd.f32 %v100, %v968
  %v970 = vpop.f32.mrb[0].mxu0
  %971 = vmatprep.mubr.f32.mxu0 %v858
  %972 = vmatmul.mubr.f32.gmra.mrb[0].mxu0 %v857
  %v973 = vpop.f32.mrb[0].mxu0
  %v974 = vadd.f32 %v100, %v973
  %v975 = vpop.f32.mrb[0].mxu0
  %976 = vmatprep.mubr.f32.mxu0 %v862
  %977 = vmatmul.mubr.f32.gmra.mrb[0].mxu0 %v861
  %v978 = vpop.f32.mrb[0].mxu0
  %v979 = vadd.f32 %v100, %v978
  %v980 = vpop.f32.mrb[0].mxu0
  %981 = vmatprep.mubr.f32.mxu0 %v866
  %982 = vmatmul.mubr.f32.gmra.mrb[0].mxu0 %v865
  %v983 = vpop.f32.mrb[0].mxu0
  %v984 = vadd.f32 %v100, %v983
  %v985 = vpop.f32.mrb[0].mxu0
  %986 = vmatprep.mubr.f32.mxu0 %v870
  %987 = vmatmul.mubr.f32.gmra.mrb[0].mxu0 %v869
  %v988 = vpop.f32.mrb[0].mxu0
  %v989 = vadd.f32 %v100, %v988
  %v990 = vpop.f32.mrb[0].mxu0
  %991 = vmatprep.mubr.f32.mxu0 %v874
  %992 = vmatmul.mubr.f32.gmra.mrb[0].mxu0 %v873
  %v993 = vpop.f32.mrb[0].mxu0
  %v994 = vadd.f32 %v100, %v993
  %v995 = vpop.f32.mrb[0].mxu0
  %996 = vmatprep.mubr.f32.mxu0 %v878
  %997 = vmatmul.mubr.f32.gmra.mrb[0].mxu0 %v877
  %v998 = vpop.f32.mrb[0].mxu0
  %v999 = vadd.f32 %v100, %v998
  %v1000 = vpop.f32.mrb[0].mxu0
  %1001 = vdwg.mxu0
  %1002 = vmatprep.subr.mxu0 0.0
  %1003 = vmatpush1.msra.mxu0 %v49
  %1004 = vmatprep.subr.mxu0 0.0
  %1005 = vmatpush1.msra.mxu0 %v50
  %1006 = vmatprep.subr.mxu0 0.0
  %1007 = vmatpush1.msra.mxu0 %v51
  %1008 = vmatprep.subr.mxu0 0.0
  %1009 = vmatpush1.msra.mxu0 %v52
  %1010 = vmatprep.subr.mxu0 0.0
  %1011 = vmatpush1.msra.mxu0 %v53
  %1012 = vmatprep.subr.mxu0 0.0
  %1013 = vmatpush1.msra.mxu0 %v54
  %1014 = vmatprep.subr.mxu0 0.0
  %1015 = vmatpush1.msra.mxu0 %v55
  %1016 = vmatprep.subr.mxu0 0.0
  %1017 = vmatpush1.msra.mxu0 %v56
  %1018 = vmatprep.subr.mxu0 0.0
  %1019 = vmatpush1.msra.mxu0 %v57
  %1020 = vmatprep.subr.mxu0 0.0
  %1021 = vmatpush1.msra.mxu0 %v58
  %1022 = vmatprep.subr.mxu0 0.0
  %1023 = vmatpush1.msra.mxu0 %v59
  %1024 = vmatprep.subr.mxu0 0.0
  %1025 = vmatpush1.msra.mxu0 %v60
  %1026 = vmatprep.subr.mxu0 0.0
  %1027 = vmatpush1.msra.mxu0 %v61
  %1028 = vmatprep.subr.mxu0 0.0
  %1029 = vmatpush1.msra.mxu0 %v62
  %1030 = vmatprep.subr.mxu0 0.0
  %1031 = vmatpush1.msra.mxu0 %v63
  %1032 = vmatprep.subr.mxu0 0.0
  %1033 = vmatpush1.msra.mxu0 %v64
  %1034 = vmatprep.subr.mxu0 0.0
  %1035 = vmatpush1.msra.mxu0 %v65
  %1036 = vmatprep.subr.mxu0 0.0
  %1037 = vmatpush1.msra.mxu0 %v66
  %1038 = vmatprep.subr.mxu0 0.0
  %1039 = vmatpush1.msra.mxu0 0.0
  %1040 = vmatprep.subr.mxu0 0.0
  %1041 = vmatpush1.msra.mxu0 0.0
  %1042 = vmatprep.subr.mxu0 0.0
  %1043 = vmatpush1.msra.mxu0 0.0
  %1044 = vmatprep.subr.mxu0 0.0
  %1045 = vmatpush1.msra.mxu0 0.0
  %1046 = vmatprep.subr.mxu0 0.0
  %1047 = vmatpush1.msra.mxu0 0.0
  %1048 = vmatprep.subr.mxu0 0.0
  %1049 = vmatpush1.msra.mxu0 0.0
  %1050 = vmatprep.subr.mxu0 0.0
  %1051 = vmatpush1.msra.mxu0 0.0
  %1052 = vmatprep.subr.mxu0 0.0
  %1053 = vmatpush1.msra.mxu0 0.0
  %1054 = vmatprep.subr.mxu0 0.0
  %1055 = vmatpush1.msra.mxu0 0.0
  %1056 = vmatprep.subr.mxu0 0.0
  %1057 = vmatpush1.msra.mxu0 0.0
  %1058 = vmatprep.subr.mxu0 0.0
  %1059 = vmatpush1.msra.mxu0 0.0
  %1060 = vmatprep.subr.mxu0 0.0
  %1061 = vmatpush1.msra.mxu0 0.0
  %1062 = vmatprep.subr.mxu0 0.0
  %1063 = vmatpush1.msra.mxu0 0.0
  %1064 = vmatprep.subr.mxu0 0.0
  %1065 = vmatpush1.msra.mxu0 0.0
  %1066 = vmatprep.mubr.f32.mxu0 %v882
  %1067 = vmatmul.mubr.f32.gmra.mrb[0].mxu0 %v855
  %v1068 = vpop.f32.mrb[0].mxu0
  %v1069 = vadd.f32 %v969, %v1068
  %v1070 = vpop.f32.mrb[0].mxu0
  %1071 = vmatprep.mubr.f32.mxu0 %v885
  %1072 = vmatmul.mubr.f32.gmra.mrb[0].mxu0 %v859
  %v1073 = vpop.f32.mrb[0].mxu0
  %v1074 = vadd.f32 %v974, %v1073
  %v1075 = vpop.f32.mrb[0].mxu0
  %1076 = vmatprep.mubr.f32.mxu0 %v888
  %1077 = vmatmul.mubr.f32.gmra.mrb[0].mxu0 %v863
  %v1078 = vpop.f32.mrb[0].mxu0
  %v1079 = vadd.f32 %v979, %v1078
  %v1080 = vpop.f32.mrb[0].mxu0
  %1081 = vmatprep.mubr.f32.mxu0 %v891
  %1082 = vmatmul.mubr.f32.gmra.mrb[0].mxu0 %v867
  %v1083 = vpop.f32.mrb[0].mxu0
  %v1084 = vadd.f32 %v984, %v1083
  %v1085 = vpop.f32.mrb[0].mxu0
  %1086 = vmatprep.mubr.f32.mxu0 %v894
  %1087 = vmatmul.mubr.f32.gmra.mrb[0].mxu0 %v871
  %v1088 = vpop.f32.mrb[0].mxu0
  %v1089 = vadd.f32 %v989, %v1088
  %v1090 = vpop.f32.mrb[0].mxu0
  %1091 = vmatprep.mubr.f32.mxu0 %v897
  %1092 = vmatmul.mubr.f32.gmra.mrb[0].mxu0 %v875
  %v1093 = vpop.f32.mrb[0].mxu0
  %v1094 = vadd.f32 %v994, %v1093
  %v1095 = vpop.f32.mrb[0].mxu0
  %1096 = vmatprep.mubr.f32.mxu0 %v900
  %1097 = vmatmul.mubr.f32.gmra.mrb[0].mxu0 %v879
  %v1098 = vpop.f32.mrb[0].mxu0
  %v1099 = vadd.f32 %v999, %v1098
  %v1100 = vpop.f32.mrb[0].mxu0
  %1101 = vdwg.mxu0
  %v1102 = vmax.f32 %v1069, 0.0
  %v1103 = vmax.f32 %v1074, 0.0
  %v1104 = vmax.f32 %v1079, 0.0
  %v1105 = vmax.f32 %v1084, 0.0
  %v1106 = vmax.f32 %v1089, 0.0
  %v1107 = vmax.f32 %v1094, 0.0
  %v1108 = vmax.f32 %v1099, 0.0
  %v1109 = vmax.f32 %v845, %v1102
  %v1110 = vmax.f32 %v846, %v1103
  %v1111 = vmax.f32 %v847, %v1104
  %v1112 = vmax.f32 %v848, %v1105
  %v1113 = vmax.f32 %v849, %v1106
  %v1114 = vmax.f32 %v850, %v1107
  %v1115 = vmax.f32 %v851, %v1108
  %v1116 = vmax.f32 %v588, %v1109
  %v1117 = vmax.f32 %v589, %v1110
  %v1118 = vmax.f32 %v590, %v1111
  %v1119 = vmax.f32 %v591, %v1112
  %v1120 = vmax.f32 %v592, %v1113
  %v1121 = vmax.f32 %v593, %v1114
  %v1122 = vmax.f32 %v594, %v1115
  %v1123 = vld [vmem:[%s3] sm:$0x1]
  %v1125 = vlaneseq
  %v1126 = vshrl.u32 %v1125, 7
  %v1127 = vsub.s32 0, %v1126
  %v1128 = vrot.slane %v1123, %v1127
  %v1130 = vmul.f32 %v1116, %v1128
  %v1131 = vmul.f32 %v1117, %v1128
  %v1132 = vmul.f32 %v1118, %v1128
  %v1133 = vmul.f32 %v1119, %v1128
  %v1134 = vmul.f32 %v1120, %v1128
  %v1135 = vmul.f32 %v1121, %v1128
  %v1136 = vmul.f32 %v1122, %v1128
  %1137 = vst [vmem:[%s4] sm:$0xff] %v1130
  %1138 = vst [vmem:[%s4 + $0x8] sm:$0xff] %v1131
  %1139 = vst [vmem:[%s4 + $0x10] sm:$0xff] %v1132
  %1140 = vst [vmem:[%s4 + $0x18] sm:$0xff] %v1133
  %1141 = vst [vmem:[%s4 + $0x20] sm:$0xff] %v1134
  %1142 = vst [vmem:[%s4 + $0x28] sm:$0xff] %v1135
  %1143 = vst [vmem:[%s4 + $0x30] sm:$0x3] %v1136
  // Predicated region
  $region18: #{lenet_forward.4} parent=0 // pred_check
    _
  $region19: #{lenet_forward.4} parent=0 // pred_check_branch
    %1145 = sbr.rel (0) target = $region21
  $region20: #{lenet_forward.4} parent=0 // pred_region
    _
  $region21: #{lenet_forward.4} parent=0 // pred_fallthru
    _
  // Predicated region
  $region22: #{lenet_forward.4} parent=0 // pred_check
    _
  $region23: #{lenet_forward.4} parent=0 // pred_check_branch
    %1147 = sbr.rel (0) target = $region25
  $region24: #{lenet_forward.4} parent=0 // pred_region
    _
  $region25: #{lenet_forward.4} parent=0 // pred_fallthru
    _

// kernel: lenet_forward.5
$region0: #{lenet_forward.5}
  #allocation0 [shape = 'u32[]', space=smem, size = 0x4, offset = 0x4, fixed_abs, tag = 'smem constant byte address 0x4 - core index']
  #allocation1 [shape = 'u32[144,128]{1,0:T(1,128)}', space=vmem, size = 0x12000, scoped, tag = 'internal scratch']
  %s0 = inlined_call_operand.vmem [shape: f32[2,800], index: 0, kind: input, shape index: {}]
  %s1 = inlined_call_operand.vmem [shape: f32[800,128], index: 1, kind: input, shape index: {}]
  %s2 = inlined_call_operand.vmem [shape: f32[1,128], index: 2, kind: input, shape index: {}]
  %s3 = inlined_call_operand.vmem [shape: f32[1,128], index: 3, kind: input, shape index: {}]
  %s4 = inlined_call_operand.vmem [shape: f32[128,128], index: 4, kind: input, shape index: {}]
  %s5 = inlined_call_operand.vmem [shape: f32[1,128], index: 5, kind: input, shape index: {}]
  %s6 = inlined_call_operand.vmem [shape: f32[1,128], index: 6, kind: input, shape index: {}]
  %s7 = inlined_call_operand.vmem [shape: f32[128,128], index: 7, kind: input, shape index: {}]
  %s8 = inlined_call_operand.vmem [shape: f32[1,128], index: 8, kind: input, shape index: {}]
  %s9 = inlined_call_operand.hbm [shape: f32[2,128], index: 9, kind: output, shape index: {}]
  %s10 = sld [smem:[#allocation0]]
  $region46: #{lenet_forward.5} parent=0
    _
  %s12 = ssub.s32 1, %s10
  %s13 = scalar_select 0, %s12, %s10
  $region1: #{lenet_forward.5} parent=0
    #allocation2 [shape = 'u8[1024]{0}', space=vmem, size = 0x400, scoped, tag = 'output window, operand 0, single buffered']
    #allocation3 [shape = 's32[1]{0}', space=sflag, size = 0x4, scoped, tag = 'scoped memory for lenet_forward.5']
    %14 = vsyncpa [#allocation3], 0
    // Predicated region
    $region2: #{lenet_forward.5} parent=1 // pred_check
      _
    $region3: #{lenet_forward.5} parent=1 // pred_check_branch
      %16 = sbr.rel (0) target = $region5
    $region4: #{lenet_forward.5} parent=1 // pred_region
      _
    $region5: #{lenet_forward.5} parent=1 // pred_fallthru
      _
    // Predicated region
    $region6: #{lenet_forward.5} parent=1 // pred_check
      _
    $region7: #{lenet_forward.5} parent=1 // pred_check_branch
      %18 = sbr.rel (0) target = $region9
    $region8: #{lenet_forward.5} parent=1 // pred_region
      _
    $region9: #{lenet_forward.5} parent=1 // pred_fallthru
      _
    // Predicated region
    $region10: #{lenet_forward.5} parent=1 // pred_check
      _
    $region11: #{lenet_forward.5} parent=1 // pred_check_branch
      %20 = sbr.rel (0) target = $region13
    $region12: #{lenet_forward.5} parent=1 // pred_region
      _
    $region13: #{lenet_forward.5} parent=1 // pred_fallthru
      _
    // Predicated region
    $region14: #{lenet_forward.5} parent=1 // pred_check
      _
    $region15: #{lenet_forward.5} parent=1 // pred_check_branch
      %22 = sbr.rel (0) target = $region17
    $region16: #{lenet_forward.5} parent=1 // pred_region
      _
    $region17: #{lenet_forward.5} parent=1 // pred_fallthru
      _
    // Predicated region
    $region18: #{lenet_forward.5} parent=1 // pred_check
      _
    $region19: #{lenet_forward.5} parent=1 // pred_check_branch
      %24 = sbr.rel (0) target = $region21
    $region20: #{lenet_forward.5} parent=1 // pred_region
      _
    $region21: #{lenet_forward.5} parent=1 // pred_fallthru
      _
    // Predicated region
    $region22: #{lenet_forward.5} parent=1 // pred_check
      _
    $region23: #{lenet_forward.5} parent=1 // pred_check_branch
      %26 = sbr.rel (0) target = $region25
    $region24: #{lenet_forward.5} parent=1 // pred_region
      _
    $region25: #{lenet_forward.5} parent=1 // pred_fallthru
      _
    // Predicated region
    $region26: #{lenet_forward.5} parent=1 // pred_check
      _
    $region27: #{lenet_forward.5} parent=1 // pred_check_branch
      %28 = sbr.rel (0) target = $region29
    $region28: #{lenet_forward.5} parent=1 // pred_region
      _
    $region29: #{lenet_forward.5} parent=1 // pred_fallthru
      _
    // Predicated region
    $region30: #{lenet_forward.5} parent=1 // pred_check
      _
    $region31: #{lenet_forward.5} parent=1 // pred_check_branch
      %30 = sbr.rel (0) target = $region33
    $region32: #{lenet_forward.5} parent=1 // pred_region
      _
    $region33: #{lenet_forward.5} parent=1 // pred_fallthru
      _
    // Predicated region
    $region34: #{lenet_forward.5} parent=1 // pred_check
      _
    $region35: #{lenet_forward.5} parent=1 // pred_check_branch
      %32 = sbr.rel (0) target = $region37
    $region36: #{lenet_forward.5} parent=1 // pred_region
      _
    $region37: #{lenet_forward.5} parent=1 // pred_fallthru
      _
    %v33 = vld [vmem:[%s0] sm:$0xff]
    %v34 = vld [vmem:[%s0 + $0x8] sm:$0x3f]
    %v35 = vld [vmem:[%s1] sm:$0xff]
    %v36 = vld [vmem:[%s1 + $0x8] sm:$0xff]
    %v37 = vld [vmem:[%s1 + $0x10] sm:$0xff]
    %v38 = vld [vmem:[%s1 + $0x18] sm:$0xff]
    %v39 = vld [vmem:[%s1 + $0x20] sm:$0xff]
    %v40 = vld [vmem:[%s1 + $0x28] sm:$0xff]
    %v41 = vld [vmem:[%s1 + $0x30] sm:$0xff]
    %v42 = vld [vmem:[%s1 + $0x38] sm:$0xff]
    %v43 = vld [vmem:[%s1 + $0x40] sm:$0xff]
    %v44 = vld [vmem:[%s1 + $0x48] sm:$0xff]
    %v45 = vld [vmem:[%s1 + $0x50] sm:$0xff]
    %v46 = vld [vmem:[%s1 + $0x58] sm:$0xff]
    %v47 = vld [vmem:[%s1 + $0x60] sm:$0xff]
    %v48 = vld [vmem:[%s1 + $0x68] sm:$0xff]
    %v49 = vld [vmem:[%s1 + $0x70] sm:$0xff]
    %v50 = vld [vmem:[%s1 + $0x78] sm:$0xff]
    %v51 = vld [vmem:[%s1 + $0x80] sm:$0xff]
    %v52 = vld [vmem:[%s1 + $0x88] sm:$0xff]
    %v53 = vld [vmem:[%s1 + $0x90] sm:$0xff]
    %v54 = vld [vmem:[%s1 + $0x98] sm:$0xff]
    %v55 = vld [vmem:[%s1 + $0xa0] sm:$0xff]
    %v56 = vld [vmem:[%s1 + $0xa8] sm:$0xff]
    %v57 = vld [vmem:[%s1 + $0xb0] sm:$0xff]
    %v58 = vld [vmem:[%s1 + $0xb8] sm:$0xff]
    %v59 = vld [vmem:[%s1 + $0xc0] sm:$0xff]
    %v60 = vld [vmem:[%s1 + $0xc8] sm:$0xff]
    %v61 = vld [vmem:[%s1 + $0xd0] sm:$0xff]
    %v62 = vld [vmem:[%s1 + $0xd8] sm:$0xff]
    %v63 = vld [vmem:[%s1 + $0xe0] sm:$0xff]
    %v64 = vld [vmem:[%s1 + $0xe8] sm:$0xff]
    %v65 = vld [vmem:[%s1 + $0xf0] sm:$0xff]
    %v66 = vld [vmem:[%s1 + $0xf8] sm:$0xff]
    %v67 = vld [vmem:[%s1 + $0x100] sm:$0xff]
    %v68 = vld [vmem:[%s1 + $0x108] sm:$0xff]
    %v69 = vld [vmem:[%s1 + $0x110] sm:$0xff]
    %v70 = vld [vmem:[%s1 + $0x118] sm:$0xff]
    %v71 = vld [vmem:[%s1 + $0x120] sm:$0xff]
    %v72 = vld [vmem:[%s1 + $0x128] sm:$0xff]
    %v73 = vld [vmem:[%s1 + $0x130] sm:$0xff]
    %v74 = vld [vmem:[%s1 + $0x138] sm:$0xff]
    %v75 = vld [vmem:[%s1 + $0x140] sm:$0xff]
    %v76 = vld [vmem:[%s1 + $0x148] sm:$0xff]
    %v77 = vld [vmem:[%s1 + $0x150] sm:$0xff]
    %v78 = vld [vmem:[%s1 + $0x158] sm:$0xff]
    %v79 = vld [vmem:[%s1 + $0x160] sm:$0xff]
    %v80 = vld [vmem:[%s1 + $0x168] sm:$0xff]
    %v81 = vld [vmem:[%s1 + $0x170] sm:$0xff]
    %v82 = vld [vmem:[%s1 + $0x178] sm:$0xff]
    %v83 = vld [vmem:[%s1 + $0x180] sm:$0xff]
    %v84 = vld [vmem:[%s1 + $0x188] sm:$0xff]
    %v85 = vld [vmem:[%s1 + $0x190] sm:$0xff]
    %v86 = vld [vmem:[%s1 + $0x198] sm:$0xff]
    %v87 = vld [vmem:[%s1 + $0x1a0] sm:$0xff]
    %v88 = vld [vmem:[%s1 + $0x1a8] sm:$0xff]
    %v89 = vld [vmem:[%s1 + $0x1b0] sm:$0xff]
    %v90 = vld [vmem:[%s1 + $0x1b8] sm:$0xff]
    %v91 = vld [vmem:[%s1 + $0x1c0] sm:$0xff]
    %v92 = vld [vmem:[%s1 + $0x1c8] sm:$0xff]
    %v93 = vld [vmem:[%s1 + $0x1d0] sm:$0xff]
    %v94 = vld [vmem:[%s1 + $0x1d8] sm:$0xff]
    %v95 = vld [vmem:[%s1 + $0x1e0] sm:$0xff]
    %v96 = vld [vmem:[%s1 + $0x1e8] sm:$0xff]
    %v97 = vld [vmem:[%s1 + $0x1f0] sm:$0xff]
    %v98 = vld [vmem:[%s1 + $0x1f8] sm:$0xff]
    %v99 = vld [vmem:[%s1 + $0x200] sm:$0xff]
    %v100 = vld [vmem:[%s1 + $0x208] sm:$0xff]
    %v101 = vld [vmem:[%s1 + $0x210] sm:$0xff]
    %v102 = vld [vmem:[%s1 + $0x218] sm:$0xff]
    %v103 = vld [vmem:[%s1 + $0x220] sm:$0xff]
    %v104 = vld [vmem:[%s1 + $0x228] sm:$0xff]
    %v105 = vld [vmem:[%s1 + $0x230] sm:$0xff]
    %v106 = vld [vmem:[%s1 + $0x238] sm:$0xff]
    %v107 = vld [vmem:[%s1 + $0x240] sm:$0xff]
    %v108 = vld [vmem:[%s1 + $0x248] sm:$0xff]
    %v109 = vld [vmem:[%s1 + $0x250] sm:$0xff]
    %v110 = vld [vmem:[%s1 + $0x258] sm:$0xff]
    %v111 = vld [vmem:[%s1 + $0x260] sm:$0xff]
    %v112 = vld [vmem:[%s1 + $0x268] sm:$0xff]
    %v113 = vld [vmem:[%s1 + $0x270] sm:$0xff]
    %v114 = vld [vmem:[%s1 + $0x278] sm:$0xff]
    %v115 = vld [vmem:[%s1 + $0x280] sm:$0xff]
    %v116 = vld [vmem:[%s1 + $0x288] sm:$0xff]
    %v117 = vld [vmem:[%s1 + $0x290] sm:$0xff]
    %v118 = vld [vmem:[%s1 + $0x298] sm:$0xff]
    %v119 = vld [vmem:[%s1 + $0x2a0] sm:$0xff]
    %v120 = vld [vmem:[%s1 + $0x2a8] sm:$0xff]
    %v121 = vld [vmem:[%s1 + $0x2b0] sm:$0xff]
    %v122 = vld [vmem:[%s1 + $0x2b8] sm:$0xff]
    %v123 = vld [vmem:[%s1 + $0x2c0] sm:$0xff]
    %v124 = vld [vmem:[%s1 + $0x2c8] sm:$0xff]
    %v125 = vld [vmem:[%s1 + $0x2d0] sm:$0xff]
    %v126 = vld [vmem:[%s1 + $0x2d8] sm:$0xff]
    %v127 = vld [vmem:[%s1 + $0x2e0] sm:$0xff]
    %v128 = vld [vmem:[%s1 + $0x2e8] sm:$0xff]
    %v129 = vld [vmem:[%s1 + $0x2f0] sm:$0xff]
    %v130 = vld [vmem:[%s1 + $0x2f8] sm:$0xff]
    %v131 = vld [vmem:[%s1 + $0x300] sm:$0xff]
    %v132 = vld [vmem:[%s1 + $0x308] sm:$0xff]
    %v133 = vld [vmem:[%s1 + $0x310] sm:$0xff]
    %v134 = vld [vmem:[%s1 + $0x318] sm:$0xff]
    %v135 = vld [vmem:[%s2] sm:$0x1]
    %v137 = vlaneseq
    %v138 = vshrl.u32 %v137, 7
    %v139 = vsub.s32 0, %v138
    %v140 = vrot.slane %v135, %v139
    %v144 = vcombine.high %v33, %v33
    %v146 = vunpack.c.l.s4 1983009808
    %v147 = vunpack.c.0.s8 %v146
    %v148 = vlaneseq
    %v149 = vshrl.u32 %v148, 7
    %v150 = vsub.s32 %v147, %v149
    %v151 = vrot.slane %v33, %v150
    %v153 = vunpack.c.l.s4 1983009808
    %v154 = vunpack.c.0.s8 %v153
    %v155 = vlaneseq
    %v156 = vshrl.u32 %v155, 7
    %v157 = vsub.s32 %v154, %v156
    %v158 = vrot.slane %v144, %v157
    %v159 = vcombine.high %v151, %v151
    %v160 = vcombine.high %v158, %v158
    %v161 = vcombine.high %v34, %v34
    %v163 = vunpack.c.l.s4 1983009808
    %v164 = vunpack.c.0.s8 %v163
    %v165 = vlaneseq
    %v166 = vshrl.u32 %v165, 7
    %v167 = vsub.s32 %v164, %v166
    %v168 = vrot.slane %v34, %v167
    %v170 = vunpack.c.l.s4 1983009808
    %v171 = vunpack.c.0.s8 %v170
    %v172 = vlaneseq
    %v173 = vshrl.u32 %v172, 7
    %v174 = vsub.s32 %v171, %v173
    %v175 = vrot.slane %v161, %v174
    %v176 = vcombine.high %v168, %v168
    %vm183 = vcmask 261120
    %v184 = vsel %vm183, %v175, 0
    %186 = vmatprep.subr.mxu0 0.0
    %187 = vmatpush1.msra.mxu0 %v35
    %188 = vmatprep.subr.mxu0 0.0
    %189 = vmatpush1.msra.mxu0 %v36
    %190 = vmatprep.subr.mxu0 0.0
    %191 = vmatpush1.msra.mxu0 %v37
    %192 = vmatprep.subr.mxu0 0.0
    %193 = vmatpush1.msra.mxu0 %v38
    %194 = vmatprep.subr.mxu0 0.0
    %195 = vmatpush1.msra.mxu0 %v39
    %196 = vmatprep.subr.mxu0 0.0
    %197 = vmatpush1.msra.mxu0 %v40
    %198 = vmatprep.subr.mxu0 0.0
    %199 = vmatpush1.msra.mxu0 %v41
    %200 = vmatprep.subr.mxu0 0.0
    %201 = vmatpush1.msra.mxu0 %v42
    %202 = vmatprep.subr.mxu0 0.0
    %203 = vmatpush1.msra.mxu0 %v43
    %204 = vmatprep.subr.mxu0 0.0
    %205 = vmatpush1.msra.mxu0 %v44
    %206 = vmatprep.subr.mxu0 0.0
    %207 = vmatpush1.msra.mxu0 %v45
    %208 = vmatprep.subr.mxu0 0.0
    %209 = vmatpush1.msra.mxu0 %v46
    %210 = vmatprep.subr.mxu0 0.0
    %211 = vmatpush1.msra.mxu0 %v47
    %212 = vmatprep.subr.mxu0 0.0
    %213 = vmatpush1.msra.mxu0 %v48
    %214 = vmatprep.subr.mxu0 0.0
    %215 = vmatpush1.msra.mxu0 %v49
    %216 = vmatprep.subr.mxu0 0.0
    %217 = vmatpush1.msra.mxu0 %v50
    %218 = vmatprep.subr.mxu0 0.0
    %219 = vmatpush1.msra.mxu0 %v51
    %220 = vmatprep.subr.mxu0 0.0
    %221 = vmatpush1.msra.mxu0 %v52
    %222 = vmatprep.subr.mxu0 0.0
    %223 = vmatpush1.msra.mxu0 %v53
    %224 = vmatprep.subr.mxu0 0.0
    %225 = vmatpush1.msra.mxu0 %v54
    %226 = vmatprep.subr.mxu0 0.0
    %227 = vmatpush1.msra.mxu0 %v55
    %228 = vmatprep.subr.mxu0 0.0
    %229 = vmatpush1.msra.mxu0 %v56
    %230 = vmatprep.subr.mxu0 0.0
    %231 = vmatpush1.msra.mxu0 %v57
    %232 = vmatprep.subr.mxu0 0.0
    %233 = vmatpush1.msra.mxu0 %v58
    %234 = vmatprep.subr.mxu0 0.0
    %235 = vmatpush1.msra.mxu0 %v59
    %236 = vmatprep.subr.mxu0 0.0
    %237 = vmatpush1.msra.mxu0 %v60
    %238 = vmatprep.subr.mxu0 0.0
    %239 = vmatpush1.msra.mxu0 %v61
    %240 = vmatprep.subr.mxu0 0.0
    %241 = vmatpush1.msra.mxu0 %v62
    %242 = vmatprep.subr.mxu0 0.0
    %243 = vmatpush1.msra.mxu0 %v63
    %244 = vmatprep.subr.mxu0 0.0
    %245 = vmatpush1.msra.mxu0 %v64
    %246 = vmatprep.subr.mxu0 0.0
    %247 = vmatpush1.msra.mxu0 %v65
    %248 = vmatprep.subr.mxu0 0.0
    %249 = vmatpush1.msra.mxu0 %v66
    %250 = vmatprep.mubr.f32.mxu0 %v159
    %251 = vmatmul.mubr.f32.gmra.mrb[0].mxu0 %v151
    %v252 = vpop.f32.mrb[0].mxu0
    %v253 = vadd.f32 %v140, %v252
    %v254 = vpop.f32.mrb[0].mxu0
    %255 = vdwg.mxu0
    %256 = vmatprep.subr.mxu0 0.0
    %257 = vmatpush1.msra.mxu0 %v67
    %258 = vmatprep.subr.mxu0 0.0
    %259 = vmatpush1.msra.mxu0 %v68
    %260 = vmatprep.subr.mxu0 0.0
    %261 = vmatpush1.msra.mxu0 %v69
    %262 = vmatprep.subr.mxu0 0.0
    %263 = vmatpush1.msra.mxu0 %v70
    %264 = vmatprep.subr.mxu0 0.0
    %265 = vmatpush1.msra.mxu0 %v71
    %266 = vmatprep.subr.mxu0 0.0
    %267 = vmatpush1.msra.mxu0 %v72
    %268 = vmatprep.subr.mxu0 0.0
    %269 = vmatpush1.msra.mxu0 %v73
    %270 = vmatprep.subr.mxu0 0.0
    %271 = vmatpush1.msra.mxu0 %v74
    %272 = vmatprep.subr.mxu0 0.0
    %273 = vmatpush1.msra.mxu0 %v75
    %274 = vmatprep.subr.mxu0 0.0
    %275 = vmatpush1.msra.mxu0 %v76
    %276 = vmatprep.subr.mxu0 0.0
    %277 = vmatpush1.msra.mxu0 %v77
    %278 = vmatprep.subr.mxu0 0.0
    %279 = vmatpush1.msra.mxu0 %v78
    %280 = vmatprep.subr.mxu0 0.0
    %281 = vmatpush1.msra.mxu0 %v79
    %282 = vmatprep.subr.mxu0 0.0
    %283 = vmatpush1.msra.mxu0 %v80
    %284 = vmatprep.subr.mxu0 0.0
    %285 = vmatpush1.msra.mxu0 %v81
    %286 = vmatprep.subr.mxu0 0.0
    %287 = vmatpush1.msra.mxu0 %v82
    %288 = vmatprep.subr.mxu0 0.0
    %289 = vmatpush1.msra.mxu0 %v83
    %290 = vmatprep.subr.mxu0 0.0
    %291 = vmatpush1.msra.mxu0 %v84
    %292 = vmatprep.subr.mxu0 0.0
    %293 = vmatpush1.msra.mxu0 %v85
    %294 = vmatprep.subr.mxu0 0.0
    %295 = vmatpush1.msra.mxu0 %v86
    %296 = vmatprep.subr.mxu0 0.0
    %297 = vmatpush1.msra.mxu0 %v87
    %298 = vmatprep.subr.mxu0 0.0
    %299 = vmatpush1.msra.mxu0 %v88
    %300 = vmatprep.subr.mxu0 0.0
    %301 = vmatpush1.msra.mxu0 %v89
    %302 = vmatprep.subr.mxu0 0.0
    %303 = vmatpush1.msra.mxu0 %v90
    %304 = vmatprep.subr.mxu0 0.0
    %305 = vmatpush1.msra.mxu0 %v91
    %306 = vmatprep.subr.mxu0 0.0
    %307 = vmatpush1.msra.mxu0 %v92
    %308 = vmatprep.subr.mxu0 0.0
    %309 = vmatpush1.msra.mxu0 %v93
    %310 = vmatprep.subr.mxu0 0.0
    %311 = vmatpush1.msra.mxu0 %v94
    %312 = vmatprep.subr.mxu0 0.0
    %313 = vmatpush1.msra.mxu0 %v95
    %314 = vmatprep.subr.mxu0 0.0
    %315 = vmatpush1.msra.mxu0 %v96
    %316 = vmatprep.subr.mxu0 0.0
    %317 = vmatpush1.msra.mxu0 %v97
    %318 = vmatprep.subr.mxu0 0.0
    %319 = vmatpush1.msra.mxu0 %v98
    %320 = vmatprep.mubr.f32.mxu0 %v160
    %321 = vmatmul.mubr.f32.gmra.mrb[0].mxu0 %v158
    %v322 = vpop.f32.mrb[0].mxu0
    %v323 = vadd.f32 %v253, %v322
    %v324 = vpop.f32.mrb[0].mxu0
    %325 = vdwg.mxu0
    %326 = vmatprep.subr.mxu0 0.0
    %327 = vmatpush1.msra.mxu0 %v99
    %328 = vmatprep.subr.mxu0 0.0
    %329 = vmatpush1.msra.mxu0 %v100
    %330 = vmatprep.subr.mxu0 0.0
    %331 = vmatpush1.msra.mxu0 %v101
    %332 = vmatprep.subr.mxu0 0.0
    %333 = vmatpush1.msra.mxu0 %v102
    %334 = vmatprep.subr.mxu0 0.0
    %335 = vmatpush1.msra.mxu0 %v103
    %336 = vmatprep.subr.mxu0 0.0
    %337 = vmatpush1.msra.mxu0 %v104
    %338 = vmatprep.subr.mxu0 0.0
    %339 = vmatpush1.msra.mxu0 %v105
    %340 = vmatprep.subr.mxu0 0.0
    %341 = vmatpush1.msra.mxu0 %v106
    %342 = vmatprep.subr.mxu0 0.0
    %343 = vmatpush1.msra.mxu0 %v107
    %344 = vmatprep.subr.mxu0 0.0
    %345 = vmatpush1.msra.mxu0 %v108
    %346 = vmatprep.subr.mxu0 0.0
    %347 = vmatpush1.msra.mxu0 %v109
    %348 = vmatprep.subr.mxu0 0.0
    %349 = vmatpush1.msra.mxu0 %v110
    %350 = vmatprep.subr.mxu0 0.0
    %351 = vmatpush1.msra.mxu0 %v111
    %352 = vmatprep.subr.mxu0 0.0
    %353 = vmatpush1.msra.mxu0 %v112
    %354 = vmatprep.subr.mxu0 0.0
    %355 = vmatpush1.msra.mxu0 %v113
    %356 = vmatprep.subr.mxu0 0.0
    %357 = vmatpush1.msra.mxu0 %v114
    %358 = vmatprep.subr.mxu0 0.0
    %359 = vmatpush1.msra.mxu0 %v115
    %360 = vmatprep.subr.mxu0 0.0
    %361 = vmatpush1.msra.mxu0 %v116
    %362 = vmatprep.subr.mxu0 0.0
    %363 = vmatpush1.msra.mxu0 %v117
    %364 = vmatprep.subr.mxu0 0.0
    %365 = vmatpush1.msra.mxu0 %v118
    %366 = vmatprep.subr.mxu0 0.0
    %367 = vmatpush1.msra.mxu0 %v119
    %368 = vmatprep.subr.mxu0 0.0
    %369 = vmatpush1.msra.mxu0 %v120
    %370 = vmatprep.subr.mxu0 0.0
    %371 = vmatpush1.msra.mxu0 %v121
    %372 = vmatprep.subr.mxu0 0.0
    %373 = vmatpush1.msra.mxu0 %v122
    %374 = vmatprep.subr.mxu0 0.0
    %375 = vmatpush1.msra.mxu0 %v123
    %376 = vmatprep.subr.mxu0 0.0
    %377 = vmatpush1.msra.mxu0 %v124
    %378 = vmatprep.subr.mxu0 0.0
    %379 = vmatpush1.msra.mxu0 %v125
    %380 = vmatprep.subr.mxu0 0.0
    %381 = vmatpush1.msra.mxu0 %v126
    %382 = vmatprep.subr.mxu0 0.0
    %383 = vmatpush1.msra.mxu0 %v127
    %384 = vmatprep.subr.mxu0 0.0
    %385 = vmatpush1.msra.mxu0 %v128
    %386 = vmatprep.subr.mxu0 0.0
    %387 = vmatpush1.msra.mxu0 %v129
    %388 = vmatprep.subr.mxu0 0.0
    %389 = vmatpush1.msra.mxu0 %v130
    %390 = vmatprep.mubr.f32.mxu0 %v176
    %391 = vmatmul.mubr.f32.gmra.mrb[0].mxu0 %v168
    %v392 = vpop.f32.mrb[0].mxu0
    %v393 = vadd.f32 %v323, %v392
    %v394 = vpop.f32.mrb[0].mxu0
    %395 = vdwg.mxu0
    %396 = vmatprep.subr.mxu0 0.0
    %397 = vmatpush1.msra.mxu0 %v131
    %398 = vmatprep.subr.mxu0 0.0
    %399 = vmatpush1.msra.mxu0 %v132
    %400 = vmatprep.subr.mxu0 0.0
    %401 = vmatpush1.msra.mxu0 %v133
    %402 = vmatprep.subr.mxu0 0.0
    %403 = vmatpush1.msra.mxu0 %v134
    %404 = vmatprep.subr.mxu0 0.0
    %405 = vmatpush1.msra.mxu0 0.0
    %406 = vmatprep.subr.mxu0 0.0
    %407 = vmatpush1.msra.mxu0 0.0
    %408 = vmatprep.subr.mxu0 0.0
    %409 = vmatpush1.msra.mxu0 0.0
    %410 = vmatprep.subr.mxu0 0.0
    %411 = vmatpush1.msra.mxu0 0.0
    %412 = vmatprep.subr.mxu0 0.0
    %413 = vmatpush1.msra.mxu0 0.0
    %414 = vmatprep.subr.mxu0 0.0
    %415 = vmatpush1.msra.mxu0 0.0
    %416 = vmatprep.subr.mxu0 0.0
    %417 = vmatpush1.msra.mxu0 0.0
    %418 = vmatprep.subr.mxu0 0.0
    %419 = vmatpush1.msra.mxu0 0.0
    %420 = vmatprep.subr.mxu0 0.0
    %421 = vmatpush1.msra.mxu0 0.0
    %422 = vmatprep.subr.mxu0 0.0
    %423 = vmatpush1.msra.mxu0 0.0
    %424 = vmatprep.subr.mxu0 0.0
    %425 = vmatpush1.msra.mxu0 0.0
    %426 = vmatprep.subr.mxu0 0.0
    %427 = vmatpush1.msra.mxu0 0.0
    %428 = vmatprep.subr.mxu0 0.0
    %429 = vmatpush1.msra.mxu0 0.0
    %430 = vmatprep.subr.mxu0 0.0
    %431 = vmatpush1.msra.mxu0 0.0
    %432 = vmatprep.subr.mxu0 0.0
    %433 = vmatpush1.msra.mxu0 0.0
    %434 = vmatprep.subr.mxu0 0.0
    %435 = vmatpush1.msra.mxu0 0.0
    %436 = vmatprep.subr.mxu0 0.0
    %437 = vmatpush1.msra.mxu0 0.0
    %438 = vmatprep.subr.mxu0 0.0
    %439 = vmatpush1.msra.mxu0 0.0
    %440 = vmatprep.subr.mxu0 0.0
    %441 = vmatpush1.msra.mxu0 0.0
    %442 = vmatprep.subr.mxu0 0.0
    %443 = vmatpush1.msra.mxu0 0.0
    %444 = vmatprep.subr.mxu0 0.0
    %445 = vmatpush1.msra.mxu0 0.0
    %446 = vmatprep.subr.mxu0 0.0
    %447 = vmatpush1.msra.mxu0 0.0
    %448 = vmatprep.subr.mxu0 0.0
    %449 = vmatpush1.msra.mxu0 0.0
    %450 = vmatprep.subr.mxu0 0.0
    %451 = vmatpush1.msra.mxu0 0.0
    %452 = vmatprep.subr.mxu0 0.0
    %453 = vmatpush1.msra.mxu0 0.0
    %454 = vmatprep.subr.mxu0 0.0
    %455 = vmatpush1.msra.mxu0 0.0
    %456 = vmatprep.subr.mxu0 0.0
    %457 = vmatpush1.msra.mxu0 0.0
    %458 = vmatprep.subr.mxu0 0.0
    %459 = vmatpush1.msra.mxu0 0.0
    %460 = vmatprep.mubr.f32.mxu0 0.0
    %461 = vmatmul.mubr.f32.gmra.mrb[0].mxu0 %v184
    %v462 = vpop.f32.mrb[0].mxu0
    %v463 = vadd.f32 %v393, %v462
    %v464 = vpop.f32.mrb[0].mxu0
    %465 = vdwg.mxu0
    %v466 = vmax.f32 %v463, 0.0
    %v467 = vld [vmem:[%s3] sm:$0x1]
    %v469 = vlaneseq
    %v470 = vshrl.u32 %v469, 7
    %v471 = vsub.s32 0, %v470
    %v472 = vrot.slane %v467, %v471
    %v474 = vmul.f32 %v466, %v472
    %v475 = vld [vmem:[%s4] sm:$0xff]
    %v476 = vld [vmem:[%s4 + $0x8] sm:$0xff]
    %v477 = vld [vmem:[%s4 + $0x10] sm:$0xff]
    %v478 = vld [vmem:[%s4 + $0x18] sm:$0xff]
    %v479 = vld [vmem:[%s4 + $0x20] sm:$0xff]
    %v480 = vld [vmem:[%s4 + $0x28] sm:$0xff]
    %v481 = vld [vmem:[%s4 + $0x30] sm:$0xff]
    %v482 = vld [vmem:[%s4 + $0x38] sm:$0xff]
    %v483 = vld [vmem:[%s4 + $0x40] sm:$0xff]
    %v484 = vld [vmem:[%s4 + $0x48] sm:$0xff]
    %v485 = vld [vmem:[%s4 + $0x50] sm:$0xff]
    %v486 = vld [vmem:[%s4 + $0x58] sm:$0xff]
    %v487 = vld [vmem:[%s4 + $0x60] sm:$0xff]
    %v488 = vld [vmem:[%s4 + $0x68] sm:$0xff]
    %v489 = vld [vmem:[%s4 + $0x70] sm:$0xff]
    %v490 = vld [vmem:[%s4 + $0x78] sm:$0xff]
    %v491 = vld [vmem:[%s5] sm:$0x1]
    %v493 = vlaneseq
    %v494 = vshrl.u32 %v493, 7
    %v495 = vsub.s32 0, %v494
    %v496 = vrot.slane %v491, %v495
    %498 = vmatprep.subr.mxu0 0.0
    %499 = vmatpush1.msra.mxu0 %v475
    %500 = vmatprep.subr.mxu0 0.0
    %501 = vmatpush1.msra.mxu0 %v476
    %502 = vmatprep.subr.mxu0 0.0
    %503 = vmatpush1.msra.mxu0 %v477
    %504 = vmatprep.subr.mxu0 0.0
    %505 = vmatpush1.msra.mxu0 %v478
    %506 = vmatprep.subr.mxu0 0.0
    %507 = vmatpush1.msra.mxu0 %v479
    %508 = vmatprep.subr.mxu0 0.0
    %509 = vmatpush1.msra.mxu0 %v480
    %510 = vmatprep.subr.mxu0 0.0
    %511 = vmatpush1.msra.mxu0 %v481
    %512 = vmatprep.subr.mxu0 0.0
    %513 = vmatpush1.msra.mxu0 %v482
    %514 = vmatprep.subr.mxu0 0.0
    %515 = vmatpush1.msra.mxu0 %v483
    %516 = vmatprep.subr.mxu0 0.0
    %517 = vmatpush1.msra.mxu0 %v484
    %518 = vmatprep.subr.mxu0 0.0
    %519 = vmatpush1.msra.mxu0 %v485
    %520 = vmatprep.subr.mxu0 0.0
    %521 = vmatpush1.msra.mxu0 %v486
    %522 = vmatprep.subr.mxu0 0.0
    %523 = vmatpush1.msra.mxu0 %v487
    %524 = vmatprep.subr.mxu0 0.0
    %525 = vmatpush1.msra.mxu0 %v488
    %526 = vmatprep.subr.mxu0 0.0
    %527 = vmatpush1.msra.mxu0 %v489
    %528 = vmatprep.subr.mxu0 0.0
    %529 = vmatpush1.msra.mxu0 %v490
    %530 = vmatprep.subr.mxu0 0.0
    %531 = vmatpush1.msra.mxu0 0.0
    %532 = vmatprep.subr.mxu0 0.0
    %533 = vmatpush1.msra.mxu0 0.0
    %534 = vmatprep.subr.mxu0 0.0
    %535 = vmatpush1.msra.mxu0 0.0
    %536 = vmatprep.subr.mxu0 0.0
    %537 = vmatpush1.msra.mxu0 0.0
    %538 = vmatprep.subr.mxu0 0.0
    %539 = vmatpush1.msra.mxu0 0.0
    %540 = vmatprep.subr.mxu0 0.0
    %541 = vmatpush1.msra.mxu0 0.0
    %542 = vmatprep.subr.mxu0 0.0
    %543 = vmatpush1.msra.mxu0 0.0
    %544 = vmatprep.subr.mxu0 0.0
    %545 = vmatpush1.msra.mxu0 0.0
    %546 = vmatprep.subr.mxu0 0.0
    %547 = vmatpush1.msra.mxu0 0.0
    %548 = vmatprep.subr.mxu0 0.0
    %549 = vmatpush1.msra.mxu0 0.0
    %550 = vmatprep.subr.mxu0 0.0
    %551 = vmatpush1.msra.mxu0 0.0
    %552 = vmatprep.subr.mxu0 0.0
    %553 = vmatpush1.msra.mxu0 0.0
    %554 = vmatprep.subr.mxu0 0.0
    %555 = vmatpush1.msra.mxu0 0.0
    %556 = vmatprep.subr.mxu0 0.0
    %557 = vmatpush1.msra.mxu0 0.0
    %558 = vmatprep.subr.mxu0 0.0
    %559 = vmatpush1.msra.mxu0 0.0
    %560 = vmatprep.subr.mxu0 0.0
    %561 = vmatpush1.msra.mxu0 0.0
    %562 = vmatprep.mubr.f32.mxu0 0.0
    %563 = vmatmul.mubr.f32.gmra.mrb[0].mxu0 %v474
    %v564 = vpop.f32.mrb[0].mxu0
    %v565 = vadd.f32 %v496, %v564
    %v566 = vpop.f32.mrb[0].mxu0
    %567 = vdwg.mxu0
    %v568 = vmax.f32 %v565, 0.0
    %v569 = vld [vmem:[%s6] sm:$0x1]
    %v571 = vlaneseq
    %v572 = vshrl.u32 %v571, 7
    %v573 = vsub.s32 0, %v572
    %v574 = vrot.slane %v569, %v573
    %v576 = vmul.f32 %v568, %v574
    %v577 = vld [vmem:[%s7] sm:$0xff]
    %v578 = vld [vmem:[%s7 + $0x8] sm:$0xff]
    %v579 = vld [vmem:[%s7 + $0x10] sm:$0xff]
    %v580 = vld [vmem:[%s7 + $0x18] sm:$0xff]
    %v581 = vld [vmem:[%s7 + $0x20] sm:$0xff]
    %v582 = vld [vmem:[%s7 + $0x28] sm:$0xff]
    %v583 = vld [vmem:[%s7 + $0x30] sm:$0xff]
    %v584 = vld [vmem:[%s7 + $0x38] sm:$0xff]
    %v585 = vld [vmem:[%s7 + $0x40] sm:$0xff]
    %v586 = vld [vmem:[%s7 + $0x48] sm:$0xff]
    %v587 = vld [vmem:[%s7 + $0x50] sm:$0xff]
    %v588 = vld [vmem:[%s7 + $0x58] sm:$0xff]
    %v589 = vld [vmem:[%s7 + $0x60] sm:$0xff]
    %v590 = vld [vmem:[%s7 + $0x68] sm:$0xff]
    %v591 = vld [vmem:[%s7 + $0x70] sm:$0xff]
    %v592 = vld [vmem:[%s7 + $0x78] sm:$0xff]
    %v593 = vld [vmem:[%s8] sm:$0x1]
    %v595 = vlaneseq
    %v596 = vshrl.u32 %v595, 7
    %v597 = vsub.s32 0, %v596
    %v598 = vrot.slane %v593, %v597
    %600 = vmatprep.subr.mxu0 0.0
    %601 = vmatpush1.msra.mxu0 %v577
    %602 = vmatprep.subr.mxu0 0.0
    %603 = vmatpush1.msra.mxu0 %v578
    %604 = vmatprep.subr.mxu0 0.0
    %605 = vmatpush1.msra.mxu0 %v579
    %606 = vmatprep.subr.mxu0 0.0
    %607 = vmatpush1.msra.mxu0 %v580
    %608 = vmatprep.subr.mxu0 0.0
    %609 = vmatpush1.msra.mxu0 %v581
    %610 = vmatprep.subr.mxu0 0.0
    %611 = vmatpush1.msra.mxu0 %v582
    %612 = vmatprep.subr.mxu0 0.0
    %613 = vmatpush1.msra.mxu0 %v583
    %614 = vmatprep.subr.mxu0 0.0
    %615 = vmatpush1.msra.mxu0 %v584
    %616 = vmatprep.subr.mxu0 0.0
    %617 = vmatpush1.msra.mxu0 %v585
    %618 = vmatprep.subr.mxu0 0.0
    %619 = vmatpush1.msra.mxu0 %v586
    %620 = vmatprep.subr.mxu0 0.0
    %621 = vmatpush1.msra.mxu0 %v587
    %622 = vmatprep.subr.mxu0 0.0
    %623 = vmatpush1.msra.mxu0 %v588
    %624 = vmatprep.subr.mxu0 0.0
    %625 = vmatpush1.msra.mxu0 %v589
    %626 = vmatprep.subr.mxu0 0.0
    %627 = vmatpush1.msra.mxu0 %v590
    %628 = vmatprep.subr.mxu0 0.0
    %629 = vmatpush1.msra.mxu0 %v591
    %630 = vmatprep.subr.mxu0 0.0
    %631 = vmatpush1.msra.mxu0 %v592
    %632 = vmatprep.subr.mxu0 0.0
    %633 = vmatpush1.msra.mxu0 0.0
    %634 = vmatprep.subr.mxu0 0.0
    %635 = vmatpush1.msra.mxu0 0.0
    %636 = vmatprep.subr.mxu0 0.0
    %637 = vmatpush1.msra.mxu0 0.0
    %638 = vmatprep.subr.mxu0 0.0
    %639 = vmatpush1.msra.mxu0 0.0
    %640 = vmatprep.subr.mxu0 0.0
    %641 = vmatpush1.msra.mxu0 0.0
    %642 = vmatprep.subr.mxu0 0.0
    %643 = vmatpush1.msra.mxu0 0.0
    %644 = vmatprep.subr.mxu0 0.0
    %645 = vmatpush1.msra.mxu0 0.0
    %646 = vmatprep.subr.mxu0 0.0
    %647 = vmatpush1.msra.mxu0 0.0
    %648 = vmatprep.subr.mxu0 0.0
    %649 = vmatpush1.msra.mxu0 0.0
    %650 = vmatprep.subr.mxu0 0.0
    %651 = vmatpush1.msra.mxu0 0.0
    %652 = vmatprep.subr.mxu0 0.0
    %653 = vmatpush1.msra.mxu0 0.0
    %654 = vmatprep.subr.mxu0 0.0
    %655 = vmatpush1.msra.mxu0 0.0
    %656 = vmatprep.subr.mxu0 0.0
    %657 = vmatpush1.msra.mxu0 0.0
    %658 = vmatprep.subr.mxu0 0.0
    %659 = vmatpush1.msra.mxu0 0.0
    %660 = vmatprep.subr.mxu0 0.0
    %661 = vmatpush1.msra.mxu0 0.0
    %662 = vmatprep.subr.mxu0 0.0
    %663 = vmatpush1.msra.mxu0 0.0
    %664 = vmatprep.mubr.f32.mxu0 0.0
    %665 = vmatmul.mubr.f32.gmra.mrb[0].mxu0 %v576
    %v666 = vpop.f32.mrb[0].mxu0
    %v667 = vadd.f32 %v598, %v666
    %v668 = vpop.f32.mrb[0].mxu0
    %669 = vdwg.mxu0
    %670 = vst [vmem:[#allocation2] sm:$0x3] %v667
    // Predicated region
    $region38: #{lenet_forward.5} parent=1 // pred_check
      _
    $region39: #{lenet_forward.5} parent=1 // pred_check_branch
      %672 = sbr.rel (0) target = $region41
    $region40: #{lenet_forward.5} parent=1 // pred_region
      %s674 = ssub.s32 32, 32
      %675 = vsyncadd [#allocation3], %s674
      %s677 = sshll.u32 [#allocation2], 4
      %s678 = int_to_ptr.vmem [resolvable:$true] %s677
      %680 = dma.vmem_to_hbm [thread:$0]  %s678, 32, %s9, [#allocation3]
    $region41: #{lenet_forward.5} parent=1 // pred_fallthru
      _
    // Predicated region
    $region42: #{lenet_forward.5} parent=1 // pred_check
      _
    $region43: #{lenet_forward.5} parent=1 // pred_check_branch
      %682 = sbr.rel (0) target = $region45
    $region44: #{lenet_forward.5} parent=1 // pred_region
      %683 = dma.done [#allocation3], 32
    $region45: #{lenet_forward.5} parent=1 // pred_fallthru
      _
    %684 = vsyncpa [#allocation3], 1

</llo_original>
